<compile_context>
chip_gen: v6e
topology: v6e:2x2x1
jax: 0.10.0
libtpu: 0.0.40
codegen_flags: <defaults>
</compile_context>

<pallas_src>
import functools

import jax
import jax.numpy as jnp
from jax.experimental import pallas as pl
from jax.experimental.pallas import tpu as pltpu


# --------------------------------------------------------------------------
# Kernel
# --------------------------------------------------------------------------
def _discriminator_kernel(alpha,
                          x_ref,
                          w1_ref, b1_ref,
                          w2_ref, b2_ref,
                          w3_ref, b3_ref,
                          w4_ref, b4_ref,
                          o_ref):
    """Fused 4-layer MLP + LeakyReLU + Sigmoid on one batch tile.

    x_ref : [tb, n_samples] (f32, cast to bf16 in-kernel)
    w1..w3: [in, out] (bf16)     b1..b4 : [1, out] (f32)
    w4    : [1, 64]  (f32)       o_ref  : [1, tb] (f32) lane-dense row.
    """

    def leaky_relu(v):                      # f32 VPU math (v5e has no bf16 VPU)
        return jnp.where(v >= 0, v, alpha * v)

    # f32 in HBM/VMEM; bf16 only in-register for the MXU (compute has slack).
    x = x_ref[...].astype(jnp.bfloat16)     # [tb, n_samples]

    # Layer 1: bf16 x bf16 -> f32 accumulate on the MXU.
    h = jnp.dot(x, w1_ref[...], preferred_element_type=jnp.float32) + b1_ref[...]
    h = leaky_relu(h)                       # [tb, 256] f32

    # Layer 2
    h = jnp.dot(h.astype(jnp.bfloat16), w2_ref[...],
                preferred_element_type=jnp.float32) + b2_ref[...]
    h = leaky_relu(h)                       # [tb, 128] f32

    # Layer 3
    h = jnp.dot(h.astype(jnp.bfloat16), w3_ref[...],
                preferred_element_type=jnp.float32) + b3_ref[...]
    h = leaky_relu(h)                       # [tb, 64] f32

    # Layer 4 (output dim 1): elementwise mul + lane reduce instead of an N=1
    # MXU matmul; result produced as a lane-dense [1, tb] row.
    logits = jnp.sum(h * w4_ref[...], axis=-1)          # [tb]
    logits = logits[None, :] + b4_ref[...]               # [1, tb]

    # Sigmoid: EUP exp + exact reciprocal (tb elements -> cost is negligible).
    probs = pl.reciprocal(1.0 + jnp.exp(-logits))
    o_ref[...] = probs.astype(o_ref.dtype)


# --------------------------------------------------------------------------
# Hardware / capability probes (each runs once, cached)
# --------------------------------------------------------------------------
@functools.lru_cache(maxsize=None)
def _tensorcores_per_chip():
    try:
        info = pltpu.get_tpu_info()
        for name in ("num_tensorcores", "tensorcore_count", "num_cores",
                     "cores_per_chip"):
            v = getattr(info, name, None)
            if isinstance(v, int) and 1 <= v <= 8:
                return v
    except Exception:
        pass
    try:
        kind = jax.devices()[0].device_kind.lower()
        if "v7" in kind:
            return 2
    except Exception:
        pass
    return 1


@functools.lru_cache(maxsize=None)
def _vmem_capacity_bytes():
    try:
        cap = int(pltpu.get_tpu_info().vmem_capacity_bytes)
        if cap > 0:
            return cap
    except Exception:
        pass
    return 64 << 20   # conservative: v7x per-TC VMEM


@functools.lru_cache(maxsize=None)
def _single_buffer_supported():
    """One-time probe: does pipeline_mode=pl.Buffered(1) lower on this stack?

    The broad except only guards this tiny probe kernel; the real kernel is
    never wrapped in a silent try/except.
    """
    if not hasattr(pl, "Buffered"):
        return False

    def _probe_kernel(x_ref, o_ref):
        o_ref[...] = x_ref[...] + 1.0

    try:
        fn = pl.pallas_call(
            _probe_kernel,
            out_shape=jax.ShapeDtypeStruct((8, 128), jnp.float32),
            grid_spec=pltpu.PrefetchScalarGridSpec(
                num_scalar_prefetch=0,
                grid=(1,),
                in_specs=[pl.BlockSpec((8, 128), lambda i: (0, 0),
                                       pipeline_mode=pl.Buffered(1))],
                out_specs=pl.BlockSpec((8, 128), lambda i: (0, 0)),
            ),
        )
        jax.jit(fn).lower(jax.ShapeDtypeStruct((8, 128), jnp.float32)).compile()
        return True
    except Exception:
        return False


# --------------------------------------------------------------------------
# Tiling / VMEM budgeting
# --------------------------------------------------------------------------
_X_TILE_BUDGET_BYTES = 16 << 20   # double-buffered f32 x tile budget
_W1_BF16_BUDGET_BYTES = 24 << 20  # beyond this, fall back (see K-split TODO)


def _pick_batch_tile(B, n_samples, min_steps):
    """Pick a batch tile >= 128 rows (multiple of 16).

    min_steps=2 on multi-TC chips (v7x) so both TensorCores get work;
    min_steps=1 on v5e/v6e where the grid is a serial loop and splitting only
    pays per-step overhead. Returns None -> caller takes the XLA path.
    """
    candidates = []
    if min_steps <= 1:
        candidates.append(B)          # whole batch in one grid step
    candidates += [512, 256, 128]
    for tb in candidates:
        if tb < 128 or tb % 16 != 0 or B % tb != 0:
            continue
        if B // tb < min_steps:
            continue
        if 2 * tb * n_samples * 4 > _X_TILE_BUDGET_BYTES:
            continue
        return tb
    return None


def _vmem_limit_bytes(tb, n_samples, weight_buffers):
    """Explicit VMEM budget, clamped to the chip's capacity (v7x: 64 MiB)."""
    bf16, f32 = 2, 4
    x_bytes = 2 * tb * n_samples * f32                                # x double buffer
    w_bytes = weight_buffers * bf16 * (n_samples * 256 + 256 * 128 + 128 * 64)
    row_bytes = weight_buffers * f32 * 8 * (256 + 128 + 128 + 128 + 128)  # sublane-padded rows
    out_bytes = 2 * 8 * tb * f32                                      # (1, tb) sublane-padded, x2 buf
    act_bytes = 2 * tb * (256 + 128 + 64) * f32                       # f32 intermediates + slack
    total = x_bytes + w_bytes + row_bytes + out_bytes + act_bytes
    limit = int(total * 1.5) + (8 << 20)                              # internal-scratch headroom
    cap = int(_vmem_capacity_bytes() * 0.9)
    return max(16 << 20, min(limit, cap))


# --------------------------------------------------------------------------
# Cached pallas_call / jit builder
# --------------------------------------------------------------------------
@functools.lru_cache(maxsize=None)
def _get_forward_fn(B, n_samples, tb, alpha, single_buffer):
    """Build (once per config) a jitted fused forward: 9 arrays -> (B, 1)."""
    grid = B // tb
    weight_buffers = 1 if single_buffer else 2

    def const_spec(shape):
        # Constant index_map: weight/bias stays resident; single-buffer it when
        # supported to halve its VMEM footprint.
        if single_buffer:
            return pl.BlockSpec(shape, lambda i: (0, 0),
                                pipeline_mode=pl.Buffered(1))
        return pl.BlockSpec(shape, lambda i: (0, 0))

    kernel = functools.partial(_discriminator_kernel, alpha)

    call = pl.pallas_call(
        kernel,
        # Lane-dense output slab (1, B); each grid step writes a [1, tb] row.
        out_shape=jax.ShapeDtypeStruct((1, B), jnp.float32),
        grid_spec=pltpu.PrefetchScalarGridSpec(
            num_scalar_prefetch=0,
            grid=(grid,),
            in_specs=[
                pl.BlockSpec((tb, n_samples), lambda i: (i, 0)),   # x tile (f32)
                const_spec((n_samples, 256)), const_spec((1, 256)),
                const_spec((256, 128)),       const_spec((1, 128)),
                const_spec((128, 64)),        const_spec((1, 64)),
                const_spec((1, 64)),          const_spec((1, 1)),
            ],
            out_specs=pl.BlockSpec((1, tb), lambda i: (0, i)),
        ),
        compiler_params=pltpu.CompilerParams(
            dimension_semantics=("parallel",),
            vmem_limit_bytes=_vmem_limit_bytes(tb, n_samples, weight_buffers),
        ),
    )

    def fwd(x, w1, b1, w2, b2, w3, b3, w4, b4):
        row = call(x, w1, b1, w2, b2, w3, b3, w4, b4)
        return row.reshape(B, 1)

    return jax.jit(fwd)


# --------------------------------------------------------------------------
# Public API
# --------------------------------------------------------------------------
def prepare_params(params):
    """One-time prep: bf16 copies of the MXU weights, f32 for vector operands.

    Call this once and reuse the result so the per-call weight casts disappear.
    """
    return {
        "w1": jnp.asarray(params["w1"], jnp.bfloat16),
        "w2": jnp.asarray(params["w2"], jnp.bfloat16),
        "w3": jnp.asarray(params["w3"], jnp.bfloat16),
        "w4": jnp.asarray(params["w4"], jnp.float32),   # [1, 64]
        "b1": jnp.asarray(params["b1"], jnp.float32),
        "b2": jnp.asarray(params["b2"], jnp.float32),
        "b3": jnp.asarray(params["b3"], jnp.float32),
        "b4": jnp.asarray(params["b4"], jnp.float32),   # [1, 1]
    }


def reference_forward(x, params, alpha, *, matmul_dtype=jnp.float32):
    """Pure-JAX reference of the PyTorch forward (eval mode)."""

    def lin(h, w, b):
        return jnp.dot(h.astype(matmul_dtype), w.astype(matmul_dtype),
                       preferred_element_type=jnp.float32) + b.astype(jnp.float32)

    h = lin(x, params["w1"], params["b1"])
    h = jnp.where(h >= 0, h, alpha * h)
    h = lin(h, params["w2"], params["b2"])
    h = jnp.where(h >= 0, h, alpha * h)
    h = lin(h, params["w3"], params["b3"])
    h = jnp.where(h >= 0, h, alpha * h)
    w4 = params["w4"].astype(jnp.float32)               # stored as [1, 64]
    logits = h @ w4.T + params["b4"].astype(jnp.float32)
    return jax.nn.sigmoid(logits)


def discriminator_forward(x, params, alpha, *, batch_tile=None):
    """Fused Pallas forward.

    x:      [B, n_samples] float32
    params: dict with w1..w4, b1..b4 (wk is [in, out]; w4 is [1, 64];
            bk is [1, out]).  Pass the result of prepare_params() to avoid a
            per-call bf16 cast of the weights.
    """
    B, n_samples = x.shape

    if params["w1"].dtype != jnp.bfloat16:
        params = prepare_params(params)   # call prepare_params() yourself to cache

    min_steps = 2 if _tensorcores_per_chip() >= 2 else 1
    tb = batch_tile if batch_tile is not None else _pick_batch_tile(
        B, n_samples, min_steps)

    # Tiny / ragged batches or oversized w1: Pallas launch overhead dominates or
    # VMEM would be exceeded -- let XLA handle it (bf16-weight numerics match).
    w1_bf16_bytes = n_samples * 256 * 2
    if tb is None or w1_bf16_bytes > _W1_BF16_BUDGET_BYTES:
        return reference_forward(x, params, alpha, matmul_dtype=jnp.bfloat16)

    fwd = _get_forward_fn(int(B), int(n_samples), int(tb), float(alpha),
                          bool(_single_buffer_supported()))
    return fwd(x, params["w1"], params["b1"], params["w2"], params["b2"],
               params["w3"], params["b3"], params["w4"], params["b4"])


def init_params(key, n_samples):
    """Deterministic init. Shapes follow nn.Linear (stored transposed: [in, out])."""
    dims = [(n_samples, 256), (256, 128), (128, 64), (64, 1)]
    params = {}
    for idx, (fan_in, fan_out) in enumerate(dims, start=1):
        key, kw, kb = jax.random.split(key, 3)
        bound = 1.0 / jnp.sqrt(fan_in)  # PyTorch Linear default uniform bound
        w = jax.random.uniform(kw, (fan_in, fan_out), jnp.float32, -bound, bound)
        b = jax.random.uniform(kb, (1, fan_out), jnp.float32, -bound, bound)
        params[f"w{idx}"] = w
        params[f"b{idx}"] = b
    # Last layer: keep weight as [1, 64] so the kernel can do mul + lane-reduce.
    params["w4"] = params["w4"].T  # [64, 1] -> [1, 64]
    return params


if __name__ == "__main__":
    n_samples = 64
    alpha = 0.2
    batch = 256   # Pallas path on all generations (tb=256 on 1-TC, 2x128 on v7x)

    key = jax.random.PRNGKey(0)
    key, kx = jax.random.split(key)
    x = jax.random.normal(kx, (batch, n_samples), jnp.float32)

    params = init_params(key, n_samples)
    prep = prepare_params(params)          # one-time bf16 weight cache

    out = discriminator_forward(x, prep, alpha)
    out = jax.block_until_ready(out)

    # Second call hits the lru-cached jitted pallas_call (no re-trace/probe).
    out2 = jax.block_until_ready(discriminator_forward(x, prep, alpha))

    # Reference mimics the kernel's bf16 matmul operands / f32 accumulation.
    ref = reference_forward(x, params, alpha, matmul_dtype=jnp.bfloat16)

    assert out.shape == (batch, 1)
    max_err = float(jnp.max(jnp.abs(out - ref)))
    assert max_err < 1e-2, (max_err, out[:4], ref[:4])
    assert float(jnp.max(jnp.abs(out - out2))) == 0.0

    print("KERNEL_OK")
</pallas_src>

<mosaic_0001>
module attributes {stable_mosaic.version = 11 : i64} {
  func.func @_discriminator_kernel(%arg0: i32, %arg1: memref<256x64xf32, #tpu.memory_space<vmem>>, %arg2: memref<64x256xbf16, #tpu.memory_space<vmem>>, %arg3: memref<1x256xf32, #tpu.memory_space<vmem>>, %arg4: memref<256x128xbf16, #tpu.memory_space<vmem>>, %arg5: memref<1x128xf32, #tpu.memory_space<vmem>>, %arg6: memref<128x64xbf16, #tpu.memory_space<vmem>>, %arg7: memref<1x64xf32, #tpu.memory_space<vmem>>, %arg8: memref<1x64xf32, #tpu.memory_space<vmem>>, %arg9: memref<1x1xf32, #tpu.memory_space<vmem>>, %arg10: memref<1x256xf32, #tpu.memory_space<vmem>>) attributes {dimension_semantics = [#tpu.dimension_semantics<parallel>], iteration_bounds = array<i64: 1>, scalar_prefetch = 0 : i64, scratch_operands = 0 : i64, tpu.core_type = #tpu.core_type<tc>, window_params = [{transform_indices = @transform_0, window_bounds = array<i64: 256, 64>}, {pipeline_mode = #tpu.pipeline_mode<synchronous>, transform_indices = @transform_1, window_bounds = array<i64: 64, 256>}, {pipeline_mode = #tpu.pipeline_mode<synchronous>, transform_indices = @transform_2, window_bounds = array<i64: 1, 256>}, {pipeline_mode = #tpu.pipeline_mode<synchronous>, transform_indices = @transform_3, window_bounds = array<i64: 256, 128>}, {pipeline_mode = #tpu.pipeline_mode<synchronous>, transform_indices = @transform_4, window_bounds = array<i64: 1, 128>}, {pipeline_mode = #tpu.pipeline_mode<synchronous>, transform_indices = @transform_5, window_bounds = array<i64: 128, 64>}, {pipeline_mode = #tpu.pipeline_mode<synchronous>, transform_indices = @transform_6, window_bounds = array<i64: 1, 64>}, {pipeline_mode = #tpu.pipeline_mode<synchronous>, transform_indices = @transform_7, window_bounds = array<i64: 1, 64>}, {pipeline_mode = #tpu.pipeline_mode<synchronous>, transform_indices = @transform_8, window_bounds = array<i64: 1, 1>}, {transform_indices = @transform_9, window_bounds = array<i64: 1, 256>}]} {
    %c0 = arith.constant 0 : index
    %c0_0 = arith.constant 0 : index
    %0 = vector.load %arg1[%c0, %c0_0] : memref<256x64xf32, #tpu.memory_space<vmem>>, vector<256x64xf32>
    %1 = arith.truncf %0 : vector<256x64xf32> to vector<256x64xbf16>
    %c0_1 = arith.constant 0 : index
    %c0_2 = arith.constant 0 : index
    %2 = vector.load %arg2[%c0_1, %c0_2] : memref<64x256xbf16, #tpu.memory_space<vmem>>, vector<64x256xbf16>
    %cst = arith.constant dense<0.000000e+00> : vector<256x256xf32>
    %3 = tpu.matmul %1, %2, %cst {dimension_numbers = #tpu.dot_dimension_numbers<[1], [0], [0], [1], [0, 0, 1, 1], [], []>} : vector<256x64xbf16>, vector<64x256xbf16>, vector<256x256xf32> -> vector<256x256xf32>
    %c0_3 = arith.constant 0 : index
    %c0_4 = arith.constant 0 : index
    %4 = vector.load %arg3[%c0_3, %c0_4] : memref<1x256xf32, #tpu.memory_space<vmem>>, vector<1x256xf32>
    %5 = vector.broadcast %4 : vector<1x256xf32> to vector<256x256xf32>
    %6 = arith.addf %3, %5 : vector<256x256xf32>
    %cst_5 = arith.constant 0.000000e+00 : f32
    %7 = vector.broadcast %cst_5 : f32 to vector<256x256xf32>
    %8 = arith.cmpf oge, %6, %7 : vector<256x256xf32>
    %cst_6 = arith.constant 2.000000e-01 : f32
    %9 = vector.broadcast %cst_6 : f32 to vector<256x256xf32>
    %10 = arith.mulf %9, %6 : vector<256x256xf32>
    %11 = arith.select %8, %6, %10 : vector<256x256xi1>, vector<256x256xf32>
    %12 = arith.truncf %11 : vector<256x256xf32> to vector<256x256xbf16>
    %c0_7 = arith.constant 0 : index
    %c0_8 = arith.constant 0 : index
    %13 = vector.load %arg4[%c0_7, %c0_8] : memref<256x128xbf16, #tpu.memory_space<vmem>>, vector<256x128xbf16>
    %cst_9 = arith.constant dense<0.000000e+00> : vector<256x128xf32>
    %14 = tpu.matmul %12, %13, %cst_9 {dimension_numbers = #tpu.dot_dimension_numbers<[1], [0], [0], [1], [0, 0, 1, 1], [], []>} : vector<256x256xbf16>, vector<256x128xbf16>, vector<256x128xf32> -> vector<256x128xf32>
    %c0_10 = arith.constant 0 : index
    %c0_11 = arith.constant 0 : index
    %15 = vector.load %arg5[%c0_10, %c0_11] : memref<1x128xf32, #tpu.memory_space<vmem>>, vector<1x128xf32>
    %16 = vector.broadcast %15 : vector<1x128xf32> to vector<256x128xf32>
    %17 = arith.addf %14, %16 : vector<256x128xf32>
    %cst_12 = arith.constant 0.000000e+00 : f32
    %18 = vector.broadcast %cst_12 : f32 to vector<256x128xf32>
    %19 = arith.cmpf oge, %17, %18 : vector<256x128xf32>
    %cst_13 = arith.constant 2.000000e-01 : f32
    %20 = vector.broadcast %cst_13 : f32 to vector<256x128xf32>
    %21 = arith.mulf %20, %17 : vector<256x128xf32>
    %22 = arith.select %19, %17, %21 : vector<256x128xi1>, vector<256x128xf32>
    %23 = arith.truncf %22 : vector<256x128xf32> to vector<256x128xbf16>
    %c0_14 = arith.constant 0 : index
    %c0_15 = arith.constant 0 : index
    %24 = vector.load %arg6[%c0_14, %c0_15] : memref<128x64xbf16, #tpu.memory_space<vmem>>, vector<128x64xbf16>
    %cst_16 = arith.constant dense<0.000000e+00> : vector<256x64xf32>
    %25 = tpu.matmul %23, %24, %cst_16 {dimension_numbers = #tpu.dot_dimension_numbers<[1], [0], [0], [1], [0, 0, 1, 1], [], []>} : vector<256x128xbf16>, vector<128x64xbf16>, vector<256x64xf32> -> vector<256x64xf32>
    %c0_17 = arith.constant 0 : index
    %c0_18 = arith.constant 0 : index
    %26 = vector.load %arg7[%c0_17, %c0_18] : memref<1x64xf32, #tpu.memory_space<vmem>>, vector<1x64xf32>
    %27 = vector.broadcast %26 : vector<1x64xf32> to vector<256x64xf32>
    %28 = arith.addf %25, %27 : vector<256x64xf32>
    %cst_19 = arith.constant 0.000000e+00 : f32
    %29 = vector.broadcast %cst_19 : f32 to vector<256x64xf32>
    %30 = arith.cmpf oge, %28, %29 : vector<256x64xf32>
    %cst_20 = arith.constant 2.000000e-01 : f32
    %31 = vector.broadcast %cst_20 : f32 to vector<256x64xf32>
    %32 = arith.mulf %31, %28 : vector<256x64xf32>
    %33 = arith.select %30, %28, %32 : vector<256x64xi1>, vector<256x64xf32>
    %c0_21 = arith.constant 0 : index
    %c0_22 = arith.constant 0 : index
    %34 = vector.load %arg8[%c0_21, %c0_22] : memref<1x64xf32, #tpu.memory_space<vmem>>, vector<1x64xf32>
    %35 = vector.broadcast %34 : vector<1x64xf32> to vector<256x64xf32>
    %36 = arith.mulf %33, %35 : vector<256x64xf32>
    %cst_23 = arith.constant dense<0.000000e+00> : vector<256xf32>
    %37 = vector.multi_reduction <add>, %36, %cst_23 [1] : vector<256x64xf32> to vector<256xf32>
    %38 = vector.shape_cast %37 : vector<256xf32> to vector<1x256xf32>
    %c0_24 = arith.constant 0 : index
    %c0_25 = arith.constant 0 : index
    %39 = vector.load %arg9[%c0_24, %c0_25] : memref<1x1xf32, #tpu.memory_space<vmem>>, vector<1x1xf32>
    %40 = vector.broadcast %39 : vector<1x1xf32> to vector<1x256xf32>
    %41 = arith.addf %38, %40 : vector<1x256xf32>
    %cst_26 = arith.constant 0.000000e+00 : f32
    %42 = vector.broadcast %cst_26 : f32 to vector<1x256xf32>
    %43 = arith.subf %42, %41 : vector<1x256xf32>
    %44 = math.exp %43 : vector<1x256xf32>
    %cst_27 = arith.constant 1.000000e+00 : f32
    %45 = vector.broadcast %cst_27 : f32 to vector<1x256xf32>
    %46 = arith.addf %45, %44 : vector<1x256xf32>
    %47 = tpu.reciprocal %46 : vector<1x256xf32> -> vector<1x256xf32>
    %c0_28 = arith.constant 0 : index
    %c0_29 = arith.constant 0 : index
    %48 = vector.load %arg10[%c0_28, %c0_29] : memref<1x256xf32, #tpu.memory_space<vmem>>, vector<1x256xf32>
    tpu.vector_store %arg10[%c0_28, %c0_29], %47 {strides = array<i32>} : memref<1x256xf32, #tpu.memory_space<vmem>>, vector<1x256xf32>,
    return
  }
  func.func @transform_0(%arg0: i32) -> (i32, i32) {
    %c0_i32 = arith.constant 0 : i32
    %c0_i32_0 = arith.constant 0 : i32
    return %arg0, %c0_i32 : i32, i32
  }
  func.func @transform_1(%arg0: i32) -> (i32, i32) {
    %c0_i32 = arith.constant 0 : i32
    %c0_i32_0 = arith.constant 0 : i32
    %c0_i32_1 = arith.constant 0 : i32
    return %c0_i32, %c0_i32_0 : i32, i32
  }
  func.func @transform_2(%arg0: i32) -> (i32, i32) {
    %c0_i32 = arith.constant 0 : i32
    %c0_i32_0 = arith.constant 0 : i32
    %c0_i32_1 = arith.constant 0 : i32
    return %c0_i32, %c0_i32_0 : i32, i32
  }
  func.func @transform_3(%arg0: i32) -> (i32, i32) {
    %c0_i32 = arith.constant 0 : i32
    %c0_i32_0 = arith.constant 0 : i32
    %c0_i32_1 = arith.constant 0 : i32
    return %c0_i32, %c0_i32_0 : i32, i32
  }
  func.func @transform_4(%arg0: i32) -> (i32, i32) {
    %c0_i32 = arith.constant 0 : i32
    %c0_i32_0 = arith.constant 0 : i32
    %c0_i32_1 = arith.constant 0 : i32
    return %c0_i32, %c0_i32_0 : i32, i32
  }
  func.func @transform_5(%arg0: i32) -> (i32, i32) {
    %c0_i32 = arith.constant 0 : i32
    %c0_i32_0 = arith.constant 0 : i32
    %c0_i32_1 = arith.constant 0 : i32
    return %c0_i32, %c0_i32_0 : i32, i32
  }
  func.func @transform_6(%arg0: i32) -> (i32, i32) {
    %c0_i32 = arith.constant 0 : i32
    %c0_i32_0 = arith.constant 0 : i32
    %c0_i32_1 = arith.constant 0 : i32
    return %c0_i32, %c0_i32_0 : i32, i32
  }
  func.func @transform_7(%arg0: i32) -> (i32, i32) {
    %c0_i32 = arith.constant 0 : i32
    %c0_i32_0 = arith.constant 0 : i32
    %c0_i32_1 = arith.constant 0 : i32
    return %c0_i32, %c0_i32_0 : i32, i32
  }
  func.func @transform_8(%arg0: i32) -> (i32, i32) {
    %c0_i32 = arith.constant 0 : i32
    %c0_i32_0 = arith.constant 0 : i32
    %c0_i32_1 = arith.constant 0 : i32
    return %c0_i32, %c0_i32_0 : i32, i32
  }
  func.func @transform_9(%arg0: i32) -> (i32, i32) {
    %c0_i32 = arith.constant 0 : i32
    %c0_i32_0 = arith.constant 0 : i32
    return %c0_i32, %arg0 : i32, i32
  }
}

</mosaic_0001>

<llo_original>
// kernel: fwd.1
$region0: #{fwd.1}
  #allocation0 [shape = 'u32[]', space=smem, size = 0x4, offset = 0x4, fixed_abs, tag = 'smem constant byte address 0x4 - core index']
  #allocation1 [shape = 'u32[144,128]{1,0:T(1,128)}', space=vmem, size = 0x12000, scoped, tag = 'internal scratch']
  #allocation2 [shape = 'f32[1,1]{1,0:T(1,128)S(1)}', space=vmem, size = 0x200, scoped, tag = 'scoped memory for fwd.1']
  %s0 = inlined_call_operand.vmem [shape: f32[256,64], index: 0, kind: input, shape index: {}]
  %s1 = inlined_call_operand.vmem [shape: bf16[64,256], index: 1, kind: input, shape index: {}]
  %s2 = inlined_call_operand.vmem [shape: f32[1,256], index: 2, kind: input, shape index: {}]
  %s3 = inlined_call_operand.vmem [shape: bf16[256,128], index: 3, kind: input, shape index: {}]
  %s4 = inlined_call_operand.vmem [shape: f32[1,128], index: 4, kind: input, shape index: {}]
  %s5 = inlined_call_operand.vmem [shape: bf16[128,64], index: 5, kind: input, shape index: {}]
  %s6 = inlined_call_operand.vmem [shape: f32[1,64], index: 6, kind: input, shape index: {}]
  %s7 = inlined_call_operand.vmem [shape: f32[1,64], index: 7, kind: input, shape index: {}]
  %s8 = inlined_call_operand.<no memory space> [shape: f32[1,1], index: 8, kind: input, shape index: {}]
  %s9 = inlined_call_operand.hbm [shape: f32[1,256], index: 9, kind: output, shape index: {}]
  %s10 = sld [smem:[#allocation0]]
  $region46: #{fwd.1} parent=0
    _
  %s12 = ssub.s32 1, %s10
  %s13 = scalar_select 0, %s12, %s10
  %v14 = vstv %s8
  %15 = vst [vmem:[#allocation2] sm:$0x1] %v14
  $region1: #{fwd.1} parent=0
    #allocation3 [shape = 'u8[1024]{0}', space=vmem, size = 0x400, scoped, tag = 'output window, operand 0, single buffered']
    #allocation4 [shape = 's32[1]{0}', space=sflag, size = 0x4, scoped, tag = 'scoped memory for fwd.1']
    %16 = vsyncpa [#allocation4], 0
    // Predicated region
    $region2: #{fwd.1} parent=1 // pred_check
      _
    $region3: #{fwd.1} parent=1 // pred_check_branch
      %18 = sbr.rel (0) target = $region5
    $region4: #{fwd.1} parent=1 // pred_region
      _
    $region5: #{fwd.1} parent=1 // pred_fallthru
      _
    // Predicated region
    $region6: #{fwd.1} parent=1 // pred_check
      _
    $region7: #{fwd.1} parent=1 // pred_check_branch
      %20 = sbr.rel (0) target = $region9
    $region8: #{fwd.1} parent=1 // pred_region
      _
    $region9: #{fwd.1} parent=1 // pred_fallthru
      _
    // Predicated region
    $region10: #{fwd.1} parent=1 // pred_check
      _
    $region11: #{fwd.1} parent=1 // pred_check_branch
      %22 = sbr.rel (0) target = $region13
    $region12: #{fwd.1} parent=1 // pred_region
      _
    $region13: #{fwd.1} parent=1 // pred_fallthru
      _
    // Predicated region
    $region14: #{fwd.1} parent=1 // pred_check
      _
    $region15: #{fwd.1} parent=1 // pred_check_branch
      %24 = sbr.rel (0) target = $region17
    $region16: #{fwd.1} parent=1 // pred_region
      _
    $region17: #{fwd.1} parent=1 // pred_fallthru
      _
    // Predicated region
    $region18: #{fwd.1} parent=1 // pred_check
      _
    $region19: #{fwd.1} parent=1 // pred_check_branch
      %26 = sbr.rel (0) target = $region21
    $region20: #{fwd.1} parent=1 // pred_region
      _
    $region21: #{fwd.1} parent=1 // pred_fallthru
      _
    // Predicated region
    $region22: #{fwd.1} parent=1 // pred_check
      _
    $region23: #{fwd.1} parent=1 // pred_check_branch
      %28 = sbr.rel (0) target = $region25
    $region24: #{fwd.1} parent=1 // pred_region
      _
    $region25: #{fwd.1} parent=1 // pred_fallthru
      _
    // Predicated region
    $region26: #{fwd.1} parent=1 // pred_check
      _
    $region27: #{fwd.1} parent=1 // pred_check_branch
      %30 = sbr.rel (0) target = $region29
    $region28: #{fwd.1} parent=1 // pred_region
      _
    $region29: #{fwd.1} parent=1 // pred_fallthru
      _
    // Predicated region
    $region30: #{fwd.1} parent=1 // pred_check
      _
    $region31: #{fwd.1} parent=1 // pred_check_branch
      %32 = sbr.rel (0) target = $region33
    $region32: #{fwd.1} parent=1 // pred_region
      _
    $region33: #{fwd.1} parent=1 // pred_fallthru
      _
    // Predicated region
    $region34: #{fwd.1} parent=1 // pred_check
      _
    $region35: #{fwd.1} parent=1 // pred_check_branch
      %34 = sbr.rel (0) target = $region37
    $region36: #{fwd.1} parent=1 // pred_region
      _
    $region37: #{fwd.1} parent=1 // pred_fallthru
      _
    %v36 = vld [vmem:[%s0] sm:$0xff]
    %v37 = vld [vmem:[%s0 + $0x8] sm:$0xff]
    %v38 = vld [vmem:[%s0 + $0x10] sm:$0xff]
    %v39 = vld [vmem:[%s0 + $0x18] sm:$0xff]
    %v40 = vld [vmem:[%s0 + $0x20] sm:$0xff]
    %v41 = vld [vmem:[%s0 + $0x28] sm:$0xff]
    %v42 = vld [vmem:[%s0 + $0x30] sm:$0xff]
    %v43 = vld [vmem:[%s0 + $0x38] sm:$0xff]
    %v44 = vld [vmem:[%s0 + $0x40] sm:$0xff]
    %v45 = vld [vmem:[%s0 + $0x48] sm:$0xff]
    %v46 = vld [vmem:[%s0 + $0x50] sm:$0xff]
    %v47 = vld [vmem:[%s0 + $0x58] sm:$0xff]
    %v48 = vld [vmem:[%s0 + $0x60] sm:$0xff]
    %v49 = vld [vmem:[%s0 + $0x68] sm:$0xff]
    %v50 = vld [vmem:[%s0 + $0x70] sm:$0xff]
    %v51 = vld [vmem:[%s0 + $0x78] sm:$0xff]
    %v52 = vld [vmem:[%s0 + $0x80] sm:$0xff]
    %v53 = vld [vmem:[%s0 + $0x88] sm:$0xff]
    %v54 = vld [vmem:[%s0 + $0x90] sm:$0xff]
    %v55 = vld [vmem:[%s0 + $0x98] sm:$0xff]
    %v56 = vld [vmem:[%s0 + $0xa0] sm:$0xff]
    %v57 = vld [vmem:[%s0 + $0xa8] sm:$0xff]
    %v58 = vld [vmem:[%s0 + $0xb0] sm:$0xff]
    %v59 = vld [vmem:[%s0 + $0xb8] sm:$0xff]
    %v60 = vld [vmem:[%s0 + $0xc0] sm:$0xff]
    %v61 = vld [vmem:[%s0 + $0xc8] sm:$0xff]
    %v62 = vld [vmem:[%s0 + $0xd0] sm:$0xff]
    %v63 = vld [vmem:[%s0 + $0xd8] sm:$0xff]
    %v64 = vld [vmem:[%s0 + $0xe0] sm:$0xff]
    %v65 = vld [vmem:[%s0 + $0xe8] sm:$0xff]
    %v66 = vld [vmem:[%s0 + $0xf0] sm:$0xff]
    %v67 = vld [vmem:[%s0 + $0xf8] sm:$0xff]
    %v68 = vpack.c.bf16 %v37, %v36
    %v69 = vpack.c.bf16 %v39, %v38
    %v70 = vpack.c.bf16 %v41, %v40
    %v71 = vpack.c.bf16 %v43, %v42
    %v72 = vpack.c.bf16 %v45, %v44
    %v73 = vpack.c.bf16 %v47, %v46
    %v74 = vpack.c.bf16 %v49, %v48
    %v75 = vpack.c.bf16 %v51, %v50
    %v76 = vpack.c.bf16 %v53, %v52
    %v77 = vpack.c.bf16 %v55, %v54
    %v78 = vpack.c.bf16 %v57, %v56
    %v79 = vpack.c.bf16 %v59, %v58
    %v80 = vpack.c.bf16 %v61, %v60
    %v81 = vpack.c.bf16 %v63, %v62
    %v82 = vpack.c.bf16 %v65, %v64
    %v83 = vpack.c.bf16 %v67, %v66
    %v84 = vld [vmem:[%s1] sm:$0xff]
    %v85 = vld [vmem:[%s1 + $0x8] sm:$0xff]
    %v86 = vld [vmem:[%s1 + $0x10] sm:$0xff]
    %v87 = vld [vmem:[%s1 + $0x18] sm:$0xff]
    %v88 = vld [vmem:[%s1 + $0x20] sm:$0xff]
    %v89 = vld [vmem:[%s1 + $0x28] sm:$0xff]
    %v90 = vld [vmem:[%s1 + $0x30] sm:$0xff]
    %v91 = vld [vmem:[%s1 + $0x38] sm:$0xff]
    %v92 = vld [vmem:[%s2] sm:$0x3]
    %v94 = vlaneseq
    %v95 = vshrl.u32 %v94, 7
    %v96 = vsub.s32 0, %v95
    %v97 = vrot.slane %v92, %v96
    %v98 = vlaneseq
    %v99 = vshrl.u32 %v98, 7
    %v100 = vsub.s32 1, %v99
    %v101 = vrot.slane %v92, %v100
    %v112 = vunpack.c.l.b16 %v84
    %v113 = vunpack.c.h.b16 %v84
    %v114 = vunpack.c.l.b16 %v85
    %v115 = vunpack.c.h.b16 %v85
    %v116 = vunpack.c.l.b16 %v86
    %v117 = vunpack.c.h.b16 %v86
    %v118 = vunpack.c.l.b16 %v87
    %v119 = vunpack.c.h.b16 %v87
    %v120 = vunpack.c.l.b16 %v88
    %v121 = vunpack.c.h.b16 %v88
    %v122 = vunpack.c.l.b16 %v89
    %v123 = vunpack.c.h.b16 %v89
    %v124 = vunpack.c.l.b16 %v90
    %v125 = vunpack.c.h.b16 %v90
    %v126 = vunpack.c.l.b16 %v91
    %v127 = vunpack.c.h.b16 %v91
    %v128 = vpack.c.b16 %v114, %v112
    %v129 = vpack.c.b16 %v115, %v113
    %v130 = vpack.c.b16 %v118, %v116
    %v131 = vpack.c.b16 %v119, %v117
    %v132 = vpack.c.b16 %v122, %v120
    %v133 = vpack.c.b16 %v123, %v121
    %v134 = vpack.c.b16 %v126, %v124
    %v135 = vpack.c.b16 %v127, %v125
    %vm144 = vcmask 523264
    %v146 = vsel %vm144, %v68, 0
    %v149 = vsel %vm144, %v69, 0
    %v152 = vsel %vm144, %v70, 0
    %v155 = vsel %vm144, %v71, 0
    %v158 = vsel %vm144, %v72, 0
    %v161 = vsel %vm144, %v73, 0
    %v164 = vsel %vm144, %v74, 0
    %v167 = vsel %vm144, %v75, 0
    %v170 = vsel %vm144, %v76, 0
    %v173 = vsel %vm144, %v77, 0
    %v176 = vsel %vm144, %v78, 0
    %v179 = vsel %vm144, %v79, 0
    %v182 = vsel %vm144, %v80, 0
    %v185 = vsel %vm144, %v81, 0
    %v188 = vsel %vm144, %v82, 0
    %v191 = vsel %vm144, %v83, 0
    %193 = vmatprep.subr.bf16.mxu0 0
    %194 = vmatpush1.bf16.msra.mxu0 0
    %195 = vmatprep.subr.bf16.mxu0 0
    %196 = vmatpush1.bf16.msra.mxu0 0
    %197 = vmatprep.subr.bf16.mxu0 0
    %198 = vmatpush1.bf16.msra.mxu0 0
    %199 = vmatprep.subr.bf16.mxu0 0
    %200 = vmatpush1.bf16.msra.mxu0 0
    %201 = vmatprep.subr.bf16.mxu0 %v135
    %202 = vmatpush1.bf16.msra.mxu0 %v134
    %203 = vmatprep.subr.bf16.mxu0 %v133
    %204 = vmatpush1.bf16.msra.mxu0 %v132
    %205 = vmatprep.subr.bf16.mxu0 %v131
    %206 = vmatpush1.bf16.msra.mxu0 %v130
    %207 = vmatprep.subr.bf16.mxu0 %v129
    %208 = vmatpush1.bf16.msra.mxu0 %v128
    %209 = vmatprep.subr.bf16.mxu0 0
    %210 = vmatpush2.bf16.msra.mxu0 0
    %211 = vmatprep.subr.bf16.mxu0 0
    %212 = vmatpush2.bf16.msra.mxu0 0
    %213 = vmatprep.subr.bf16.mxu0 0
    %214 = vmatpush2.bf16.msra.mxu0 0
    %215 = vmatprep.subr.bf16.mxu0 0
    %216 = vmatpush2.bf16.msra.mxu0 0
    %217 = vmatprep.subr.bf16.mxu0 0
    %218 = vmatpush2.bf16.msra.mxu0 0
    %219 = vmatprep.subr.bf16.mxu0 0
    %220 = vmatpush2.bf16.msra.mxu0 0
    %221 = vmatprep.subr.bf16.mxu0 0
    %222 = vmatpush2.bf16.msra.mxu0 0
    %223 = vmatprep.subr.bf16.mxu0 0
    %224 = vmatpush2.bf16.msra.mxu0 0
    %225 = vmatprep.mubr.bf16.mxu0 0
    %226 = vmatmul.mubr.bf16.gmra.mxu0 %v146
    %v227 = vpop.f32.mrf.mxu0
    %v228 = vadd.f32 %v97, %v227
    %v229 = vpop.f32.mrf.mxu0
    %v230 = vadd.f32 %v101, %v229
    %v231 = vpop.f32.mrf.mxu0
    %v232 = vadd.f32 %v97, %v231
    %v233 = vpop.f32.mrf.mxu0
    %v234 = vadd.f32 %v101, %v233
    %235 = vmatprep.mubr.bf16.mxu0 0
    %236 = vmatmul.mubr.bf16.gmra.mxu0 %v149
    %v237 = vpop.f32.mrf.mxu0
    %v238 = vadd.f32 %v97, %v237
    %v239 = vpop.f32.mrf.mxu0
    %v240 = vadd.f32 %v101, %v239
    %v241 = vpop.f32.mrf.mxu0
    %v242 = vadd.f32 %v97, %v241
    %v243 = vpop.f32.mrf.mxu0
    %v244 = vadd.f32 %v101, %v243
    %245 = vmatprep.mubr.bf16.mxu0 0
    %246 = vmatmul.mubr.bf16.gmra.mxu0 %v152
    %v247 = vpop.f32.mrf.mxu0
    %v248 = vadd.f32 %v97, %v247
    %v249 = vpop.f32.mrf.mxu0
    %v250 = vadd.f32 %v101, %v249
    %v251 = vpop.f32.mrf.mxu0
    %v252 = vadd.f32 %v97, %v251
    %v253 = vpop.f32.mrf.mxu0
    %v254 = vadd.f32 %v101, %v253
    %255 = vmatprep.mubr.bf16.mxu0 0
    %256 = vmatmul.mubr.bf16.gmra.mxu0 %v155
    %v257 = vpop.f32.mrf.mxu0
    %v258 = vadd.f32 %v97, %v257
    %v259 = vpop.f32.mrf.mxu0
    %v260 = vadd.f32 %v101, %v259
    %v261 = vpop.f32.mrf.mxu0
    %v262 = vadd.f32 %v97, %v261
    %v263 = vpop.f32.mrf.mxu0
    %v264 = vadd.f32 %v101, %v263
    %265 = vmatprep.mubr.bf16.mxu0 0
    %266 = vmatmul.mubr.bf16.gmra.mxu0 %v158
    %v267 = vpop.f32.mrf.mxu0
    %v268 = vadd.f32 %v97, %v267
    %v269 = vpop.f32.mrf.mxu0
    %v270 = vadd.f32 %v101, %v269
    %v271 = vpop.f32.mrf.mxu0
    %v272 = vadd.f32 %v97, %v271
    %v273 = vpop.f32.mrf.mxu0
    %v274 = vadd.f32 %v101, %v273
    %275 = vmatprep.mubr.bf16.mxu0 0
    %276 = vmatmul.mubr.bf16.gmra.mxu0 %v161
    %v277 = vpop.f32.mrf.mxu0
    %v278 = vadd.f32 %v97, %v277
    %v279 = vpop.f32.mrf.mxu0
    %v280 = vadd.f32 %v101, %v279
    %v281 = vpop.f32.mrf.mxu0
    %v282 = vadd.f32 %v97, %v281
    %v283 = vpop.f32.mrf.mxu0
    %v284 = vadd.f32 %v101, %v283
    %285 = vmatprep.mubr.bf16.mxu0 0
    %286 = vmatmul.mubr.bf16.gmra.mxu0 %v164
    %v287 = vpop.f32.mrf.mxu0
    %v288 = vadd.f32 %v97, %v287
    %v289 = vpop.f32.mrf.mxu0
    %v290 = vadd.f32 %v101, %v289
    %v291 = vpop.f32.mrf.mxu0
    %v292 = vadd.f32 %v97, %v291
    %v293 = vpop.f32.mrf.mxu0
    %v294 = vadd.f32 %v101, %v293
    %295 = vmatprep.mubr.bf16.mxu0 0
    %296 = vmatmul.mubr.bf16.gmra.mxu0 %v167
    %v297 = vpop.f32.mrf.mxu0
    %v298 = vadd.f32 %v97, %v297
    %v299 = vpop.f32.mrf.mxu0
    %v300 = vadd.f32 %v101, %v299
    %v301 = vpop.f32.mrf.mxu0
    %v302 = vadd.f32 %v97, %v301
    %v303 = vpop.f32.mrf.mxu0
    %v304 = vadd.f32 %v101, %v303
    %305 = vmatprep.mubr.bf16.mxu0 0
    %306 = vmatmul.mubr.bf16.gmra.mxu0 %v170
    %v307 = vpop.f32.mrf.mxu0
    %v308 = vadd.f32 %v97, %v307
    %v309 = vpop.f32.mrf.mxu0
    %v310 = vadd.f32 %v101, %v309
    %v311 = vpop.f32.mrf.mxu0
    %v312 = vadd.f32 %v97, %v311
    %v313 = vpop.f32.mrf.mxu0
    %v314 = vadd.f32 %v101, %v313
    %315 = vmatprep.mubr.bf16.mxu0 0
    %316 = vmatmul.mubr.bf16.gmra.mxu0 %v173
    %v317 = vpop.f32.mrf.mxu0
    %v318 = vadd.f32 %v97, %v317
    %v319 = vpop.f32.mrf.mxu0
    %v320 = vadd.f32 %v101, %v319
    %v321 = vpop.f32.mrf.mxu0
    %v322 = vadd.f32 %v97, %v321
    %v323 = vpop.f32.mrf.mxu0
    %v324 = vadd.f32 %v101, %v323
    %325 = vmatprep.mubr.bf16.mxu0 0
    %326 = vmatmul.mubr.bf16.gmra.mxu0 %v176
    %v327 = vpop.f32.mrf.mxu0
    %v328 = vadd.f32 %v97, %v327
    %v329 = vpop.f32.mrf.mxu0
    %v330 = vadd.f32 %v101, %v329
    %v331 = vpop.f32.mrf.mxu0
    %v332 = vadd.f32 %v97, %v331
    %v333 = vpop.f32.mrf.mxu0
    %v334 = vadd.f32 %v101, %v333
    %335 = vmatprep.mubr.bf16.mxu0 0
    %336 = vmatmul.mubr.bf16.gmra.mxu0 %v179
    %v337 = vpop.f32.mrf.mxu0
    %v338 = vadd.f32 %v97, %v337
    %v339 = vpop.f32.mrf.mxu0
    %v340 = vadd.f32 %v101, %v339
    %v341 = vpop.f32.mrf.mxu0
    %v342 = vadd.f32 %v97, %v341
    %v343 = vpop.f32.mrf.mxu0
    %v344 = vadd.f32 %v101, %v343
    %345 = vmatprep.mubr.bf16.mxu0 0
    %346 = vmatmul.mubr.bf16.gmra.mxu0 %v182
    %v347 = vpop.f32.mrf.mxu0
    %v348 = vadd.f32 %v97, %v347
    %v349 = vpop.f32.mrf.mxu0
    %v350 = vadd.f32 %v101, %v349
    %v351 = vpop.f32.mrf.mxu0
    %v352 = vadd.f32 %v97, %v351
    %v353 = vpop.f32.mrf.mxu0
    %v354 = vadd.f32 %v101, %v353
    %355 = vmatprep.mubr.bf16.mxu0 0
    %356 = vmatmul.mubr.bf16.gmra.mxu0 %v185
    %v357 = vpop.f32.mrf.mxu0
    %v358 = vadd.f32 %v97, %v357
    %v359 = vpop.f32.mrf.mxu0
    %v360 = vadd.f32 %v101, %v359
    %v361 = vpop.f32.mrf.mxu0
    %v362 = vadd.f32 %v97, %v361
    %v363 = vpop.f32.mrf.mxu0
    %v364 = vadd.f32 %v101, %v363
    %365 = vmatprep.mubr.bf16.mxu0 0
    %366 = vmatmul.mubr.bf16.gmra.mxu0 %v188
    %v367 = vpop.f32.mrf.mxu0
    %v368 = vadd.f32 %v97, %v367
    %v369 = vpop.f32.mrf.mxu0
    %v370 = vadd.f32 %v101, %v369
    %v371 = vpop.f32.mrf.mxu0
    %v372 = vadd.f32 %v97, %v371
    %v373 = vpop.f32.mrf.mxu0
    %v374 = vadd.f32 %v101, %v373
    %375 = vmatprep.mubr.bf16.mxu0 0
    %376 = vmatmul.mubr.bf16.gmra.mxu0 %v191
    %v377 = vpop.f32.mrf.mxu0
    %v378 = vadd.f32 %v97, %v377
    %v379 = vpop.f32.mrf.mxu0
    %v380 = vadd.f32 %v101, %v379
    %v381 = vpop.f32.mrf.mxu0
    %v382 = vadd.f32 %v97, %v381
    %v383 = vpop.f32.mrf.mxu0
    %v384 = vadd.f32 %v101, %v383
    %385 = vdwg.mxu0
    %vm386 = vcmp.ge.f32.partialorder %v228, 0.0
    %vm387 = vcmp.ge.f32.partialorder %v230, 0.0
    %vm388 = vcmp.ge.f32.partialorder %v232, 0.0
    %vm389 = vcmp.ge.f32.partialorder %v234, 0.0
    %vm390 = vcmp.ge.f32.partialorder %v238, 0.0
    %vm391 = vcmp.ge.f32.partialorder %v240, 0.0
    %vm392 = vcmp.ge.f32.partialorder %v242, 0.0
    %vm393 = vcmp.ge.f32.partialorder %v244, 0.0
    %vm394 = vcmp.ge.f32.partialorder %v248, 0.0
    %vm395 = vcmp.ge.f32.partialorder %v250, 0.0
    %vm396 = vcmp.ge.f32.partialorder %v252, 0.0
    %vm397 = vcmp.ge.f32.partialorder %v254, 0.0
    %vm398 = vcmp.ge.f32.partialorder %v258, 0.0
    %vm399 = vcmp.ge.f32.partialorder %v260, 0.0
    %vm400 = vcmp.ge.f32.partialorder %v262, 0.0
    %vm401 = vcmp.ge.f32.partialorder %v264, 0.0
    %vm402 = vcmp.ge.f32.partialorder %v268, 0.0
    %vm403 = vcmp.ge.f32.partialorder %v270, 0.0
    %vm404 = vcmp.ge.f32.partialorder %v272, 0.0
    %vm405 = vcmp.ge.f32.partialorder %v274, 0.0
    %vm406 = vcmp.ge.f32.partialorder %v278, 0.0
    %vm407 = vcmp.ge.f32.partialorder %v280, 0.0
    %vm408 = vcmp.ge.f32.partialorder %v282, 0.0
    %vm409 = vcmp.ge.f32.partialorder %v284, 0.0
    %vm410 = vcmp.ge.f32.partialorder %v288, 0.0
    %vm411 = vcmp.ge.f32.partialorder %v290, 0.0
    %vm412 = vcmp.ge.f32.partialorder %v292, 0.0
    %vm413 = vcmp.ge.f32.partialorder %v294, 0.0
    %vm414 = vcmp.ge.f32.partialorder %v298, 0.0
    %vm415 = vcmp.ge.f32.partialorder %v300, 0.0
    %vm416 = vcmp.ge.f32.partialorder %v302, 0.0
    %vm417 = vcmp.ge.f32.partialorder %v304, 0.0
    %vm418 = vcmp.ge.f32.partialorder %v308, 0.0
    %vm419 = vcmp.ge.f32.partialorder %v310, 0.0
    %vm420 = vcmp.ge.f32.partialorder %v312, 0.0
    %vm421 = vcmp.ge.f32.partialorder %v314, 0.0
    %vm422 = vcmp.ge.f32.partialorder %v318, 0.0
    %vm423 = vcmp.ge.f32.partialorder %v320, 0.0
    %vm424 = vcmp.ge.f32.partialorder %v322, 0.0
    %vm425 = vcmp.ge.f32.partialorder %v324, 0.0
    %vm426 = vcmp.ge.f32.partialorder %v328, 0.0
    %vm427 = vcmp.ge.f32.partialorder %v330, 0.0
    %vm428 = vcmp.ge.f32.partialorder %v332, 0.0
    %vm429 = vcmp.ge.f32.partialorder %v334, 0.0
    %vm430 = vcmp.ge.f32.partialorder %v338, 0.0
    %vm431 = vcmp.ge.f32.partialorder %v340, 0.0
    %vm432 = vcmp.ge.f32.partialorder %v342, 0.0
    %vm433 = vcmp.ge.f32.partialorder %v344, 0.0
    %vm434 = vcmp.ge.f32.partialorder %v348, 0.0
    %vm435 = vcmp.ge.f32.partialorder %v350, 0.0
    %vm436 = vcmp.ge.f32.partialorder %v352, 0.0
    %vm437 = vcmp.ge.f32.partialorder %v354, 0.0
    %vm438 = vcmp.ge.f32.partialorder %v358, 0.0
    %vm439 = vcmp.ge.f32.partialorder %v360, 0.0
    %vm440 = vcmp.ge.f32.partialorder %v362, 0.0
    %vm441 = vcmp.ge.f32.partialorder %v364, 0.0
    %vm442 = vcmp.ge.f32.partialorder %v368, 0.0
    %vm443 = vcmp.ge.f32.partialorder %v370, 0.0
    %vm444 = vcmp.ge.f32.partialorder %v372, 0.0
    %vm445 = vcmp.ge.f32.partialorder %v374, 0.0
    %vm446 = vcmp.ge.f32.partialorder %v378, 0.0
    %vm447 = vcmp.ge.f32.partialorder %v380, 0.0
    %vm448 = vcmp.ge.f32.partialorder %v382, 0.0
    %vm449 = vcmp.ge.f32.partialorder %v384, 0.0
    %v450 = vmul.f32 %v228, 0.2
    %v451 = vmul.f32 %v230, 0.2
    %v452 = vmul.f32 %v232, 0.2
    %v453 = vmul.f32 %v234, 0.2
    %v454 = vmul.f32 %v238, 0.2
    %v455 = vmul.f32 %v240, 0.2
    %v456 = vmul.f32 %v242, 0.2
    %v457 = vmul.f32 %v244, 0.2
    %v458 = vmul.f32 %v248, 0.2
    %v459 = vmul.f32 %v250, 0.2
    %v460 = vmul.f32 %v252, 0.2
    %v461 = vmul.f32 %v254, 0.2
    %v462 = vmul.f32 %v258, 0.2
    %v463 = vmul.f32 %v260, 0.2
    %v464 = vmul.f32 %v262, 0.2
    %v465 = vmul.f32 %v264, 0.2
    %v466 = vmul.f32 %v268, 0.2
    %v467 = vmul.f32 %v270, 0.2
    %v468 = vmul.f32 %v272, 0.2
    %v469 = vmul.f32 %v274, 0.2
    %v470 = vmul.f32 %v278, 0.2
    %v471 = vmul.f32 %v280, 0.2
    %v472 = vmul.f32 %v282, 0.2
    %v473 = vmul.f32 %v284, 0.2
    %v474 = vmul.f32 %v288, 0.2
    %v475 = vmul.f32 %v290, 0.2
    %v476 = vmul.f32 %v292, 0.2
    %v477 = vmul.f32 %v294, 0.2
    %v478 = vmul.f32 %v298, 0.2
    %v479 = vmul.f32 %v300, 0.2
    %v480 = vmul.f32 %v302, 0.2
    %v481 = vmul.f32 %v304, 0.2
    %v482 = vmul.f32 %v308, 0.2
    %v483 = vmul.f32 %v310, 0.2
    %v484 = vmul.f32 %v312, 0.2
    %v485 = vmul.f32 %v314, 0.2
    %v486 = vmul.f32 %v318, 0.2
    %v487 = vmul.f32 %v320, 0.2
    %v488 = vmul.f32 %v322, 0.2
    %v489 = vmul.f32 %v324, 0.2
    %v490 = vmul.f32 %v328, 0.2
    %v491 = vmul.f32 %v330, 0.2
    %v492 = vmul.f32 %v332, 0.2
    %v493 = vmul.f32 %v334, 0.2
    %v494 = vmul.f32 %v338, 0.2
    %v495 = vmul.f32 %v340, 0.2
    %v496 = vmul.f32 %v342, 0.2
    %v497 = vmul.f32 %v344, 0.2
    %v498 = vmul.f32 %v348, 0.2
    %v499 = vmul.f32 %v350, 0.2
    %v500 = vmul.f32 %v352, 0.2
    %v501 = vmul.f32 %v354, 0.2
    %v502 = vmul.f32 %v358, 0.2
    %v503 = vmul.f32 %v360, 0.2
    %v504 = vmul.f32 %v362, 0.2
    %v505 = vmul.f32 %v364, 0.2
    %v506 = vmul.f32 %v368, 0.2
    %v507 = vmul.f32 %v370, 0.2
    %v508 = vmul.f32 %v372, 0.2
    %v509 = vmul.f32 %v374, 0.2
    %v510 = vmul.f32 %v378, 0.2
    %v511 = vmul.f32 %v380, 0.2
    %v512 = vmul.f32 %v382, 0.2
    %v513 = vmul.f32 %v384, 0.2
    %v514 = vsel %vm386, %v228, %v450
    %v515 = vsel %vm387, %v230, %v451
    %v516 = vsel %vm388, %v232, %v452
    %v517 = vsel %vm389, %v234, %v453
    %v518 = vsel %vm390, %v238, %v454
    %v519 = vsel %vm391, %v240, %v455
    %v520 = vsel %vm392, %v242, %v456
    %v521 = vsel %vm393, %v244, %v457
    %v522 = vsel %vm394, %v248, %v458
    %v523 = vsel %vm395, %v250, %v459
    %v524 = vsel %vm396, %v252, %v460
    %v525 = vsel %vm397, %v254, %v461
    %v526 = vsel %vm398, %v258, %v462
    %v527 = vsel %vm399, %v260, %v463
    %v528 = vsel %vm400, %v262, %v464
    %v529 = vsel %vm401, %v264, %v465
    %v530 = vsel %vm402, %v268, %v466
    %v531 = vsel %vm403, %v270, %v467
    %v532 = vsel %vm404, %v272, %v468
    %v533 = vsel %vm405, %v274, %v469
    %v534 = vsel %vm406, %v278, %v470
    %v535 = vsel %vm407, %v280, %v471
    %v536 = vsel %vm408, %v282, %v472
    %v537 = vsel %vm409, %v284, %v473
    %v538 = vsel %vm410, %v288, %v474
    %v539 = vsel %vm411, %v290, %v475
    %v540 = vsel %vm412, %v292, %v476
    %v541 = vsel %vm413, %v294, %v477
    %v542 = vsel %vm414, %v298, %v478
    %v543 = vsel %vm415, %v300, %v479
    %v544 = vsel %vm416, %v302, %v480
    %v545 = vsel %vm417, %v304, %v481
    %v546 = vsel %vm418, %v308, %v482
    %v547 = vsel %vm419, %v310, %v483
    %v548 = vsel %vm420, %v312, %v484
    %v549 = vsel %vm421, %v314, %v485
    %v550 = vsel %vm422, %v318, %v486
    %v551 = vsel %vm423, %v320, %v487
    %v552 = vsel %vm424, %v322, %v488
    %v553 = vsel %vm425, %v324, %v489
    %v554 = vsel %vm426, %v328, %v490
    %v555 = vsel %vm427, %v330, %v491
    %v556 = vsel %vm428, %v332, %v492
    %v557 = vsel %vm429, %v334, %v493
    %v558 = vsel %vm430, %v338, %v494
    %v559 = vsel %vm431, %v340, %v495
    %v560 = vsel %vm432, %v342, %v496
    %v561 = vsel %vm433, %v344, %v497
    %v562 = vsel %vm434, %v348, %v498
    %v563 = vsel %vm435, %v350, %v499
    %v564 = vsel %vm436, %v352, %v500
    %v565 = vsel %vm437, %v354, %v501
    %v566 = vsel %vm438, %v358, %v502
    %v567 = vsel %vm439, %v360, %v503
    %v568 = vsel %vm440, %v362, %v504
    %v569 = vsel %vm441, %v364, %v505
    %v570 = vsel %vm442, %v368, %v506
    %v571 = vsel %vm443, %v370, %v507
    %v572 = vsel %vm444, %v372, %v508
    %v573 = vsel %vm445, %v374, %v509
    %v574 = vsel %vm446, %v378, %v510
    %v575 = vsel %vm447, %v380, %v511
    %v576 = vsel %vm448, %v382, %v512
    %v577 = vsel %vm449, %v384, %v513
    %v578 = vpack.c.bf16 %v516, %v514
    %v579 = vpack.c.bf16 %v517, %v515
    %v580 = vpack.c.bf16 %v520, %v518
    %v581 = vpack.c.bf16 %v521, %v519
    %v582 = vpack.c.bf16 %v524, %v522
    %v583 = vpack.c.bf16 %v525, %v523
    %v584 = vpack.c.bf16 %v528, %v526
    %v585 = vpack.c.bf16 %v529, %v527
    %v586 = vpack.c.bf16 %v532, %v530
    %v587 = vpack.c.bf16 %v533, %v531
    %v588 = vpack.c.bf16 %v536, %v534
    %v589 = vpack.c.bf16 %v537, %v535
    %v590 = vpack.c.bf16 %v540, %v538
    %v591 = vpack.c.bf16 %v541, %v539
    %v592 = vpack.c.bf16 %v544, %v542
    %v593 = vpack.c.bf16 %v545, %v543
    %v594 = vpack.c.bf16 %v548, %v546
    %v595 = vpack.c.bf16 %v549, %v547
    %v596 = vpack.c.bf16 %v552, %v550
    %v597 = vpack.c.bf16 %v553, %v551
    %v598 = vpack.c.bf16 %v556, %v554
    %v599 = vpack.c.bf16 %v557, %v555
    %v600 = vpack.c.bf16 %v560, %v558
    %v601 = vpack.c.bf16 %v561, %v559
    %v602 = vpack.c.bf16 %v564, %v562
    %v603 = vpack.c.bf16 %v565, %v563
    %v604 = vpack.c.bf16 %v568, %v566
    %v605 = vpack.c.bf16 %v569, %v567
    %v606 = vpack.c.bf16 %v572, %v570
    %v607 = vpack.c.bf16 %v573, %v571
    %v608 = vpack.c.bf16 %v576, %v574
    %v609 = vpack.c.bf16 %v577, %v575
    %v610 = vld [vmem:[%s3] sm:$0xf]
    %v611 = vld [vmem:[%s3 + $0x4] sm:$0xf]
    %v612 = vld [vmem:[%s3 + $0x8] sm:$0xf]
    %v613 = vld [vmem:[%s3 + $0xc] sm:$0xf]
    %v614 = vld [vmem:[%s3 + $0x10] sm:$0xf]
    %v615 = vld [vmem:[%s3 + $0x14] sm:$0xf]
    %v616 = vld [vmem:[%s3 + $0x18] sm:$0xf]
    %v617 = vld [vmem:[%s3 + $0x1c] sm:$0xf]
    %v618 = vld [vmem:[%s3 + $0x20] sm:$0xf]
    %v619 = vld [vmem:[%s3 + $0x24] sm:$0xf]
    %v620 = vld [vmem:[%s3 + $0x28] sm:$0xf]
    %v621 = vld [vmem:[%s3 + $0x2c] sm:$0xf]
    %v622 = vld [vmem:[%s3 + $0x30] sm:$0xf]
    %v623 = vld [vmem:[%s3 + $0x34] sm:$0xf]
    %v624 = vld [vmem:[%s3 + $0x38] sm:$0xf]
    %v625 = vld [vmem:[%s3 + $0x3c] sm:$0xf]
    %v626 = vld [vmem:[%s3 + $0x40] sm:$0xf]
    %v627 = vld [vmem:[%s3 + $0x44] sm:$0xf]
    %v628 = vld [vmem:[%s3 + $0x48] sm:$0xf]
    %v629 = vld [vmem:[%s3 + $0x4c] sm:$0xf]
    %v630 = vld [vmem:[%s3 + $0x50] sm:$0xf]
    %v631 = vld [vmem:[%s3 + $0x54] sm:$0xf]
    %v632 = vld [vmem:[%s3 + $0x58] sm:$0xf]
    %v633 = vld [vmem:[%s3 + $0x5c] sm:$0xf]
    %v634 = vld [vmem:[%s3 + $0x60] sm:$0xf]
    %v635 = vld [vmem:[%s3 + $0x64] sm:$0xf]
    %v636 = vld [vmem:[%s3 + $0x68] sm:$0xf]
    %v637 = vld [vmem:[%s3 + $0x6c] sm:$0xf]
    %v638 = vld [vmem:[%s3 + $0x70] sm:$0xf]
    %v639 = vld [vmem:[%s3 + $0x74] sm:$0xf]
    %v640 = vld [vmem:[%s3 + $0x78] sm:$0xf]
    %v641 = vld [vmem:[%s3 + $0x7c] sm:$0xf]
    %v642 = vld [vmem:[%s4] sm:$0x1]
    %v644 = vlaneseq
    %v645 = vshrl.u32 %v644, 7
    %v646 = vsub.s32 0, %v645
    %v647 = vrot.slane %v642, %v646
    %v681 = vunpack.c.l.b16 %v610
    %v682 = vunpack.c.l.b16 %v611
    %v683 = vunpack.c.l.b16 %v612
    %v684 = vunpack.c.l.b16 %v613
    %v685 = vunpack.c.l.b16 %v614
    %v686 = vunpack.c.l.b16 %v615
    %v687 = vunpack.c.l.b16 %v616
    %v688 = vunpack.c.l.b16 %v617
    %v689 = vunpack.c.l.b16 %v618
    %v690 = vunpack.c.l.b16 %v619
    %v691 = vunpack.c.l.b16 %v620
    %v692 = vunpack.c.l.b16 %v621
    %v693 = vunpack.c.l.b16 %v622
    %v694 = vunpack.c.l.b16 %v623
    %v695 = vunpack.c.l.b16 %v624
    %v696 = vunpack.c.l.b16 %v625
    %v697 = vunpack.c.l.b16 %v626
    %v698 = vunpack.c.l.b16 %v627
    %v699 = vunpack.c.l.b16 %v628
    %v700 = vunpack.c.l.b16 %v629
    %v701 = vunpack.c.l.b16 %v630
    %v702 = vunpack.c.l.b16 %v631
    %v703 = vunpack.c.l.b16 %v632
    %v704 = vunpack.c.l.b16 %v633
    %v705 = vunpack.c.l.b16 %v634
    %v706 = vunpack.c.l.b16 %v635
    %v707 = vunpack.c.l.b16 %v636
    %v708 = vunpack.c.l.b16 %v637
    %v709 = vunpack.c.l.b16 %v638
    %v710 = vunpack.c.l.b16 %v639
    %v711 = vunpack.c.l.b16 %v640
    %v712 = vunpack.c.l.b16 %v641
    %v713 = vpack.c.b16 %v682, %v681
    %v714 = vpack.c.b16 %v684, %v683
    %v715 = vpack.c.b16 %v686, %v685
    %v716 = vpack.c.b16 %v688, %v687
    %v717 = vpack.c.b16 %v690, %v689
    %v718 = vpack.c.b16 %v692, %v691
    %v719 = vpack.c.b16 %v694, %v693
    %v720 = vpack.c.b16 %v696, %v695
    %v721 = vpack.c.b16 %v698, %v697
    %v722 = vpack.c.b16 %v700, %v699
    %v723 = vpack.c.b16 %v702, %v701
    %v724 = vpack.c.b16 %v704, %v703
    %v725 = vpack.c.b16 %v706, %v705
    %v726 = vpack.c.b16 %v708, %v707
    %v727 = vpack.c.b16 %v710, %v709
    %v728 = vpack.c.b16 %v712, %v711
    %745 = vmatprep.subr.bf16.mxu0 0
    %746 = vmatpush1.bf16.msra.mxu0 %v720
    %747 = vmatprep.subr.bf16.mxu0 0
    %748 = vmatpush1.bf16.msra.mxu0 %v719
    %749 = vmatprep.subr.bf16.mxu0 0
    %750 = vmatpush1.bf16.msra.mxu0 %v718
    %751 = vmatprep.subr.bf16.mxu0 0
    %752 = vmatpush1.bf16.msra.mxu0 %v717
    %753 = vmatprep.subr.bf16.mxu0 0
    %754 = vmatpush1.bf16.msra.mxu0 %v716
    %755 = vmatprep.subr.bf16.mxu0 0
    %756 = vmatpush1.bf16.msra.mxu0 %v715
    %757 = vmatprep.subr.bf16.mxu0 0
    %758 = vmatpush1.bf16.msra.mxu0 %v714
    %759 = vmatprep.subr.bf16.mxu0 0
    %760 = vmatpush1.bf16.msra.mxu0 %v713
    %761 = vmatprep.subr.bf16.mxu0 0
    %762 = vmatpush2.bf16.msra.mxu0 %v728
    %763 = vmatprep.subr.bf16.mxu0 0
    %764 = vmatpush2.bf16.msra.mxu0 %v727
    %765 = vmatprep.subr.bf16.mxu0 0
    %766 = vmatpush2.bf16.msra.mxu0 %v726
    %767 = vmatprep.subr.bf16.mxu0 0
    %768 = vmatpush2.bf16.msra.mxu0 %v725
    %769 = vmatprep.subr.bf16.mxu0 0
    %770 = vmatpush2.bf16.msra.mxu0 %v724
    %771 = vmatprep.subr.bf16.mxu0 0
    %772 = vmatpush2.bf16.msra.mxu0 %v723
    %773 = vmatprep.subr.bf16.mxu0 0
    %774 = vmatpush2.bf16.msra.mxu0 %v722
    %775 = vmatprep.subr.bf16.mxu0 0
    %776 = vmatpush2.bf16.msra.mxu0 %v721
    %777 = vmatprep.mubr.bf16.mxu0 %v579
    %778 = vmatmul.mubr.bf16.gmra.mxu0 %v578
    %v779 = vpop.f32.mrf.mxu0
    %v780 = vadd.f32 %v647, %v779
    %v781 = vpop.f32.mrf.mxu0
    %v782 = vpop.f32.mrf.mxu0
    %v783 = vadd.f32 %v647, %v782
    %v784 = vpop.f32.mrf.mxu0
    %785 = vmatprep.mubr.bf16.mxu0 %v581
    %786 = vmatmul.mubr.bf16.gmra.mxu0 %v580
    %v787 = vpop.f32.mrf.mxu0
    %v788 = vadd.f32 %v647, %v787
    %v789 = vpop.f32.mrf.mxu0
    %v790 = vpop.f32.mrf.mxu0
    %v791 = vadd.f32 %v647, %v790
    %v792 = vpop.f32.mrf.mxu0
    %793 = vmatprep.mubr.bf16.mxu0 %v583
    %794 = vmatmul.mubr.bf16.gmra.mxu0 %v582
    %v795 = vpop.f32.mrf.mxu0
    %v796 = vadd.f32 %v647, %v795
    %v797 = vpop.f32.mrf.mxu0
    %v798 = vpop.f32.mrf.mxu0
    %v799 = vadd.f32 %v647, %v798
    %v800 = vpop.f32.mrf.mxu0
    %801 = vmatprep.mubr.bf16.mxu0 %v585
    %802 = vmatmul.mubr.bf16.gmra.mxu0 %v584
    %v803 = vpop.f32.mrf.mxu0
    %v804 = vadd.f32 %v647, %v803
    %v805 = vpop.f32.mrf.mxu0
    %v806 = vpop.f32.mrf.mxu0
    %v807 = vadd.f32 %v647, %v806
    %v808 = vpop.f32.mrf.mxu0
    %809 = vmatprep.mubr.bf16.mxu0 %v587
    %810 = vmatmul.mubr.bf16.gmra.mxu0 %v586
    %v811 = vpop.f32.mrf.mxu0
    %v812 = vadd.f32 %v647, %v811
    %v813 = vpop.f32.mrf.mxu0
    %v814 = vpop.f32.mrf.mxu0
    %v815 = vadd.f32 %v647, %v814
    %v816 = vpop.f32.mrf.mxu0
    %817 = vmatprep.mubr.bf16.mxu0 %v589
    %818 = vmatmul.mubr.bf16.gmra.mxu0 %v588
    %v819 = vpop.f32.mrf.mxu0
    %v820 = vadd.f32 %v647, %v819
    %v821 = vpop.f32.mrf.mxu0
    %v822 = vpop.f32.mrf.mxu0
    %v823 = vadd.f32 %v647, %v822
    %v824 = vpop.f32.mrf.mxu0
    %825 = vmatprep.mubr.bf16.mxu0 %v591
    %826 = vmatmul.mubr.bf16.gmra.mxu0 %v590
    %v827 = vpop.f32.mrf.mxu0
    %v828 = vadd.f32 %v647, %v827
    %v829 = vpop.f32.mrf.mxu0
    %v830 = vpop.f32.mrf.mxu0
    %v831 = vadd.f32 %v647, %v830
    %v832 = vpop.f32.mrf.mxu0
    %833 = vmatprep.mubr.bf16.mxu0 %v593
    %834 = vmatmul.mubr.bf16.gmra.mxu0 %v592
    %v835 = vpop.f32.mrf.mxu0
    %v836 = vadd.f32 %v647, %v835
    %v837 = vpop.f32.mrf.mxu0
    %v838 = vpop.f32.mrf.mxu0
    %v839 = vadd.f32 %v647, %v838
    %v840 = vpop.f32.mrf.mxu0
    %841 = vmatprep.mubr.bf16.mxu0 %v595
    %842 = vmatmul.mubr.bf16.gmra.mxu0 %v594
    %v843 = vpop.f32.mrf.mxu0
    %v844 = vadd.f32 %v647, %v843
    %v845 = vpop.f32.mrf.mxu0
    %v846 = vpop.f32.mrf.mxu0
    %v847 = vadd.f32 %v647, %v846
    %v848 = vpop.f32.mrf.mxu0
    %849 = vmatprep.mubr.bf16.mxu0 %v597
    %850 = vmatmul.mubr.bf16.gmra.mxu0 %v596
    %v851 = vpop.f32.mrf.mxu0
    %v852 = vadd.f32 %v647, %v851
    %v853 = vpop.f32.mrf.mxu0
    %v854 = vpop.f32.mrf.mxu0
    %v855 = vadd.f32 %v647, %v854
    %v856 = vpop.f32.mrf.mxu0
    %857 = vmatprep.mubr.bf16.mxu0 %v599
    %858 = vmatmul.mubr.bf16.gmra.mxu0 %v598
    %v859 = vpop.f32.mrf.mxu0
    %v860 = vadd.f32 %v647, %v859
    %v861 = vpop.f32.mrf.mxu0
    %v862 = vpop.f32.mrf.mxu0
    %v863 = vadd.f32 %v647, %v862
    %v864 = vpop.f32.mrf.mxu0
    %865 = vmatprep.mubr.bf16.mxu0 %v601
    %866 = vmatmul.mubr.bf16.gmra.mxu0 %v600
    %v867 = vpop.f32.mrf.mxu0
    %v868 = vadd.f32 %v647, %v867
    %v869 = vpop.f32.mrf.mxu0
    %v870 = vpop.f32.mrf.mxu0
    %v871 = vadd.f32 %v647, %v870
    %v872 = vpop.f32.mrf.mxu0
    %873 = vmatprep.mubr.bf16.mxu0 %v603
    %874 = vmatmul.mubr.bf16.gmra.mxu0 %v602
    %v875 = vpop.f32.mrf.mxu0
    %v876 = vadd.f32 %v647, %v875
    %v877 = vpop.f32.mrf.mxu0
    %v878 = vpop.f32.mrf.mxu0
    %v879 = vadd.f32 %v647, %v878
    %v880 = vpop.f32.mrf.mxu0
    %881 = vmatprep.mubr.bf16.mxu0 %v605
    %882 = vmatmul.mubr.bf16.gmra.mxu0 %v604
    %v883 = vpop.f32.mrf.mxu0
    %v884 = vadd.f32 %v647, %v883
    %v885 = vpop.f32.mrf.mxu0
    %v886 = vpop.f32.mrf.mxu0
    %v887 = vadd.f32 %v647, %v886
    %v888 = vpop.f32.mrf.mxu0
    %889 = vmatprep.mubr.bf16.mxu0 %v607
    %890 = vmatmul.mubr.bf16.gmra.mxu0 %v606
    %v891 = vpop.f32.mrf.mxu0
    %v892 = vadd.f32 %v647, %v891
    %v893 = vpop.f32.mrf.mxu0
    %v894 = vpop.f32.mrf.mxu0
    %v895 = vadd.f32 %v647, %v894
    %v896 = vpop.f32.mrf.mxu0
    %897 = vmatprep.mubr.bf16.mxu0 %v609
    %898 = vmatmul.mubr.bf16.gmra.mxu0 %v608
    %v899 = vpop.f32.mrf.mxu0
    %v900 = vadd.f32 %v647, %v899
    %v901 = vpop.f32.mrf.mxu0
    %v902 = vpop.f32.mrf.mxu0
    %v903 = vadd.f32 %v647, %v902
    %v904 = vpop.f32.mrf.mxu0
    %905 = vdwg.mxu0
    %vm906 = vcmp.ge.f32.partialorder %v780, 0.0
    %vm907 = vcmp.ge.f32.partialorder %v783, 0.0
    %vm908 = vcmp.ge.f32.partialorder %v788, 0.0
    %vm909 = vcmp.ge.f32.partialorder %v791, 0.0
    %vm910 = vcmp.ge.f32.partialorder %v796, 0.0
    %vm911 = vcmp.ge.f32.partialorder %v799, 0.0
    %vm912 = vcmp.ge.f32.partialorder %v804, 0.0
    %vm913 = vcmp.ge.f32.partialorder %v807, 0.0
    %vm914 = vcmp.ge.f32.partialorder %v812, 0.0
    %vm915 = vcmp.ge.f32.partialorder %v815, 0.0
    %vm916 = vcmp.ge.f32.partialorder %v820, 0.0
    %vm917 = vcmp.ge.f32.partialorder %v823, 0.0
    %vm918 = vcmp.ge.f32.partialorder %v828, 0.0
    %vm919 = vcmp.ge.f32.partialorder %v831, 0.0
    %vm920 = vcmp.ge.f32.partialorder %v836, 0.0
    %vm921 = vcmp.ge.f32.partialorder %v839, 0.0
    %vm922 = vcmp.ge.f32.partialorder %v844, 0.0
    %vm923 = vcmp.ge.f32.partialorder %v847, 0.0
    %vm924 = vcmp.ge.f32.partialorder %v852, 0.0
    %vm925 = vcmp.ge.f32.partialorder %v855, 0.0
    %vm926 = vcmp.ge.f32.partialorder %v860, 0.0
    %vm927 = vcmp.ge.f32.partialorder %v863, 0.0
    %vm928 = vcmp.ge.f32.partialorder %v868, 0.0
    %vm929 = vcmp.ge.f32.partialorder %v871, 0.0
    %vm930 = vcmp.ge.f32.partialorder %v876, 0.0
    %vm931 = vcmp.ge.f32.partialorder %v879, 0.0
    %vm932 = vcmp.ge.f32.partialorder %v884, 0.0
    %vm933 = vcmp.ge.f32.partialorder %v887, 0.0
    %vm934 = vcmp.ge.f32.partialorder %v892, 0.0
    %vm935 = vcmp.ge.f32.partialorder %v895, 0.0
    %vm936 = vcmp.ge.f32.partialorder %v900, 0.0
    %vm937 = vcmp.ge.f32.partialorder %v903, 0.0
    %v938 = vmul.f32 %v780, 0.2
    %v939 = vmul.f32 %v783, 0.2
    %v940 = vmul.f32 %v788, 0.2
    %v941 = vmul.f32 %v791, 0.2
    %v942 = vmul.f32 %v796, 0.2
    %v943 = vmul.f32 %v799, 0.2
    %v944 = vmul.f32 %v804, 0.2
    %v945 = vmul.f32 %v807, 0.2
    %v946 = vmul.f32 %v812, 0.2
    %v947 = vmul.f32 %v815, 0.2
    %v948 = vmul.f32 %v820, 0.2
    %v949 = vmul.f32 %v823, 0.2
    %v950 = vmul.f32 %v828, 0.2
    %v951 = vmul.f32 %v831, 0.2
    %v952 = vmul.f32 %v836, 0.2
    %v953 = vmul.f32 %v839, 0.2
    %v954 = vmul.f32 %v844, 0.2
    %v955 = vmul.f32 %v847, 0.2
    %v956 = vmul.f32 %v852, 0.2
    %v957 = vmul.f32 %v855, 0.2
    %v958 = vmul.f32 %v860, 0.2
    %v959 = vmul.f32 %v863, 0.2
    %v960 = vmul.f32 %v868, 0.2
    %v961 = vmul.f32 %v871, 0.2
    %v962 = vmul.f32 %v876, 0.2
    %v963 = vmul.f32 %v879, 0.2
    %v964 = vmul.f32 %v884, 0.2
    %v965 = vmul.f32 %v887, 0.2
    %v966 = vmul.f32 %v892, 0.2
    %v967 = vmul.f32 %v895, 0.2
    %v968 = vmul.f32 %v900, 0.2
    %v969 = vmul.f32 %v903, 0.2
    %v970 = vsel %vm906, %v780, %v938
    %v971 = vsel %vm907, %v783, %v939
    %v972 = vsel %vm908, %v788, %v940
    %v973 = vsel %vm909, %v791, %v941
    %v974 = vsel %vm910, %v796, %v942
    %v975 = vsel %vm911, %v799, %v943
    %v976 = vsel %vm912, %v804, %v944
    %v977 = vsel %vm913, %v807, %v945
    %v978 = vsel %vm914, %v812, %v946
    %v979 = vsel %vm915, %v815, %v947
    %v980 = vsel %vm916, %v820, %v948
    %v981 = vsel %vm917, %v823, %v949
    %v982 = vsel %vm918, %v828, %v950
    %v983 = vsel %vm919, %v831, %v951
    %v984 = vsel %vm920, %v836, %v952
    %v985 = vsel %vm921, %v839, %v953
    %v986 = vsel %vm922, %v844, %v954
    %v987 = vsel %vm923, %v847, %v955
    %v988 = vsel %vm924, %v852, %v956
    %v989 = vsel %vm925, %v855, %v957
    %v990 = vsel %vm926, %v860, %v958
    %v991 = vsel %vm927, %v863, %v959
    %v992 = vsel %vm928, %v868, %v960
    %v993 = vsel %vm929, %v871, %v961
    %v994 = vsel %vm930, %v876, %v962
    %v995 = vsel %vm931, %v879, %v963
    %v996 = vsel %vm932, %v884, %v964
    %v997 = vsel %vm933, %v887, %v965
    %v998 = vsel %vm934, %v892, %v966
    %v999 = vsel %vm935, %v895, %v967
    %v1000 = vsel %vm936, %v900, %v968
    %v1001 = vsel %vm937, %v903, %v969
    %v1002 = vpack.c.bf16 %v971, %v970
    %v1003 = vpack.c.bf16 %v973, %v972
    %v1004 = vpack.c.bf16 %v975, %v974
    %v1005 = vpack.c.bf16 %v977, %v976
    %v1006 = vpack.c.bf16 %v979, %v978
    %v1007 = vpack.c.bf16 %v981, %v980
    %v1008 = vpack.c.bf16 %v983, %v982
    %v1009 = vpack.c.bf16 %v985, %v984
    %v1010 = vpack.c.bf16 %v987, %v986
    %v1011 = vpack.c.bf16 %v989, %v988
    %v1012 = vpack.c.bf16 %v991, %v990
    %v1013 = vpack.c.bf16 %v993, %v992
    %v1014 = vpack.c.bf16 %v995, %v994
    %v1015 = vpack.c.bf16 %v997, %v996
    %v1016 = vpack.c.bf16 %v999, %v998
    %v1017 = vpack.c.bf16 %v1001, %v1000
    %v1018 = vld [vmem:[%s5] sm:$0xf]
    %v1019 = vld [vmem:[%s5 + $0x4] sm:$0xf]
    %v1020 = vld [vmem:[%s5 + $0x8] sm:$0xf]
    %v1021 = vld [vmem:[%s5 + $0xc] sm:$0xf]
    %v1022 = vld [vmem:[%s5 + $0x10] sm:$0xf]
    %v1023 = vld [vmem:[%s5 + $0x14] sm:$0xf]
    %v1024 = vld [vmem:[%s5 + $0x18] sm:$0xf]
    %v1025 = vld [vmem:[%s5 + $0x1c] sm:$0xf]
    %v1026 = vld [vmem:[%s5 + $0x20] sm:$0xf]
    %v1027 = vld [vmem:[%s5 + $0x24] sm:$0xf]
    %v1028 = vld [vmem:[%s5 + $0x28] sm:$0xf]
    %v1029 = vld [vmem:[%s5 + $0x2c] sm:$0xf]
    %v1030 = vld [vmem:[%s5 + $0x30] sm:$0xf]
    %v1031 = vld [vmem:[%s5 + $0x34] sm:$0xf]
    %v1032 = vld [vmem:[%s5 + $0x38] sm:$0xf]
    %v1033 = vld [vmem:[%s5 + $0x3c] sm:$0xf]
    %v1034 = vld [vmem:[%s6] sm:$0x1]
    %v1036 = vlaneseq
    %v1037 = vshrl.u32 %v1036, 7
    %v1038 = vsub.s32 0, %v1037
    %v1039 = vrot.slane %v1034, %v1038
    %v1057 = vunpack.c.l.b16 %v1018
    %v1058 = vunpack.c.l.b16 %v1019
    %v1059 = vunpack.c.l.b16 %v1020
    %v1060 = vunpack.c.l.b16 %v1021
    %v1061 = vunpack.c.l.b16 %v1022
    %v1062 = vunpack.c.l.b16 %v1023
    %v1063 = vunpack.c.l.b16 %v1024
    %v1064 = vunpack.c.l.b16 %v1025
    %v1065 = vunpack.c.l.b16 %v1026
    %v1066 = vunpack.c.l.b16 %v1027
    %v1067 = vunpack.c.l.b16 %v1028
    %v1068 = vunpack.c.l.b16 %v1029
    %v1069 = vunpack.c.l.b16 %v1030
    %v1070 = vunpack.c.l.b16 %v1031
    %v1071 = vunpack.c.l.b16 %v1032
    %v1072 = vunpack.c.l.b16 %v1033
    %v1073 = vpack.c.b16 %v1058, %v1057
    %v1074 = vpack.c.b16 %v1060, %v1059
    %v1075 = vpack.c.b16 %v1062, %v1061
    %v1076 = vpack.c.b16 %v1064, %v1063
    %v1077 = vpack.c.b16 %v1066, %v1065
    %v1078 = vpack.c.b16 %v1068, %v1067
    %v1079 = vpack.c.b16 %v1070, %v1069
    %v1080 = vpack.c.b16 %v1072, %v1071
    %1089 = vmatprep.subr.bf16.mxu0 0
    %1090 = vmatpush1.bf16.msra.mxu0 %v1080
    %1091 = vmatprep.subr.bf16.mxu0 0
    %1092 = vmatpush1.bf16.msra.mxu0 %v1079
    %1093 = vmatprep.subr.bf16.mxu0 0
    %1094 = vmatpush1.bf16.msra.mxu0 %v1078
    %1095 = vmatprep.subr.bf16.mxu0 0
    %1096 = vmatpush1.bf16.msra.mxu0 %v1077
    %1097 = vmatprep.subr.bf16.mxu0 0
    %1098 = vmatpush1.bf16.msra.mxu0 %v1076
    %1099 = vmatprep.subr.bf16.mxu0 0
    %1100 = vmatpush1.bf16.msra.mxu0 %v1075
    %1101 = vmatprep.subr.bf16.mxu0 0
    %1102 = vmatpush1.bf16.msra.mxu0 %v1074
    %1103 = vmatprep.subr.bf16.mxu0 0
    %1104 = vmatpush1.bf16.msra.mxu0 %v1073
    %1105 = vmatprep.subr.bf16.mxu0 0
    %1106 = vmatpush2.bf16.msra.mxu0 0
    %1107 = vmatprep.subr.bf16.mxu0 0
    %1108 = vmatpush2.bf16.msra.mxu0 0
    %1109 = vmatprep.subr.bf16.mxu0 0
    %1110 = vmatpush2.bf16.msra.mxu0 0
    %1111 = vmatprep.subr.bf16.mxu0 0
    %1112 = vmatpush2.bf16.msra.mxu0 0
    %1113 = vmatprep.subr.bf16.mxu0 0
    %1114 = vmatpush2.bf16.msra.mxu0 0
    %1115 = vmatprep.subr.bf16.mxu0 0
    %1116 = vmatpush2.bf16.msra.mxu0 0
    %1117 = vmatprep.subr.bf16.mxu0 0
    %1118 = vmatpush2.bf16.msra.mxu0 0
    %1119 = vmatprep.subr.bf16.mxu0 0
    %1120 = vmatpush2.bf16.msra.mxu0 0
    %1121 = vmatprep.mubr.bf16.mxu0 0
    %1122 = vmatmul.mubr.bf16.gmra.mxu0 %v1002
    %v1123 = vpop.f32.mrf.mxu0
    %v1124 = vadd.f32 %v1039, %v1123
    %v1125 = vpop.f32.mrf.mxu0
    %v1126 = vpop.f32.mrf.mxu0
    %v1127 = vadd.f32 %v1039, %v1126
    %v1128 = vpop.f32.mrf.mxu0
    %1129 = vmatprep.mubr.bf16.mxu0 0
    %1130 = vmatmul.mubr.bf16.gmra.mxu0 %v1003
    %v1131 = vpop.f32.mrf.mxu0
    %v1132 = vadd.f32 %v1039, %v1131
    %v1133 = vpop.f32.mrf.mxu0
    %v1134 = vpop.f32.mrf.mxu0
    %v1135 = vadd.f32 %v1039, %v1134
    %v1136 = vpop.f32.mrf.mxu0
    %1137 = vmatprep.mubr.bf16.mxu0 0
    %1138 = vmatmul.mubr.bf16.gmra.mxu0 %v1004
    %v1139 = vpop.f32.mrf.mxu0
    %v1140 = vadd.f32 %v1039, %v1139
    %v1141 = vpop.f32.mrf.mxu0
    %v1142 = vpop.f32.mrf.mxu0
    %v1143 = vadd.f32 %v1039, %v1142
    %v1144 = vpop.f32.mrf.mxu0
    %1145 = vmatprep.mubr.bf16.mxu0 0
    %1146 = vmatmul.mubr.bf16.gmra.mxu0 %v1005
    %v1147 = vpop.f32.mrf.mxu0
    %v1148 = vadd.f32 %v1039, %v1147
    %v1149 = vpop.f32.mrf.mxu0
    %v1150 = vpop.f32.mrf.mxu0
    %v1151 = vadd.f32 %v1039, %v1150
    %v1152 = vpop.f32.mrf.mxu0
    %1153 = vmatprep.mubr.bf16.mxu0 0
    %1154 = vmatmul.mubr.bf16.gmra.mxu0 %v1006
    %v1155 = vpop.f32.mrf.mxu0
    %v1156 = vadd.f32 %v1039, %v1155
    %v1157 = vpop.f32.mrf.mxu0
    %v1158 = vpop.f32.mrf.mxu0
    %v1159 = vadd.f32 %v1039, %v1158
    %v1160 = vpop.f32.mrf.mxu0
    %1161 = vmatprep.mubr.bf16.mxu0 0
    %1162 = vmatmul.mubr.bf16.gmra.mxu0 %v1007
    %v1163 = vpop.f32.mrf.mxu0
    %v1164 = vadd.f32 %v1039, %v1163
    %v1165 = vpop.f32.mrf.mxu0
    %v1166 = vpop.f32.mrf.mxu0
    %v1167 = vadd.f32 %v1039, %v1166
    %v1168 = vpop.f32.mrf.mxu0
    %1169 = vmatprep.mubr.bf16.mxu0 0
    %1170 = vmatmul.mubr.bf16.gmra.mxu0 %v1008
    %v1171 = vpop.f32.mrf.mxu0
    %v1172 = vadd.f32 %v1039, %v1171
    %v1173 = vpop.f32.mrf.mxu0
    %v1174 = vpop.f32.mrf.mxu0
    %v1175 = vadd.f32 %v1039, %v1174
    %v1176 = vpop.f32.mrf.mxu0
    %1177 = vmatprep.mubr.bf16.mxu0 0
    %1178 = vmatmul.mubr.bf16.gmra.mxu0 %v1009
    %v1179 = vpop.f32.mrf.mxu0
    %v1180 = vadd.f32 %v1039, %v1179
    %v1181 = vpop.f32.mrf.mxu0
    %v1182 = vpop.f32.mrf.mxu0
    %v1183 = vadd.f32 %v1039, %v1182
    %v1184 = vpop.f32.mrf.mxu0
    %1185 = vmatprep.mubr.bf16.mxu0 0
    %1186 = vmatmul.mubr.bf16.gmra.mxu0 %v1010
    %v1187 = vpop.f32.mrf.mxu0
    %v1188 = vadd.f32 %v1039, %v1187
    %v1189 = vpop.f32.mrf.mxu0
    %v1190 = vpop.f32.mrf.mxu0
    %v1191 = vadd.f32 %v1039, %v1190
    %v1192 = vpop.f32.mrf.mxu0
    %1193 = vmatprep.mubr.bf16.mxu0 0
    %1194 = vmatmul.mubr.bf16.gmra.mxu0 %v1011
    %v1195 = vpop.f32.mrf.mxu0
    %v1196 = vadd.f32 %v1039, %v1195
    %v1197 = vpop.f32.mrf.mxu0
    %v1198 = vpop.f32.mrf.mxu0
    %v1199 = vadd.f32 %v1039, %v1198
    %v1200 = vpop.f32.mrf.mxu0
    %1201 = vmatprep.mubr.bf16.mxu0 0
    %1202 = vmatmul.mubr.bf16.gmra.mxu0 %v1012
    %v1203 = vpop.f32.mrf.mxu0
    %v1204 = vadd.f32 %v1039, %v1203
    %v1205 = vpop.f32.mrf.mxu0
    %v1206 = vpop.f32.mrf.mxu0
    %v1207 = vadd.f32 %v1039, %v1206
    %v1208 = vpop.f32.mrf.mxu0
    %1209 = vmatprep.mubr.bf16.mxu0 0
    %1210 = vmatmul.mubr.bf16.gmra.mxu0 %v1013
    %v1211 = vpop.f32.mrf.mxu0
    %v1212 = vadd.f32 %v1039, %v1211
    %v1213 = vpop.f32.mrf.mxu0
    %v1214 = vpop.f32.mrf.mxu0
    %v1215 = vadd.f32 %v1039, %v1214
    %v1216 = vpop.f32.mrf.mxu0
    %1217 = vmatprep.mubr.bf16.mxu0 0
    %1218 = vmatmul.mubr.bf16.gmra.mxu0 %v1014
    %v1219 = vpop.f32.mrf.mxu0
    %v1220 = vadd.f32 %v1039, %v1219
    %v1221 = vpop.f32.mrf.mxu0
    %v1222 = vpop.f32.mrf.mxu0
    %v1223 = vadd.f32 %v1039, %v1222
    %v1224 = vpop.f32.mrf.mxu0
    %1225 = vmatprep.mubr.bf16.mxu0 0
    %1226 = vmatmul.mubr.bf16.gmra.mxu0 %v1015
    %v1227 = vpop.f32.mrf.mxu0
    %v1228 = vadd.f32 %v1039, %v1227
    %v1229 = vpop.f32.mrf.mxu0
    %v1230 = vpop.f32.mrf.mxu0
    %v1231 = vadd.f32 %v1039, %v1230
    %v1232 = vpop.f32.mrf.mxu0
    %1233 = vmatprep.mubr.bf16.mxu0 0
    %1234 = vmatmul.mubr.bf16.gmra.mxu0 %v1016
    %v1235 = vpop.f32.mrf.mxu0
    %v1236 = vadd.f32 %v1039, %v1235
    %v1237 = vpop.f32.mrf.mxu0
    %v1238 = vpop.f32.mrf.mxu0
    %v1239 = vadd.f32 %v1039, %v1238
    %v1240 = vpop.f32.mrf.mxu0
    %1241 = vmatprep.mubr.bf16.mxu0 0
    %1242 = vmatmul.mubr.bf16.gmra.mxu0 %v1017
    %v1243 = vpop.f32.mrf.mxu0
    %v1244 = vadd.f32 %v1039, %v1243
    %v1245 = vpop.f32.mrf.mxu0
    %v1246 = vpop.f32.mrf.mxu0
    %v1247 = vadd.f32 %v1039, %v1246
    %v1248 = vpop.f32.mrf.mxu0
    %1249 = vdwg.mxu0
    %vm1250 = vcmp.ge.f32.partialorder %v1124, 0.0
    %vm1251 = vcmp.ge.f32.partialorder %v1127, 0.0
    %vm1252 = vcmp.ge.f32.partialorder %v1132, 0.0
    %vm1253 = vcmp.ge.f32.partialorder %v1135, 0.0
    %vm1254 = vcmp.ge.f32.partialorder %v1140, 0.0
    %vm1255 = vcmp.ge.f32.partialorder %v1143, 0.0
    %vm1256 = vcmp.ge.f32.partialorder %v1148, 0.0
    %vm1257 = vcmp.ge.f32.partialorder %v1151, 0.0
    %vm1258 = vcmp.ge.f32.partialorder %v1156, 0.0
    %vm1259 = vcmp.ge.f32.partialorder %v1159, 0.0
    %vm1260 = vcmp.ge.f32.partialorder %v1164, 0.0
    %vm1261 = vcmp.ge.f32.partialorder %v1167, 0.0
    %vm1262 = vcmp.ge.f32.partialorder %v1172, 0.0
    %vm1263 = vcmp.ge.f32.partialorder %v1175, 0.0
    %vm1264 = vcmp.ge.f32.partialorder %v1180, 0.0
    %vm1265 = vcmp.ge.f32.partialorder %v1183, 0.0
    %vm1266 = vcmp.ge.f32.partialorder %v1188, 0.0
    %vm1267 = vcmp.ge.f32.partialorder %v1191, 0.0
    %vm1268 = vcmp.ge.f32.partialorder %v1196, 0.0
    %vm1269 = vcmp.ge.f32.partialorder %v1199, 0.0
    %vm1270 = vcmp.ge.f32.partialorder %v1204, 0.0
    %vm1271 = vcmp.ge.f32.partialorder %v1207, 0.0
    %vm1272 = vcmp.ge.f32.partialorder %v1212, 0.0
    %vm1273 = vcmp.ge.f32.partialorder %v1215, 0.0
    %vm1274 = vcmp.ge.f32.partialorder %v1220, 0.0
    %vm1275 = vcmp.ge.f32.partialorder %v1223, 0.0
    %vm1276 = vcmp.ge.f32.partialorder %v1228, 0.0
    %vm1277 = vcmp.ge.f32.partialorder %v1231, 0.0
    %vm1278 = vcmp.ge.f32.partialorder %v1236, 0.0
    %vm1279 = vcmp.ge.f32.partialorder %v1239, 0.0
    %vm1280 = vcmp.ge.f32.partialorder %v1244, 0.0
    %vm1281 = vcmp.ge.f32.partialorder %v1247, 0.0
    %v1282 = vmul.f32 %v1124, 0.2
    %v1283 = vmul.f32 %v1127, 0.2
    %v1284 = vmul.f32 %v1132, 0.2
    %v1285 = vmul.f32 %v1135, 0.2
    %v1286 = vmul.f32 %v1140, 0.2
    %v1287 = vmul.f32 %v1143, 0.2
    %v1288 = vmul.f32 %v1148, 0.2
    %v1289 = vmul.f32 %v1151, 0.2
    %v1290 = vmul.f32 %v1156, 0.2
    %v1291 = vmul.f32 %v1159, 0.2
    %v1292 = vmul.f32 %v1164, 0.2
    %v1293 = vmul.f32 %v1167, 0.2
    %v1294 = vmul.f32 %v1172, 0.2
    %v1295 = vmul.f32 %v1175, 0.2
    %v1296 = vmul.f32 %v1180, 0.2
    %v1297 = vmul.f32 %v1183, 0.2
    %v1298 = vmul.f32 %v1188, 0.2
    %v1299 = vmul.f32 %v1191, 0.2
    %v1300 = vmul.f32 %v1196, 0.2
    %v1301 = vmul.f32 %v1199, 0.2
    %v1302 = vmul.f32 %v1204, 0.2
    %v1303 = vmul.f32 %v1207, 0.2
    %v1304 = vmul.f32 %v1212, 0.2
    %v1305 = vmul.f32 %v1215, 0.2
    %v1306 = vmul.f32 %v1220, 0.2
    %v1307 = vmul.f32 %v1223, 0.2
    %v1308 = vmul.f32 %v1228, 0.2
    %v1309 = vmul.f32 %v1231, 0.2
    %v1310 = vmul.f32 %v1236, 0.2
    %v1311 = vmul.f32 %v1239, 0.2
    %v1312 = vmul.f32 %v1244, 0.2
    %v1313 = vmul.f32 %v1247, 0.2
    %v1314 = vsel %vm1250, %v1124, %v1282
    %v1315 = vsel %vm1251, %v1127, %v1283
    %v1316 = vsel %vm1252, %v1132, %v1284
    %v1317 = vsel %vm1253, %v1135, %v1285
    %v1318 = vsel %vm1254, %v1140, %v1286
    %v1319 = vsel %vm1255, %v1143, %v1287
    %v1320 = vsel %vm1256, %v1148, %v1288
    %v1321 = vsel %vm1257, %v1151, %v1289
    %v1322 = vsel %vm1258, %v1156, %v1290
    %v1323 = vsel %vm1259, %v1159, %v1291
    %v1324 = vsel %vm1260, %v1164, %v1292
    %v1325 = vsel %vm1261, %v1167, %v1293
    %v1326 = vsel %vm1262, %v1172, %v1294
    %v1327 = vsel %vm1263, %v1175, %v1295
    %v1328 = vsel %vm1264, %v1180, %v1296
    %v1329 = vsel %vm1265, %v1183, %v1297
    %v1330 = vsel %vm1266, %v1188, %v1298
    %v1331 = vsel %vm1267, %v1191, %v1299
    %v1332 = vsel %vm1268, %v1196, %v1300
    %v1333 = vsel %vm1269, %v1199, %v1301
    %v1334 = vsel %vm1270, %v1204, %v1302
    %v1335 = vsel %vm1271, %v1207, %v1303
    %v1336 = vsel %vm1272, %v1212, %v1304
    %v1337 = vsel %vm1273, %v1215, %v1305
    %v1338 = vsel %vm1274, %v1220, %v1306
    %v1339 = vsel %vm1275, %v1223, %v1307
    %v1340 = vsel %vm1276, %v1228, %v1308
    %v1341 = vsel %vm1277, %v1231, %v1309
    %v1342 = vsel %vm1278, %v1236, %v1310
    %v1343 = vsel %vm1279, %v1239, %v1311
    %v1344 = vsel %vm1280, %v1244, %v1312
    %v1345 = vsel %vm1281, %v1247, %v1313
    %v1346 = vld [vmem:[%s7] sm:$0x1]
    %v1348 = vlaneseq
    %v1349 = vshrl.u32 %v1348, 7
    %v1350 = vsub.s32 0, %v1349
    %v1351 = vrot.slane %v1346, %v1350
    %v1353 = vmul.f32 %v1314, %v1351
    %v1354 = vmul.f32 %v1315, %v1351
    %v1355 = vmul.f32 %v1316, %v1351
    %v1356 = vmul.f32 %v1317, %v1351
    %v1357 = vmul.f32 %v1318, %v1351
    %v1358 = vmul.f32 %v1319, %v1351
    %v1359 = vmul.f32 %v1320, %v1351
    %v1360 = vmul.f32 %v1321, %v1351
    %v1361 = vmul.f32 %v1322, %v1351
    %v1362 = vmul.f32 %v1323, %v1351
    %v1363 = vmul.f32 %v1324, %v1351
    %v1364 = vmul.f32 %v1325, %v1351
    %v1365 = vmul.f32 %v1326, %v1351
    %v1366 = vmul.f32 %v1327, %v1351
    %v1367 = vmul.f32 %v1328, %v1351
    %v1368 = vmul.f32 %v1329, %v1351
    %v1369 = vmul.f32 %v1330, %v1351
    %v1370 = vmul.f32 %v1331, %v1351
    %v1371 = vmul.f32 %v1332, %v1351
    %v1372 = vmul.f32 %v1333, %v1351
    %v1373 = vmul.f32 %v1334, %v1351
    %v1374 = vmul.f32 %v1335, %v1351
    %v1375 = vmul.f32 %v1336, %v1351
    %v1376 = vmul.f32 %v1337, %v1351
    %v1377 = vmul.f32 %v1338, %v1351
    %v1378 = vmul.f32 %v1339, %v1351
    %v1379 = vmul.f32 %v1340, %v1351
    %v1380 = vmul.f32 %v1341, %v1351
    %v1381 = vmul.f32 %v1342, %v1351
    %v1382 = vmul.f32 %v1343, %v1351
    %v1383 = vmul.f32 %v1344, %v1351
    %v1384 = vmul.f32 %v1345, %v1351
    %v1385 = vsel %vm144, %v1353, 0.0
    %1386 = vadd.xlane.f32.xlu0 %v1385
    %v1387 = vpop.xlane.xlu0 %1386
    %v1388 = vsel %vm144, %v1354, 0.0
    %1389 = vadd.xlane.f32.xlu0 %v1388
    %v1390 = vpop.xlane.xlu0 %1389
    %v1391 = vsel %vm144, %v1355, 0.0
    %1392 = vadd.xlane.f32.xlu0 %v1391
    %v1393 = vpop.xlane.xlu0 %1392
    %v1394 = vsel %vm144, %v1356, 0.0
    %1395 = vadd.xlane.f32.xlu0 %v1394
    %v1396 = vpop.xlane.xlu0 %1395
    %v1397 = vsel %vm144, %v1357, 0.0
    %1398 = vadd.xlane.f32.xlu0 %v1397
    %v1399 = vpop.xlane.xlu0 %1398
    %v1400 = vsel %vm144, %v1358, 0.0
    %1401 = vadd.xlane.f32.xlu0 %v1400
    %v1402 = vpop.xlane.xlu0 %1401
    %v1403 = vsel %vm144, %v1359, 0.0
    %1404 = vadd.xlane.f32.xlu0 %v1403
    %v1405 = vpop.xlane.xlu0 %1404
    %v1406 = vsel %vm144, %v1360, 0.0
    %1407 = vadd.xlane.f32.xlu0 %v1406
    %v1408 = vpop.xlane.xlu0 %1407
    %v1409 = vsel %vm144, %v1361, 0.0
    %1410 = vadd.xlane.f32.xlu0 %v1409
    %v1411 = vpop.xlane.xlu0 %1410
    %v1412 = vsel %vm144, %v1362, 0.0
    %1413 = vadd.xlane.f32.xlu0 %v1412
    %v1414 = vpop.xlane.xlu0 %1413
    %v1415 = vsel %vm144, %v1363, 0.0
    %1416 = vadd.xlane.f32.xlu0 %v1415
    %v1417 = vpop.xlane.xlu0 %1416
    %v1418 = vsel %vm144, %v1364, 0.0
    %1419 = vadd.xlane.f32.xlu0 %v1418
    %v1420 = vpop.xlane.xlu0 %1419
    %v1421 = vsel %vm144, %v1365, 0.0
    %1422 = vadd.xlane.f32.xlu0 %v1421
    %v1423 = vpop.xlane.xlu0 %1422
    %v1424 = vsel %vm144, %v1366, 0.0
    %1425 = vadd.xlane.f32.xlu0 %v1424
    %v1426 = vpop.xlane.xlu0 %1425
    %v1427 = vsel %vm144, %v1367, 0.0
    %1428 = vadd.xlane.f32.xlu0 %v1427
    %v1429 = vpop.xlane.xlu0 %1428
    %v1430 = vsel %vm144, %v1368, 0.0
    %1431 = vadd.xlane.f32.xlu0 %v1430
    %v1432 = vpop.xlane.xlu0 %1431
    %v1433 = vsel %vm144, %v1369, 0.0
    %1434 = vadd.xlane.f32.xlu0 %v1433
    %v1435 = vpop.xlane.xlu0 %1434
    %v1436 = vsel %vm144, %v1370, 0.0
    %1437 = vadd.xlane.f32.xlu0 %v1436
    %v1438 = vpop.xlane.xlu0 %1437
    %v1439 = vsel %vm144, %v1371, 0.0
    %1440 = vadd.xlane.f32.xlu0 %v1439
    %v1441 = vpop.xlane.xlu0 %1440
    %v1442 = vsel %vm144, %v1372, 0.0
    %1443 = vadd.xlane.f32.xlu0 %v1442
    %v1444 = vpop.xlane.xlu0 %1443
    %v1445 = vsel %vm144, %v1373, 0.0
    %1446 = vadd.xlane.f32.xlu0 %v1445
    %v1447 = vpop.xlane.xlu0 %1446
    %v1448 = vsel %vm144, %v1374, 0.0
    %1449 = vadd.xlane.f32.xlu0 %v1448
    %v1450 = vpop.xlane.xlu0 %1449
    %v1451 = vsel %vm144, %v1375, 0.0
    %1452 = vadd.xlane.f32.xlu0 %v1451
    %v1453 = vpop.xlane.xlu0 %1452
    %v1454 = vsel %vm144, %v1376, 0.0
    %1455 = vadd.xlane.f32.xlu0 %v1454
    %v1456 = vpop.xlane.xlu0 %1455
    %v1457 = vsel %vm144, %v1377, 0.0
    %1458 = vadd.xlane.f32.xlu0 %v1457
    %v1459 = vpop.xlane.xlu0 %1458
    %v1460 = vsel %vm144, %v1378, 0.0
    %1461 = vadd.xlane.f32.xlu0 %v1460
    %v1462 = vpop.xlane.xlu0 %1461
    %v1463 = vsel %vm144, %v1379, 0.0
    %1464 = vadd.xlane.f32.xlu0 %v1463
    %v1465 = vpop.xlane.xlu0 %1464
    %v1466 = vsel %vm144, %v1380, 0.0
    %1467 = vadd.xlane.f32.xlu0 %v1466
    %v1468 = vpop.xlane.xlu0 %1467
    %v1469 = vsel %vm144, %v1381, 0.0
    %1470 = vadd.xlane.f32.xlu0 %v1469
    %v1471 = vpop.xlane.xlu0 %1470
    %v1472 = vsel %vm144, %v1382, 0.0
    %1473 = vadd.xlane.f32.xlu0 %v1472
    %v1474 = vpop.xlane.xlu0 %1473
    %v1475 = vsel %vm144, %v1383, 0.0
    %1476 = vadd.xlane.f32.xlu0 %v1475
    %v1477 = vpop.xlane.xlu0 %1476
    %v1478 = vsel %vm144, %v1384, 0.0
    %1479 = vadd.xlane.f32.xlu0 %v1478
    %v1480 = vpop.xlane.xlu0 %1479
    %v1481 = vld [vmem:[#allocation2] sm:$0x1]
    %1483 = vset.pattern.permute.xlu0 0
    %1484 = vperm.xlu0 %1483, %v1481
    %v1485 = vpop.permute.xlu0 %1484
    %v1487 = vlaneseq
    %v1488 = vshrl.u32 %v1487, 7
    %v1489 = vsub.s32 0, %v1488
    %v1490 = vrot.slane %v1485, %v1489
    %v1491 = vadd.f32 %v1387, %v1490
    %v1492 = vadd.f32 %v1390, %v1490
    %v1493 = vadd.f32 %v1393, %v1490
    %v1494 = vadd.f32 %v1396, %v1490
    %v1495 = vadd.f32 %v1399, %v1490
    %v1496 = vadd.f32 %v1402, %v1490
    %v1497 = vadd.f32 %v1405, %v1490
    %v1498 = vadd.f32 %v1408, %v1490
    %v1499 = vadd.f32 %v1411, %v1490
    %v1500 = vadd.f32 %v1414, %v1490
    %v1501 = vadd.f32 %v1417, %v1490
    %v1502 = vadd.f32 %v1420, %v1490
    %v1503 = vadd.f32 %v1423, %v1490
    %v1504 = vadd.f32 %v1426, %v1490
    %v1505 = vadd.f32 %v1429, %v1490
    %v1506 = vadd.f32 %v1432, %v1490
    %v1507 = vadd.f32 %v1435, %v1490
    %v1508 = vadd.f32 %v1438, %v1490
    %v1509 = vadd.f32 %v1441, %v1490
    %v1510 = vadd.f32 %v1444, %v1490
    %v1511 = vadd.f32 %v1447, %v1490
    %v1512 = vadd.f32 %v1450, %v1490
    %v1513 = vadd.f32 %v1453, %v1490
    %v1514 = vadd.f32 %v1456, %v1490
    %v1515 = vadd.f32 %v1459, %v1490
    %v1516 = vadd.f32 %v1462, %v1490
    %v1517 = vadd.f32 %v1465, %v1490
    %v1518 = vadd.f32 %v1468, %v1490
    %v1519 = vadd.f32 %v1471, %v1490
    %v1520 = vadd.f32 %v1474, %v1490
    %v1521 = vadd.f32 %v1477, %v1490
    %v1522 = vadd.f32 %v1480, %v1490
    %v1523 = vsub.f32 0.0, %v1491
    %v1524 = vsub.f32 0.0, %v1492
    %v1525 = vsub.f32 0.0, %v1493
    %v1526 = vsub.f32 0.0, %v1494
    %v1527 = vsub.f32 0.0, %v1495
    %v1528 = vsub.f32 0.0, %v1496
    %v1529 = vsub.f32 0.0, %v1497
    %v1530 = vsub.f32 0.0, %v1498
    %v1531 = vsub.f32 0.0, %v1499
    %v1532 = vsub.f32 0.0, %v1500
    %v1533 = vsub.f32 0.0, %v1501
    %v1534 = vsub.f32 0.0, %v1502
    %v1535 = vsub.f32 0.0, %v1503
    %v1536 = vsub.f32 0.0, %v1504
    %v1537 = vsub.f32 0.0, %v1505
    %v1538 = vsub.f32 0.0, %v1506
    %v1539 = vsub.f32 0.0, %v1507
    %v1540 = vsub.f32 0.0, %v1508
    %v1541 = vsub.f32 0.0, %v1509
    %v1542 = vsub.f32 0.0, %v1510
    %v1543 = vsub.f32 0.0, %v1511
    %v1544 = vsub.f32 0.0, %v1512
    %v1545 = vsub.f32 0.0, %v1513
    %v1546 = vsub.f32 0.0, %v1514
    %v1547 = vsub.f32 0.0, %v1515
    %v1548 = vsub.f32 0.0, %v1516
    %v1549 = vsub.f32 0.0, %v1517
    %v1550 = vsub.f32 0.0, %v1518
    %v1551 = vsub.f32 0.0, %v1519
    %v1552 = vsub.f32 0.0, %v1520
    %v1553 = vsub.f32 0.0, %v1521
    %v1554 = vsub.f32 0.0, %v1522
    %v1555 = vmul.f32 %v1523, 1.442695
    %v1556 = vpow.pop %v1555
    %v1557 = vmul.f32 %v1524, 1.442695
    %v1558 = vpow.pop %v1557
    %v1559 = vmul.f32 %v1525, 1.442695
    %v1560 = vpow.pop %v1559
    %v1561 = vmul.f32 %v1526, 1.442695
    %v1562 = vpow.pop %v1561
    %v1563 = vmul.f32 %v1527, 1.442695
    %v1564 = vpow.pop %v1563
    %v1565 = vmul.f32 %v1528, 1.442695
    %v1566 = vpow.pop %v1565
    %v1567 = vmul.f32 %v1529, 1.442695
    %v1568 = vpow.pop %v1567
    %v1569 = vmul.f32 %v1530, 1.442695
    %v1570 = vpow.pop %v1569
    %v1571 = vmul.f32 %v1531, 1.442695
    %v1572 = vpow.pop %v1571
    %v1573 = vmul.f32 %v1532, 1.442695
    %v1574 = vpow.pop %v1573
    %v1575 = vmul.f32 %v1533, 1.442695
    %v1576 = vpow.pop %v1575
    %v1577 = vmul.f32 %v1534, 1.442695
    %v1578 = vpow.pop %v1577
    %v1579 = vmul.f32 %v1535, 1.442695
    %v1580 = vpow.pop %v1579
    %v1581 = vmul.f32 %v1536, 1.442695
    %v1582 = vpow.pop %v1581
    %v1583 = vmul.f32 %v1537, 1.442695
    %v1584 = vpow.pop %v1583
    %v1585 = vmul.f32 %v1538, 1.442695
    %v1586 = vpow.pop %v1585
    %v1587 = vmul.f32 %v1539, 1.442695
    %v1588 = vpow.pop %v1587
    %v1589 = vmul.f32 %v1540, 1.442695
    %v1590 = vpow.pop %v1589
    %v1591 = vmul.f32 %v1541, 1.442695
    %v1592 = vpow.pop %v1591
    %v1593 = vmul.f32 %v1542, 1.442695
    %v1594 = vpow.pop %v1593
    %v1595 = vmul.f32 %v1543, 1.442695
    %v1596 = vpow.pop %v1595
    %v1597 = vmul.f32 %v1544, 1.442695
    %v1598 = vpow.pop %v1597
    %v1599 = vmul.f32 %v1545, 1.442695
    %v1600 = vpow.pop %v1599
    %v1601 = vmul.f32 %v1546, 1.442695
    %v1602 = vpow.pop %v1601
    %v1603 = vmul.f32 %v1547, 1.442695
    %v1604 = vpow.pop %v1603
    %v1605 = vmul.f32 %v1548, 1.442695
    %v1606 = vpow.pop %v1605
    %v1607 = vmul.f32 %v1549, 1.442695
    %v1608 = vpow.pop %v1607
    %v1609 = vmul.f32 %v1550, 1.442695
    %v1610 = vpow.pop %v1609
    %v1611 = vmul.f32 %v1551, 1.442695
    %v1612 = vpow.pop %v1611
    %v1613 = vmul.f32 %v1552, 1.442695
    %v1614 = vpow.pop %v1613
    %v1615 = vmul.f32 %v1553, 1.442695
    %v1616 = vpow.pop %v1615
    %v1617 = vmul.f32 %v1554, 1.442695
    %v1618 = vpow.pop %v1617
    %v1619 = vadd.f32 %v1556, 1.0
    %v1620 = vadd.f32 %v1558, 1.0
    %v1621 = vadd.f32 %v1560, 1.0
    %v1622 = vadd.f32 %v1562, 1.0
    %v1623 = vadd.f32 %v1564, 1.0
    %v1624 = vadd.f32 %v1566, 1.0
    %v1625 = vadd.f32 %v1568, 1.0
    %v1626 = vadd.f32 %v1570, 1.0
    %v1627 = vadd.f32 %v1572, 1.0
    %v1628 = vadd.f32 %v1574, 1.0
    %v1629 = vadd.f32 %v1576, 1.0
    %v1630 = vadd.f32 %v1578, 1.0
    %v1631 = vadd.f32 %v1580, 1.0
    %v1632 = vadd.f32 %v1582, 1.0
    %v1633 = vadd.f32 %v1584, 1.0
    %v1634 = vadd.f32 %v1586, 1.0
    %v1635 = vadd.f32 %v1588, 1.0
    %v1636 = vadd.f32 %v1590, 1.0
    %v1637 = vadd.f32 %v1592, 1.0
    %v1638 = vadd.f32 %v1594, 1.0
    %v1639 = vadd.f32 %v1596, 1.0
    %v1640 = vadd.f32 %v1598, 1.0
    %v1641 = vadd.f32 %v1600, 1.0
    %v1642 = vadd.f32 %v1602, 1.0
    %v1643 = vadd.f32 %v1604, 1.0
    %v1644 = vadd.f32 %v1606, 1.0
    %v1645 = vadd.f32 %v1608, 1.0
    %v1646 = vadd.f32 %v1610, 1.0
    %v1647 = vadd.f32 %v1612, 1.0
    %v1648 = vadd.f32 %v1614, 1.0
    %v1649 = vadd.f32 %v1616, 1.0
    %v1650 = vadd.f32 %v1618, 1.0
    %v1651 = vrcp.pop %v1619
    %v1652 = vrcp.pop %v1620
    %v1653 = vrcp.pop %v1621
    %v1654 = vrcp.pop %v1622
    %v1655 = vrcp.pop %v1623
    %v1656 = vrcp.pop %v1624
    %v1657 = vrcp.pop %v1625
    %v1658 = vrcp.pop %v1626
    %v1659 = vrcp.pop %v1627
    %v1660 = vrcp.pop %v1628
    %v1661 = vrcp.pop %v1629
    %v1662 = vrcp.pop %v1630
    %v1663 = vrcp.pop %v1631
    %v1664 = vrcp.pop %v1632
    %v1665 = vrcp.pop %v1633
    %v1666 = vrcp.pop %v1634
    %v1667 = vrcp.pop %v1635
    %v1668 = vrcp.pop %v1636
    %v1669 = vrcp.pop %v1637
    %v1670 = vrcp.pop %v1638
    %v1671 = vrcp.pop %v1639
    %v1672 = vrcp.pop %v1640
    %v1673 = vrcp.pop %v1641
    %v1674 = vrcp.pop %v1642
    %v1675 = vrcp.pop %v1643
    %v1676 = vrcp.pop %v1644
    %v1677 = vrcp.pop %v1645
    %v1678 = vrcp.pop %v1646
    %v1679 = vrcp.pop %v1647
    %v1680 = vrcp.pop %v1648
    %v1681 = vrcp.pop %v1649
    %v1682 = vrcp.pop %v1650
    %v1715 = vlaneseq
    %v1716 = vshrl.u32 %v1715, 7
    %v1717 = vsub.s32 0, %v1716
    %v1718 = vrot.slane %v1651, %v1717
    %v1719 = vlaneseq
    %v1720 = vshrl.u32 %v1719, 7
    %v1721 = vsub.s32 1, %v1720
    %v1722 = vrot.slane %v1651, %v1721
    %v1723 = vlaneseq
    %v1724 = vshrl.u32 %v1723, 7
    %v1725 = vsub.s32 2, %v1724
    %v1726 = vrot.slane %v1651, %v1725
    %v1727 = vlaneseq
    %v1728 = vshrl.u32 %v1727, 7
    %v1729 = vsub.s32 3, %v1728
    %v1730 = vrot.slane %v1651, %v1729
    %v1731 = vlaneseq
    %v1732 = vshrl.u32 %v1731, 7
    %v1733 = vsub.s32 4, %v1732
    %v1734 = vrot.slane %v1651, %v1733
    %v1735 = vlaneseq
    %v1736 = vshrl.u32 %v1735, 7
    %v1737 = vsub.s32 5, %v1736
    %v1738 = vrot.slane %v1651, %v1737
    %v1739 = vlaneseq
    %v1740 = vshrl.u32 %v1739, 7
    %v1741 = vsub.s32 6, %v1740
    %v1742 = vrot.slane %v1651, %v1741
    %v1743 = vlaneseq
    %v1744 = vshrl.u32 %v1743, 7
    %v1745 = vsub.s32 7, %v1744
    %v1746 = vrot.slane %v1651, %v1745
    %v1747 = vlaneseq
    %v1748 = vshrl.u32 %v1747, 7
    %v1749 = vsub.s32 0, %v1748
    %v1750 = vrot.slane %v1652, %v1749
    %v1751 = vlaneseq
    %v1752 = vshrl.u32 %v1751, 7
    %v1753 = vsub.s32 1, %v1752
    %v1754 = vrot.slane %v1652, %v1753
    %v1755 = vlaneseq
    %v1756 = vshrl.u32 %v1755, 7
    %v1757 = vsub.s32 2, %v1756
    %v1758 = vrot.slane %v1652, %v1757
    %v1759 = vlaneseq
    %v1760 = vshrl.u32 %v1759, 7
    %v1761 = vsub.s32 3, %v1760
    %v1762 = vrot.slane %v1652, %v1761
    %v1763 = vlaneseq
    %v1764 = vshrl.u32 %v1763, 7
    %v1765 = vsub.s32 4, %v1764
    %v1766 = vrot.slane %v1652, %v1765
    %v1767 = vlaneseq
    %v1768 = vshrl.u32 %v1767, 7
    %v1769 = vsub.s32 5, %v1768
    %v1770 = vrot.slane %v1652, %v1769
    %v1771 = vlaneseq
    %v1772 = vshrl.u32 %v1771, 7
    %v1773 = vsub.s32 6, %v1772
    %v1774 = vrot.slane %v1652, %v1773
    %v1775 = vlaneseq
    %v1776 = vshrl.u32 %v1775, 7
    %v1777 = vsub.s32 7, %v1776
    %v1778 = vrot.slane %v1652, %v1777
    %v1779 = vlaneseq
    %v1780 = vshrl.u32 %v1779, 7
    %v1781 = vsub.s32 0, %v1780
    %v1782 = vrot.slane %v1653, %v1781
    %v1783 = vlaneseq
    %v1784 = vshrl.u32 %v1783, 7
    %v1785 = vsub.s32 1, %v1784
    %v1786 = vrot.slane %v1653, %v1785
    %v1787 = vlaneseq
    %v1788 = vshrl.u32 %v1787, 7
    %v1789 = vsub.s32 2, %v1788
    %v1790 = vrot.slane %v1653, %v1789
    %v1791 = vlaneseq
    %v1792 = vshrl.u32 %v1791, 7
    %v1793 = vsub.s32 3, %v1792
    %v1794 = vrot.slane %v1653, %v1793
    %v1795 = vlaneseq
    %v1796 = vshrl.u32 %v1795, 7
    %v1797 = vsub.s32 4, %v1796
    %v1798 = vrot.slane %v1653, %v1797
    %v1799 = vlaneseq
    %v1800 = vshrl.u32 %v1799, 7
    %v1801 = vsub.s32 5, %v1800
    %v1802 = vrot.slane %v1653, %v1801
    %v1803 = vlaneseq
    %v1804 = vshrl.u32 %v1803, 7
    %v1805 = vsub.s32 6, %v1804
    %v1806 = vrot.slane %v1653, %v1805
    %v1807 = vlaneseq
    %v1808 = vshrl.u32 %v1807, 7
    %v1809 = vsub.s32 7, %v1808
    %v1810 = vrot.slane %v1653, %v1809
    %v1811 = vlaneseq
    %v1812 = vshrl.u32 %v1811, 7
    %v1813 = vsub.s32 0, %v1812
    %v1814 = vrot.slane %v1654, %v1813
    %v1815 = vlaneseq
    %v1816 = vshrl.u32 %v1815, 7
    %v1817 = vsub.s32 1, %v1816
    %v1818 = vrot.slane %v1654, %v1817
    %v1819 = vlaneseq
    %v1820 = vshrl.u32 %v1819, 7
    %v1821 = vsub.s32 2, %v1820
    %v1822 = vrot.slane %v1654, %v1821
    %v1823 = vlaneseq
    %v1824 = vshrl.u32 %v1823, 7
    %v1825 = vsub.s32 3, %v1824
    %v1826 = vrot.slane %v1654, %v1825
    %v1827 = vlaneseq
    %v1828 = vshrl.u32 %v1827, 7
    %v1829 = vsub.s32 4, %v1828
    %v1830 = vrot.slane %v1654, %v1829
    %v1831 = vlaneseq
    %v1832 = vshrl.u32 %v1831, 7
    %v1833 = vsub.s32 5, %v1832
    %v1834 = vrot.slane %v1654, %v1833
    %v1835 = vlaneseq
    %v1836 = vshrl.u32 %v1835, 7
    %v1837 = vsub.s32 6, %v1836
    %v1838 = vrot.slane %v1654, %v1837
    %v1839 = vlaneseq
    %v1840 = vshrl.u32 %v1839, 7
    %v1841 = vsub.s32 7, %v1840
    %v1842 = vrot.slane %v1654, %v1841
    %v1843 = vlaneseq
    %v1844 = vshrl.u32 %v1843, 7
    %v1845 = vsub.s32 0, %v1844
    %v1846 = vrot.slane %v1655, %v1845
    %v1847 = vlaneseq
    %v1848 = vshrl.u32 %v1847, 7
    %v1849 = vsub.s32 1, %v1848
    %v1850 = vrot.slane %v1655, %v1849
    %v1851 = vlaneseq
    %v1852 = vshrl.u32 %v1851, 7
    %v1853 = vsub.s32 2, %v1852
    %v1854 = vrot.slane %v1655, %v1853
    %v1855 = vlaneseq
    %v1856 = vshrl.u32 %v1855, 7
    %v1857 = vsub.s32 3, %v1856
    %v1858 = vrot.slane %v1655, %v1857
    %v1859 = vlaneseq
    %v1860 = vshrl.u32 %v1859, 7
    %v1861 = vsub.s32 4, %v1860
    %v1862 = vrot.slane %v1655, %v1861
    %v1863 = vlaneseq
    %v1864 = vshrl.u32 %v1863, 7
    %v1865 = vsub.s32 5, %v1864
    %v1866 = vrot.slane %v1655, %v1865
    %v1867 = vlaneseq
    %v1868 = vshrl.u32 %v1867, 7
    %v1869 = vsub.s32 6, %v1868
    %v1870 = vrot.slane %v1655, %v1869
    %v1871 = vlaneseq
    %v1872 = vshrl.u32 %v1871, 7
    %v1873 = vsub.s32 7, %v1872
    %v1874 = vrot.slane %v1655, %v1873
    %v1875 = vlaneseq
    %v1876 = vshrl.u32 %v1875, 7
    %v1877 = vsub.s32 0, %v1876
    %v1878 = vrot.slane %v1656, %v1877
    %v1879 = vlaneseq
    %v1880 = vshrl.u32 %v1879, 7
    %v1881 = vsub.s32 1, %v1880
    %v1882 = vrot.slane %v1656, %v1881
    %v1883 = vlaneseq
    %v1884 = vshrl.u32 %v1883, 7
    %v1885 = vsub.s32 2, %v1884
    %v1886 = vrot.slane %v1656, %v1885
    %v1887 = vlaneseq
    %v1888 = vshrl.u32 %v1887, 7
    %v1889 = vsub.s32 3, %v1888
    %v1890 = vrot.slane %v1656, %v1889
    %v1891 = vlaneseq
    %v1892 = vshrl.u32 %v1891, 7
    %v1893 = vsub.s32 4, %v1892
    %v1894 = vrot.slane %v1656, %v1893
    %v1895 = vlaneseq
    %v1896 = vshrl.u32 %v1895, 7
    %v1897 = vsub.s32 5, %v1896
    %v1898 = vrot.slane %v1656, %v1897
    %v1899 = vlaneseq
    %v1900 = vshrl.u32 %v1899, 7
    %v1901 = vsub.s32 6, %v1900
    %v1902 = vrot.slane %v1656, %v1901
    %v1903 = vlaneseq
    %v1904 = vshrl.u32 %v1903, 7
    %v1905 = vsub.s32 7, %v1904
    %v1906 = vrot.slane %v1656, %v1905
    %v1907 = vlaneseq
    %v1908 = vshrl.u32 %v1907, 7
    %v1909 = vsub.s32 0, %v1908
    %v1910 = vrot.slane %v1657, %v1909
    %v1911 = vlaneseq
    %v1912 = vshrl.u32 %v1911, 7
    %v1913 = vsub.s32 1, %v1912
    %v1914 = vrot.slane %v1657, %v1913
    %v1915 = vlaneseq
    %v1916 = vshrl.u32 %v1915, 7
    %v1917 = vsub.s32 2, %v1916
    %v1918 = vrot.slane %v1657, %v1917
    %v1919 = vlaneseq
    %v1920 = vshrl.u32 %v1919, 7
    %v1921 = vsub.s32 3, %v1920
    %v1922 = vrot.slane %v1657, %v1921
    %v1923 = vlaneseq
    %v1924 = vshrl.u32 %v1923, 7
    %v1925 = vsub.s32 4, %v1924
    %v1926 = vrot.slane %v1657, %v1925
    %v1927 = vlaneseq
    %v1928 = vshrl.u32 %v1927, 7
    %v1929 = vsub.s32 5, %v1928
    %v1930 = vrot.slane %v1657, %v1929
    %v1931 = vlaneseq
    %v1932 = vshrl.u32 %v1931, 7
    %v1933 = vsub.s32 6, %v1932
    %v1934 = vrot.slane %v1657, %v1933
    %v1935 = vlaneseq
    %v1936 = vshrl.u32 %v1935, 7
    %v1937 = vsub.s32 7, %v1936
    %v1938 = vrot.slane %v1657, %v1937
    %v1939 = vlaneseq
    %v1940 = vshrl.u32 %v1939, 7
    %v1941 = vsub.s32 0, %v1940
    %v1942 = vrot.slane %v1658, %v1941
    %v1943 = vlaneseq
    %v1944 = vshrl.u32 %v1943, 7
    %v1945 = vsub.s32 1, %v1944
    %v1946 = vrot.slane %v1658, %v1945
    %v1947 = vlaneseq
    %v1948 = vshrl.u32 %v1947, 7
    %v1949 = vsub.s32 2, %v1948
    %v1950 = vrot.slane %v1658, %v1949
    %v1951 = vlaneseq
    %v1952 = vshrl.u32 %v1951, 7
    %v1953 = vsub.s32 3, %v1952
    %v1954 = vrot.slane %v1658, %v1953
    %v1955 = vlaneseq
    %v1956 = vshrl.u32 %v1955, 7
    %v1957 = vsub.s32 4, %v1956
    %v1958 = vrot.slane %v1658, %v1957
    %v1959 = vlaneseq
    %v1960 = vshrl.u32 %v1959, 7
    %v1961 = vsub.s32 5, %v1960
    %v1962 = vrot.slane %v1658, %v1961
    %v1963 = vlaneseq
    %v1964 = vshrl.u32 %v1963, 7
    %v1965 = vsub.s32 6, %v1964
    %v1966 = vrot.slane %v1658, %v1965
    %v1967 = vlaneseq
    %v1968 = vshrl.u32 %v1967, 7
    %v1969 = vsub.s32 7, %v1968
    %v1970 = vrot.slane %v1658, %v1969
    %v1971 = vlaneseq
    %v1972 = vshrl.u32 %v1971, 7
    %v1973 = vsub.s32 0, %v1972
    %v1974 = vrot.slane %v1659, %v1973
    %v1975 = vlaneseq
    %v1976 = vshrl.u32 %v1975, 7
    %v1977 = vsub.s32 1, %v1976
    %v1978 = vrot.slane %v1659, %v1977
    %v1979 = vlaneseq
    %v1980 = vshrl.u32 %v1979, 7
    %v1981 = vsub.s32 2, %v1980
    %v1982 = vrot.slane %v1659, %v1981
    %v1983 = vlaneseq
    %v1984 = vshrl.u32 %v1983, 7
    %v1985 = vsub.s32 3, %v1984
    %v1986 = vrot.slane %v1659, %v1985
    %v1987 = vlaneseq
    %v1988 = vshrl.u32 %v1987, 7
    %v1989 = vsub.s32 4, %v1988
    %v1990 = vrot.slane %v1659, %v1989
    %v1991 = vlaneseq
    %v1992 = vshrl.u32 %v1991, 7
    %v1993 = vsub.s32 5, %v1992
    %v1994 = vrot.slane %v1659, %v1993
    %v1995 = vlaneseq
    %v1996 = vshrl.u32 %v1995, 7
    %v1997 = vsub.s32 6, %v1996
    %v1998 = vrot.slane %v1659, %v1997
    %v1999 = vlaneseq
    %v2000 = vshrl.u32 %v1999, 7
    %v2001 = vsub.s32 7, %v2000
    %v2002 = vrot.slane %v1659, %v2001
    %v2003 = vlaneseq
    %v2004 = vshrl.u32 %v2003, 7
    %v2005 = vsub.s32 0, %v2004
    %v2006 = vrot.slane %v1660, %v2005
    %v2007 = vlaneseq
    %v2008 = vshrl.u32 %v2007, 7
    %v2009 = vsub.s32 1, %v2008
    %v2010 = vrot.slane %v1660, %v2009
    %v2011 = vlaneseq
    %v2012 = vshrl.u32 %v2011, 7
    %v2013 = vsub.s32 2, %v2012
    %v2014 = vrot.slane %v1660, %v2013
    %v2015 = vlaneseq
    %v2016 = vshrl.u32 %v2015, 7
    %v2017 = vsub.s32 3, %v2016
    %v2018 = vrot.slane %v1660, %v2017
    %v2019 = vlaneseq
    %v2020 = vshrl.u32 %v2019, 7
    %v2021 = vsub.s32 4, %v2020
    %v2022 = vrot.slane %v1660, %v2021
    %v2023 = vlaneseq
    %v2024 = vshrl.u32 %v2023, 7
    %v2025 = vsub.s32 5, %v2024
    %v2026 = vrot.slane %v1660, %v2025
    %v2027 = vlaneseq
    %v2028 = vshrl.u32 %v2027, 7
    %v2029 = vsub.s32 6, %v2028
    %v2030 = vrot.slane %v1660, %v2029
    %v2031 = vlaneseq
    %v2032 = vshrl.u32 %v2031, 7
    %v2033 = vsub.s32 7, %v2032
    %v2034 = vrot.slane %v1660, %v2033
    %v2035 = vlaneseq
    %v2036 = vshrl.u32 %v2035, 7
    %v2037 = vsub.s32 0, %v2036
    %v2038 = vrot.slane %v1661, %v2037
    %v2039 = vlaneseq
    %v2040 = vshrl.u32 %v2039, 7
    %v2041 = vsub.s32 1, %v2040
    %v2042 = vrot.slane %v1661, %v2041
    %v2043 = vlaneseq
    %v2044 = vshrl.u32 %v2043, 7
    %v2045 = vsub.s32 2, %v2044
    %v2046 = vrot.slane %v1661, %v2045
    %v2047 = vlaneseq
    %v2048 = vshrl.u32 %v2047, 7
    %v2049 = vsub.s32 3, %v2048
    %v2050 = vrot.slane %v1661, %v2049
    %v2051 = vlaneseq
    %v2052 = vshrl.u32 %v2051, 7
    %v2053 = vsub.s32 4, %v2052
    %v2054 = vrot.slane %v1661, %v2053
    %v2055 = vlaneseq
    %v2056 = vshrl.u32 %v2055, 7
    %v2057 = vsub.s32 5, %v2056
    %v2058 = vrot.slane %v1661, %v2057
    %v2059 = vlaneseq
    %v2060 = vshrl.u32 %v2059, 7
    %v2061 = vsub.s32 6, %v2060
    %v2062 = vrot.slane %v1661, %v2061
    %v2063 = vlaneseq
    %v2064 = vshrl.u32 %v2063, 7
    %v2065 = vsub.s32 7, %v2064
    %v2066 = vrot.slane %v1661, %v2065
    %v2067 = vlaneseq
    %v2068 = vshrl.u32 %v2067, 7
    %v2069 = vsub.s32 0, %v2068
    %v2070 = vrot.slane %v1662, %v2069
    %v2071 = vlaneseq
    %v2072 = vshrl.u32 %v2071, 7
    %v2073 = vsub.s32 1, %v2072
    %v2074 = vrot.slane %v1662, %v2073
    %v2075 = vlaneseq
    %v2076 = vshrl.u32 %v2075, 7
    %v2077 = vsub.s32 2, %v2076
    %v2078 = vrot.slane %v1662, %v2077
    %v2079 = vlaneseq
    %v2080 = vshrl.u32 %v2079, 7
    %v2081 = vsub.s32 3, %v2080
    %v2082 = vrot.slane %v1662, %v2081
    %v2083 = vlaneseq
    %v2084 = vshrl.u32 %v2083, 7
    %v2085 = vsub.s32 4, %v2084
    %v2086 = vrot.slane %v1662, %v2085
    %v2087 = vlaneseq
    %v2088 = vshrl.u32 %v2087, 7
    %v2089 = vsub.s32 5, %v2088
    %v2090 = vrot.slane %v1662, %v2089
    %v2091 = vlaneseq
    %v2092 = vshrl.u32 %v2091, 7
    %v2093 = vsub.s32 6, %v2092
    %v2094 = vrot.slane %v1662, %v2093
    %v2095 = vlaneseq
    %v2096 = vshrl.u32 %v2095, 7
    %v2097 = vsub.s32 7, %v2096
    %v2098 = vrot.slane %v1662, %v2097
    %v2099 = vlaneseq
    %v2100 = vshrl.u32 %v2099, 7
    %v2101 = vsub.s32 0, %v2100
    %v2102 = vrot.slane %v1663, %v2101
    %v2103 = vlaneseq
    %v2104 = vshrl.u32 %v2103, 7
    %v2105 = vsub.s32 1, %v2104
    %v2106 = vrot.slane %v1663, %v2105
    %v2107 = vlaneseq
    %v2108 = vshrl.u32 %v2107, 7
    %v2109 = vsub.s32 2, %v2108
    %v2110 = vrot.slane %v1663, %v2109
    %v2111 = vlaneseq
    %v2112 = vshrl.u32 %v2111, 7
    %v2113 = vsub.s32 3, %v2112
    %v2114 = vrot.slane %v1663, %v2113
    %v2115 = vlaneseq
    %v2116 = vshrl.u32 %v2115, 7
    %v2117 = vsub.s32 4, %v2116
    %v2118 = vrot.slane %v1663, %v2117
    %v2119 = vlaneseq
    %v2120 = vshrl.u32 %v2119, 7
    %v2121 = vsub.s32 5, %v2120
    %v2122 = vrot.slane %v1663, %v2121
    %v2123 = vlaneseq
    %v2124 = vshrl.u32 %v2123, 7
    %v2125 = vsub.s32 6, %v2124
    %v2126 = vrot.slane %v1663, %v2125
    %v2127 = vlaneseq
    %v2128 = vshrl.u32 %v2127, 7
    %v2129 = vsub.s32 7, %v2128
    %v2130 = vrot.slane %v1663, %v2129
    %v2131 = vlaneseq
    %v2132 = vshrl.u32 %v2131, 7
    %v2133 = vsub.s32 0, %v2132
    %v2134 = vrot.slane %v1664, %v2133
    %v2135 = vlaneseq
    %v2136 = vshrl.u32 %v2135, 7
    %v2137 = vsub.s32 1, %v2136
    %v2138 = vrot.slane %v1664, %v2137
    %v2139 = vlaneseq
    %v2140 = vshrl.u32 %v2139, 7
    %v2141 = vsub.s32 2, %v2140
    %v2142 = vrot.slane %v1664, %v2141
    %v2143 = vlaneseq
    %v2144 = vshrl.u32 %v2143, 7
    %v2145 = vsub.s32 3, %v2144
    %v2146 = vrot.slane %v1664, %v2145
    %v2147 = vlaneseq
    %v2148 = vshrl.u32 %v2147, 7
    %v2149 = vsub.s32 4, %v2148
    %v2150 = vrot.slane %v1664, %v2149
    %v2151 = vlaneseq
    %v2152 = vshrl.u32 %v2151, 7
    %v2153 = vsub.s32 5, %v2152
    %v2154 = vrot.slane %v1664, %v2153
    %v2155 = vlaneseq
    %v2156 = vshrl.u32 %v2155, 7
    %v2157 = vsub.s32 6, %v2156
    %v2158 = vrot.slane %v1664, %v2157
    %v2159 = vlaneseq
    %v2160 = vshrl.u32 %v2159, 7
    %v2161 = vsub.s32 7, %v2160
    %v2162 = vrot.slane %v1664, %v2161
    %v2163 = vlaneseq
    %v2164 = vshrl.u32 %v2163, 7
    %v2165 = vsub.s32 0, %v2164
    %v2166 = vrot.slane %v1665, %v2165
    %v2167 = vlaneseq
    %v2168 = vshrl.u32 %v2167, 7
    %v2169 = vsub.s32 1, %v2168
    %v2170 = vrot.slane %v1665, %v2169
    %v2171 = vlaneseq
    %v2172 = vshrl.u32 %v2171, 7
    %v2173 = vsub.s32 2, %v2172
    %v2174 = vrot.slane %v1665, %v2173
    %v2175 = vlaneseq
    %v2176 = vshrl.u32 %v2175, 7
    %v2177 = vsub.s32 3, %v2176
    %v2178 = vrot.slane %v1665, %v2177
    %v2179 = vlaneseq
    %v2180 = vshrl.u32 %v2179, 7
    %v2181 = vsub.s32 4, %v2180
    %v2182 = vrot.slane %v1665, %v2181
    %v2183 = vlaneseq
    %v2184 = vshrl.u32 %v2183, 7
    %v2185 = vsub.s32 5, %v2184
    %v2186 = vrot.slane %v1665, %v2185
    %v2187 = vlaneseq
    %v2188 = vshrl.u32 %v2187, 7
    %v2189 = vsub.s32 6, %v2188
    %v2190 = vrot.slane %v1665, %v2189
    %v2191 = vlaneseq
    %v2192 = vshrl.u32 %v2191, 7
    %v2193 = vsub.s32 7, %v2192
    %v2194 = vrot.slane %v1665, %v2193
    %v2195 = vlaneseq
    %v2196 = vshrl.u32 %v2195, 7
    %v2197 = vsub.s32 0, %v2196
    %v2198 = vrot.slane %v1666, %v2197
    %v2199 = vlaneseq
    %v2200 = vshrl.u32 %v2199, 7
    %v2201 = vsub.s32 1, %v2200
    %v2202 = vrot.slane %v1666, %v2201
    %v2203 = vlaneseq
    %v2204 = vshrl.u32 %v2203, 7
    %v2205 = vsub.s32 2, %v2204
    %v2206 = vrot.slane %v1666, %v2205
    %v2207 = vlaneseq
    %v2208 = vshrl.u32 %v2207, 7
    %v2209 = vsub.s32 3, %v2208
    %v2210 = vrot.slane %v1666, %v2209
    %v2211 = vlaneseq
    %v2212 = vshrl.u32 %v2211, 7
    %v2213 = vsub.s32 4, %v2212
    %v2214 = vrot.slane %v1666, %v2213
    %v2215 = vlaneseq
    %v2216 = vshrl.u32 %v2215, 7
    %v2217 = vsub.s32 5, %v2216
    %v2218 = vrot.slane %v1666, %v2217
    %v2219 = vlaneseq
    %v2220 = vshrl.u32 %v2219, 7
    %v2221 = vsub.s32 6, %v2220
    %v2222 = vrot.slane %v1666, %v2221
    %v2223 = vlaneseq
    %v2224 = vshrl.u32 %v2223, 7
    %v2225 = vsub.s32 7, %v2224
    %v2226 = vrot.slane %v1666, %v2225
    %v2227 = vlaneseq
    %v2228 = vshrl.u32 %v2227, 7
    %v2229 = vsub.s32 0, %v2228
    %v2230 = vrot.slane %v1667, %v2229
    %v2231 = vlaneseq
    %v2232 = vshrl.u32 %v2231, 7
    %v2233 = vsub.s32 1, %v2232
    %v2234 = vrot.slane %v1667, %v2233
    %v2235 = vlaneseq
    %v2236 = vshrl.u32 %v2235, 7
    %v2237 = vsub.s32 2, %v2236
    %v2238 = vrot.slane %v1667, %v2237
    %v2239 = vlaneseq
    %v2240 = vshrl.u32 %v2239, 7
    %v2241 = vsub.s32 3, %v2240
    %v2242 = vrot.slane %v1667, %v2241
    %v2243 = vlaneseq
    %v2244 = vshrl.u32 %v2243, 7
    %v2245 = vsub.s32 4, %v2244
    %v2246 = vrot.slane %v1667, %v2245
    %v2247 = vlaneseq
    %v2248 = vshrl.u32 %v2247, 7
    %v2249 = vsub.s32 5, %v2248
    %v2250 = vrot.slane %v1667, %v2249
    %v2251 = vlaneseq
    %v2252 = vshrl.u32 %v2251, 7
    %v2253 = vsub.s32 6, %v2252
    %v2254 = vrot.slane %v1667, %v2253
    %v2255 = vlaneseq
    %v2256 = vshrl.u32 %v2255, 7
    %v2257 = vsub.s32 7, %v2256
    %v2258 = vrot.slane %v1667, %v2257
    %v2259 = vlaneseq
    %v2260 = vshrl.u32 %v2259, 7
    %v2261 = vsub.s32 0, %v2260
    %v2262 = vrot.slane %v1668, %v2261
    %v2263 = vlaneseq
    %v2264 = vshrl.u32 %v2263, 7
    %v2265 = vsub.s32 1, %v2264
    %v2266 = vrot.slane %v1668, %v2265
    %v2267 = vlaneseq
    %v2268 = vshrl.u32 %v2267, 7
    %v2269 = vsub.s32 2, %v2268
    %v2270 = vrot.slane %v1668, %v2269
    %v2271 = vlaneseq
    %v2272 = vshrl.u32 %v2271, 7
    %v2273 = vsub.s32 3, %v2272
    %v2274 = vrot.slane %v1668, %v2273
    %v2275 = vlaneseq
    %v2276 = vshrl.u32 %v2275, 7
    %v2277 = vsub.s32 4, %v2276
    %v2278 = vrot.slane %v1668, %v2277
    %v2279 = vlaneseq
    %v2280 = vshrl.u32 %v2279, 7
    %v2281 = vsub.s32 5, %v2280
    %v2282 = vrot.slane %v1668, %v2281
    %v2283 = vlaneseq
    %v2284 = vshrl.u32 %v2283, 7
    %v2285 = vsub.s32 6, %v2284
    %v2286 = vrot.slane %v1668, %v2285
    %v2287 = vlaneseq
    %v2288 = vshrl.u32 %v2287, 7
    %v2289 = vsub.s32 7, %v2288
    %v2290 = vrot.slane %v1668, %v2289
    %v2291 = vlaneseq
    %v2292 = vshrl.u32 %v2291, 7
    %v2293 = vsub.s32 0, %v2292
    %v2294 = vrot.slane %v1669, %v2293
    %v2295 = vlaneseq
    %v2296 = vshrl.u32 %v2295, 7
    %v2297 = vsub.s32 1, %v2296
    %v2298 = vrot.slane %v1669, %v2297
    %v2299 = vlaneseq
    %v2300 = vshrl.u32 %v2299, 7
    %v2301 = vsub.s32 2, %v2300
    %v2302 = vrot.slane %v1669, %v2301
    %v2303 = vlaneseq
    %v2304 = vshrl.u32 %v2303, 7
    %v2305 = vsub.s32 3, %v2304
    %v2306 = vrot.slane %v1669, %v2305
    %v2307 = vlaneseq
    %v2308 = vshrl.u32 %v2307, 7
    %v2309 = vsub.s32 4, %v2308
    %v2310 = vrot.slane %v1669, %v2309
    %v2311 = vlaneseq
    %v2312 = vshrl.u32 %v2311, 7
    %v2313 = vsub.s32 5, %v2312
    %v2314 = vrot.slane %v1669, %v2313
    %v2315 = vlaneseq
    %v2316 = vshrl.u32 %v2315, 7
    %v2317 = vsub.s32 6, %v2316
    %v2318 = vrot.slane %v1669, %v2317
    %v2319 = vlaneseq
    %v2320 = vshrl.u32 %v2319, 7
    %v2321 = vsub.s32 7, %v2320
    %v2322 = vrot.slane %v1669, %v2321
    %v2323 = vlaneseq
    %v2324 = vshrl.u32 %v2323, 7
    %v2325 = vsub.s32 0, %v2324
    %v2326 = vrot.slane %v1670, %v2325
    %v2327 = vlaneseq
    %v2328 = vshrl.u32 %v2327, 7
    %v2329 = vsub.s32 1, %v2328
    %v2330 = vrot.slane %v1670, %v2329
    %v2331 = vlaneseq
    %v2332 = vshrl.u32 %v2331, 7
    %v2333 = vsub.s32 2, %v2332
    %v2334 = vrot.slane %v1670, %v2333
    %v2335 = vlaneseq
    %v2336 = vshrl.u32 %v2335, 7
    %v2337 = vsub.s32 3, %v2336
    %v2338 = vrot.slane %v1670, %v2337
    %v2339 = vlaneseq
    %v2340 = vshrl.u32 %v2339, 7
    %v2341 = vsub.s32 4, %v2340
    %v2342 = vrot.slane %v1670, %v2341
    %v2343 = vlaneseq
    %v2344 = vshrl.u32 %v2343, 7
    %v2345 = vsub.s32 5, %v2344
    %v2346 = vrot.slane %v1670, %v2345
    %v2347 = vlaneseq
    %v2348 = vshrl.u32 %v2347, 7
    %v2349 = vsub.s32 6, %v2348
    %v2350 = vrot.slane %v1670, %v2349
    %v2351 = vlaneseq
    %v2352 = vshrl.u32 %v2351, 7
    %v2353 = vsub.s32 7, %v2352
    %v2354 = vrot.slane %v1670, %v2353
    %v2355 = vlaneseq
    %v2356 = vshrl.u32 %v2355, 7
    %v2357 = vsub.s32 0, %v2356
    %v2358 = vrot.slane %v1671, %v2357
    %v2359 = vlaneseq
    %v2360 = vshrl.u32 %v2359, 7
    %v2361 = vsub.s32 1, %v2360
    %v2362 = vrot.slane %v1671, %v2361
    %v2363 = vlaneseq
    %v2364 = vshrl.u32 %v2363, 7
    %v2365 = vsub.s32 2, %v2364
    %v2366 = vrot.slane %v1671, %v2365
    %v2367 = vlaneseq
    %v2368 = vshrl.u32 %v2367, 7
    %v2369 = vsub.s32 3, %v2368
    %v2370 = vrot.slane %v1671, %v2369
    %v2371 = vlaneseq
    %v2372 = vshrl.u32 %v2371, 7
    %v2373 = vsub.s32 4, %v2372
    %v2374 = vrot.slane %v1671, %v2373
    %v2375 = vlaneseq
    %v2376 = vshrl.u32 %v2375, 7
    %v2377 = vsub.s32 5, %v2376
    %v2378 = vrot.slane %v1671, %v2377
    %v2379 = vlaneseq
    %v2380 = vshrl.u32 %v2379, 7
    %v2381 = vsub.s32 6, %v2380
    %v2382 = vrot.slane %v1671, %v2381
    %v2383 = vlaneseq
    %v2384 = vshrl.u32 %v2383, 7
    %v2385 = vsub.s32 7, %v2384
    %v2386 = vrot.slane %v1671, %v2385
    %v2387 = vlaneseq
    %v2388 = vshrl.u32 %v2387, 7
    %v2389 = vsub.s32 0, %v2388
    %v2390 = vrot.slane %v1672, %v2389
    %v2391 = vlaneseq
    %v2392 = vshrl.u32 %v2391, 7
    %v2393 = vsub.s32 1, %v2392
    %v2394 = vrot.slane %v1672, %v2393
    %v2395 = vlaneseq
    %v2396 = vshrl.u32 %v2395, 7
    %v2397 = vsub.s32 2, %v2396
    %v2398 = vrot.slane %v1672, %v2397
    %v2399 = vlaneseq
    %v2400 = vshrl.u32 %v2399, 7
    %v2401 = vsub.s32 3, %v2400
    %v2402 = vrot.slane %v1672, %v2401
    %v2403 = vlaneseq
    %v2404 = vshrl.u32 %v2403, 7
    %v2405 = vsub.s32 4, %v2404
    %v2406 = vrot.slane %v1672, %v2405
    %v2407 = vlaneseq
    %v2408 = vshrl.u32 %v2407, 7
    %v2409 = vsub.s32 5, %v2408
    %v2410 = vrot.slane %v1672, %v2409
    %v2411 = vlaneseq
    %v2412 = vshrl.u32 %v2411, 7
    %v2413 = vsub.s32 6, %v2412
    %v2414 = vrot.slane %v1672, %v2413
    %v2415 = vlaneseq
    %v2416 = vshrl.u32 %v2415, 7
    %v2417 = vsub.s32 7, %v2416
    %v2418 = vrot.slane %v1672, %v2417
    %v2419 = vlaneseq
    %v2420 = vshrl.u32 %v2419, 7
    %v2421 = vsub.s32 0, %v2420
    %v2422 = vrot.slane %v1673, %v2421
    %v2423 = vlaneseq
    %v2424 = vshrl.u32 %v2423, 7
    %v2425 = vsub.s32 1, %v2424
    %v2426 = vrot.slane %v1673, %v2425
    %v2427 = vlaneseq
    %v2428 = vshrl.u32 %v2427, 7
    %v2429 = vsub.s32 2, %v2428
    %v2430 = vrot.slane %v1673, %v2429
    %v2431 = vlaneseq
    %v2432 = vshrl.u32 %v2431, 7
    %v2433 = vsub.s32 3, %v2432
    %v2434 = vrot.slane %v1673, %v2433
    %v2435 = vlaneseq
    %v2436 = vshrl.u32 %v2435, 7
    %v2437 = vsub.s32 4, %v2436
    %v2438 = vrot.slane %v1673, %v2437
    %v2439 = vlaneseq
    %v2440 = vshrl.u32 %v2439, 7
    %v2441 = vsub.s32 5, %v2440
    %v2442 = vrot.slane %v1673, %v2441
    %v2443 = vlaneseq
    %v2444 = vshrl.u32 %v2443, 7
    %v2445 = vsub.s32 6, %v2444
    %v2446 = vrot.slane %v1673, %v2445
    %v2447 = vlaneseq
    %v2448 = vshrl.u32 %v2447, 7
    %v2449 = vsub.s32 7, %v2448
    %v2450 = vrot.slane %v1673, %v2449
    %v2451 = vlaneseq
    %v2452 = vshrl.u32 %v2451, 7
    %v2453 = vsub.s32 0, %v2452
    %v2454 = vrot.slane %v1674, %v2453
    %v2455 = vlaneseq
    %v2456 = vshrl.u32 %v2455, 7
    %v2457 = vsub.s32 1, %v2456
    %v2458 = vrot.slane %v1674, %v2457
    %v2459 = vlaneseq
    %v2460 = vshrl.u32 %v2459, 7
    %v2461 = vsub.s32 2, %v2460
    %v2462 = vrot.slane %v1674, %v2461
    %v2463 = vlaneseq
    %v2464 = vshrl.u32 %v2463, 7
    %v2465 = vsub.s32 3, %v2464
    %v2466 = vrot.slane %v1674, %v2465
    %v2467 = vlaneseq
    %v2468 = vshrl.u32 %v2467, 7
    %v2469 = vsub.s32 4, %v2468
    %v2470 = vrot.slane %v1674, %v2469
    %v2471 = vlaneseq
    %v2472 = vshrl.u32 %v2471, 7
    %v2473 = vsub.s32 5, %v2472
    %v2474 = vrot.slane %v1674, %v2473
    %v2475 = vlaneseq
    %v2476 = vshrl.u32 %v2475, 7
    %v2477 = vsub.s32 6, %v2476
    %v2478 = vrot.slane %v1674, %v2477
    %v2479 = vlaneseq
    %v2480 = vshrl.u32 %v2479, 7
    %v2481 = vsub.s32 7, %v2480
    %v2482 = vrot.slane %v1674, %v2481
    %v2483 = vlaneseq
    %v2484 = vshrl.u32 %v2483, 7
    %v2485 = vsub.s32 0, %v2484
    %v2486 = vrot.slane %v1675, %v2485
    %v2487 = vlaneseq
    %v2488 = vshrl.u32 %v2487, 7
    %v2489 = vsub.s32 1, %v2488
    %v2490 = vrot.slane %v1675, %v2489
    %v2491 = vlaneseq
    %v2492 = vshrl.u32 %v2491, 7
    %v2493 = vsub.s32 2, %v2492
    %v2494 = vrot.slane %v1675, %v2493
    %v2495 = vlaneseq
    %v2496 = vshrl.u32 %v2495, 7
    %v2497 = vsub.s32 3, %v2496
    %v2498 = vrot.slane %v1675, %v2497
    %v2499 = vlaneseq
    %v2500 = vshrl.u32 %v2499, 7
    %v2501 = vsub.s32 4, %v2500
    %v2502 = vrot.slane %v1675, %v2501
    %v2503 = vlaneseq
    %v2504 = vshrl.u32 %v2503, 7
    %v2505 = vsub.s32 5, %v2504
    %v2506 = vrot.slane %v1675, %v2505
    %v2507 = vlaneseq
    %v2508 = vshrl.u32 %v2507, 7
    %v2509 = vsub.s32 6, %v2508
    %v2510 = vrot.slane %v1675, %v2509
    %v2511 = vlaneseq
    %v2512 = vshrl.u32 %v2511, 7
    %v2513 = vsub.s32 7, %v2512
    %v2514 = vrot.slane %v1675, %v2513
    %v2515 = vlaneseq
    %v2516 = vshrl.u32 %v2515, 7
    %v2517 = vsub.s32 0, %v2516
    %v2518 = vrot.slane %v1676, %v2517
    %v2519 = vlaneseq
    %v2520 = vshrl.u32 %v2519, 7
    %v2521 = vsub.s32 1, %v2520
    %v2522 = vrot.slane %v1676, %v2521
    %v2523 = vlaneseq
    %v2524 = vshrl.u32 %v2523, 7
    %v2525 = vsub.s32 2, %v2524
    %v2526 = vrot.slane %v1676, %v2525
    %v2527 = vlaneseq
    %v2528 = vshrl.u32 %v2527, 7
    %v2529 = vsub.s32 3, %v2528
    %v2530 = vrot.slane %v1676, %v2529
    %v2531 = vlaneseq
    %v2532 = vshrl.u32 %v2531, 7
    %v2533 = vsub.s32 4, %v2532
    %v2534 = vrot.slane %v1676, %v2533
    %v2535 = vlaneseq
    %v2536 = vshrl.u32 %v2535, 7
    %v2537 = vsub.s32 5, %v2536
    %v2538 = vrot.slane %v1676, %v2537
    %v2539 = vlaneseq
    %v2540 = vshrl.u32 %v2539, 7
    %v2541 = vsub.s32 6, %v2540
    %v2542 = vrot.slane %v1676, %v2541
    %v2543 = vlaneseq
    %v2544 = vshrl.u32 %v2543, 7
    %v2545 = vsub.s32 7, %v2544
    %v2546 = vrot.slane %v1676, %v2545
    %v2547 = vlaneseq
    %v2548 = vshrl.u32 %v2547, 7
    %v2549 = vsub.s32 0, %v2548
    %v2550 = vrot.slane %v1677, %v2549
    %v2551 = vlaneseq
    %v2552 = vshrl.u32 %v2551, 7
    %v2553 = vsub.s32 1, %v2552
    %v2554 = vrot.slane %v1677, %v2553
    %v2555 = vlaneseq
    %v2556 = vshrl.u32 %v2555, 7
    %v2557 = vsub.s32 2, %v2556
    %v2558 = vrot.slane %v1677, %v2557
    %v2559 = vlaneseq
    %v2560 = vshrl.u32 %v2559, 7
    %v2561 = vsub.s32 3, %v2560
    %v2562 = vrot.slane %v1677, %v2561
    %v2563 = vlaneseq
    %v2564 = vshrl.u32 %v2563, 7
    %v2565 = vsub.s32 4, %v2564
    %v2566 = vrot.slane %v1677, %v2565
    %v2567 = vlaneseq
    %v2568 = vshrl.u32 %v2567, 7
    %v2569 = vsub.s32 5, %v2568
    %v2570 = vrot.slane %v1677, %v2569
    %v2571 = vlaneseq
    %v2572 = vshrl.u32 %v2571, 7
    %v2573 = vsub.s32 6, %v2572
    %v2574 = vrot.slane %v1677, %v2573
    %v2575 = vlaneseq
    %v2576 = vshrl.u32 %v2575, 7
    %v2577 = vsub.s32 7, %v2576
    %v2578 = vrot.slane %v1677, %v2577
    %v2579 = vlaneseq
    %v2580 = vshrl.u32 %v2579, 7
    %v2581 = vsub.s32 0, %v2580
    %v2582 = vrot.slane %v1678, %v2581
    %v2583 = vlaneseq
    %v2584 = vshrl.u32 %v2583, 7
    %v2585 = vsub.s32 1, %v2584
    %v2586 = vrot.slane %v1678, %v2585
    %v2587 = vlaneseq
    %v2588 = vshrl.u32 %v2587, 7
    %v2589 = vsub.s32 2, %v2588
    %v2590 = vrot.slane %v1678, %v2589
    %v2591 = vlaneseq
    %v2592 = vshrl.u32 %v2591, 7
    %v2593 = vsub.s32 3, %v2592
    %v2594 = vrot.slane %v1678, %v2593
    %v2595 = vlaneseq
    %v2596 = vshrl.u32 %v2595, 7
    %v2597 = vsub.s32 4, %v2596
    %v2598 = vrot.slane %v1678, %v2597
    %v2599 = vlaneseq
    %v2600 = vshrl.u32 %v2599, 7
    %v2601 = vsub.s32 5, %v2600
    %v2602 = vrot.slane %v1678, %v2601
    %v2603 = vlaneseq
    %v2604 = vshrl.u32 %v2603, 7
    %v2605 = vsub.s32 6, %v2604
    %v2606 = vrot.slane %v1678, %v2605
    %v2607 = vlaneseq
    %v2608 = vshrl.u32 %v2607, 7
    %v2609 = vsub.s32 7, %v2608
    %v2610 = vrot.slane %v1678, %v2609
    %v2611 = vlaneseq
    %v2612 = vshrl.u32 %v2611, 7
    %v2613 = vsub.s32 0, %v2612
    %v2614 = vrot.slane %v1679, %v2613
    %v2615 = vlaneseq
    %v2616 = vshrl.u32 %v2615, 7
    %v2617 = vsub.s32 1, %v2616
    %v2618 = vrot.slane %v1679, %v2617
    %v2619 = vlaneseq
    %v2620 = vshrl.u32 %v2619, 7
    %v2621 = vsub.s32 2, %v2620
    %v2622 = vrot.slane %v1679, %v2621
    %v2623 = vlaneseq
    %v2624 = vshrl.u32 %v2623, 7
    %v2625 = vsub.s32 3, %v2624
    %v2626 = vrot.slane %v1679, %v2625
    %v2627 = vlaneseq
    %v2628 = vshrl.u32 %v2627, 7
    %v2629 = vsub.s32 4, %v2628
    %v2630 = vrot.slane %v1679, %v2629
    %v2631 = vlaneseq
    %v2632 = vshrl.u32 %v2631, 7
    %v2633 = vsub.s32 5, %v2632
    %v2634 = vrot.slane %v1679, %v2633
    %v2635 = vlaneseq
    %v2636 = vshrl.u32 %v2635, 7
    %v2637 = vsub.s32 6, %v2636
    %v2638 = vrot.slane %v1679, %v2637
    %v2639 = vlaneseq
    %v2640 = vshrl.u32 %v2639, 7
    %v2641 = vsub.s32 7, %v2640
    %v2642 = vrot.slane %v1679, %v2641
    %v2643 = vlaneseq
    %v2644 = vshrl.u32 %v2643, 7
    %v2645 = vsub.s32 0, %v2644
    %v2646 = vrot.slane %v1680, %v2645
    %v2647 = vlaneseq
    %v2648 = vshrl.u32 %v2647, 7
    %v2649 = vsub.s32 1, %v2648
    %v2650 = vrot.slane %v1680, %v2649
    %v2651 = vlaneseq
    %v2652 = vshrl.u32 %v2651, 7
    %v2653 = vsub.s32 2, %v2652
    %v2654 = vrot.slane %v1680, %v2653
    %v2655 = vlaneseq
    %v2656 = vshrl.u32 %v2655, 7
    %v2657 = vsub.s32 3, %v2656
    %v2658 = vrot.slane %v1680, %v2657
    %v2659 = vlaneseq
    %v2660 = vshrl.u32 %v2659, 7
    %v2661 = vsub.s32 4, %v2660
    %v2662 = vrot.slane %v1680, %v2661
    %v2663 = vlaneseq
    %v2664 = vshrl.u32 %v2663, 7
    %v2665 = vsub.s32 5, %v2664
    %v2666 = vrot.slane %v1680, %v2665
    %v2667 = vlaneseq
    %v2668 = vshrl.u32 %v2667, 7
    %v2669 = vsub.s32 6, %v2668
    %v2670 = vrot.slane %v1680, %v2669
    %v2671 = vlaneseq
    %v2672 = vshrl.u32 %v2671, 7
    %v2673 = vsub.s32 7, %v2672
    %v2674 = vrot.slane %v1680, %v2673
    %v2675 = vlaneseq
    %v2676 = vshrl.u32 %v2675, 7
    %v2677 = vsub.s32 0, %v2676
    %v2678 = vrot.slane %v1681, %v2677
    %v2679 = vlaneseq
    %v2680 = vshrl.u32 %v2679, 7
    %v2681 = vsub.s32 1, %v2680
    %v2682 = vrot.slane %v1681, %v2681
    %v2683 = vlaneseq
    %v2684 = vshrl.u32 %v2683, 7
    %v2685 = vsub.s32 2, %v2684
    %v2686 = vrot.slane %v1681, %v2685
    %v2687 = vlaneseq
    %v2688 = vshrl.u32 %v2687, 7
    %v2689 = vsub.s32 3, %v2688
    %v2690 = vrot.slane %v1681, %v2689
    %v2691 = vlaneseq
    %v2692 = vshrl.u32 %v2691, 7
    %v2693 = vsub.s32 4, %v2692
    %v2694 = vrot.slane %v1681, %v2693
    %v2695 = vlaneseq
    %v2696 = vshrl.u32 %v2695, 7
    %v2697 = vsub.s32 5, %v2696
    %v2698 = vrot.slane %v1681, %v2697
    %v2699 = vlaneseq
    %v2700 = vshrl.u32 %v2699, 7
    %v2701 = vsub.s32 6, %v2700
    %v2702 = vrot.slane %v1681, %v2701
    %v2703 = vlaneseq
    %v2704 = vshrl.u32 %v2703, 7
    %v2705 = vsub.s32 7, %v2704
    %v2706 = vrot.slane %v1681, %v2705
    %v2707 = vlaneseq
    %v2708 = vshrl.u32 %v2707, 7
    %v2709 = vsub.s32 0, %v2708
    %v2710 = vrot.slane %v1682, %v2709
    %v2711 = vlaneseq
    %v2712 = vshrl.u32 %v2711, 7
    %v2713 = vsub.s32 1, %v2712
    %v2714 = vrot.slane %v1682, %v2713
    %v2715 = vlaneseq
    %v2716 = vshrl.u32 %v2715, 7
    %v2717 = vsub.s32 2, %v2716
    %v2718 = vrot.slane %v1682, %v2717
    %v2719 = vlaneseq
    %v2720 = vshrl.u32 %v2719, 7
    %v2721 = vsub.s32 3, %v2720
    %v2722 = vrot.slane %v1682, %v2721
    %v2723 = vlaneseq
    %v2724 = vshrl.u32 %v2723, 7
    %v2725 = vsub.s32 4, %v2724
    %v2726 = vrot.slane %v1682, %v2725
    %v2727 = vlaneseq
    %v2728 = vshrl.u32 %v2727, 7
    %v2729 = vsub.s32 5, %v2728
    %v2730 = vrot.slane %v1682, %v2729
    %v2731 = vlaneseq
    %v2732 = vshrl.u32 %v2731, 7
    %v2733 = vsub.s32 6, %v2732
    %v2734 = vrot.slane %v1682, %v2733
    %v2735 = vlaneseq
    %v2736 = vshrl.u32 %v2735, 7
    %v2737 = vsub.s32 7, %v2736
    %v2738 = vrot.slane %v1682, %v2737
    %v2739 = vcombine.low %v1718, %v1722
    %v2740 = vcombine.low %v1726, %v1730
    %v2741 = vcombine.low %v1734, %v1738
    %v2742 = vcombine.low %v1742, %v1746
    %v2744 = vunpack.c.l.s4 1966171168
    %v2745 = vunpack.c.0.s8 %v2744
    %v2746 = vlaneseq
    %v2747 = vshrl.u32 %v2746, 7
    %v2748 = vsub.s32 %v2745, %v2747
    %v2749 = vrot.slane %v2739, %v2748
    %v2751 = vunpack.c.l.s4 1966171168
    %v2752 = vunpack.c.0.s8 %v2751
    %v2753 = vlaneseq
    %v2754 = vshrl.u32 %v2753, 7
    %v2755 = vsub.s32 %v2752, %v2754
    %v2756 = vrot.slane %v2740, %v2755
    %v2758 = vunpack.c.l.s4 1966171168
    %v2759 = vunpack.c.0.s8 %v2758
    %v2760 = vlaneseq
    %v2761 = vshrl.u32 %v2760, 7
    %v2762 = vsub.s32 %v2759, %v2761
    %v2763 = vrot.slane %v2741, %v2762
    %v2765 = vunpack.c.l.s4 1966171168
    %v2766 = vunpack.c.0.s8 %v2765
    %v2767 = vlaneseq
    %v2768 = vshrl.u32 %v2767, 7
    %v2769 = vsub.s32 %v2766, %v2768
    %v2770 = vrot.slane %v2742, %v2769
    %v2771 = vcombine.low %v2749, %v2756
    %v2772 = vcombine.low %v2763, %v2770
    %v2774 = vunpack.c.l.s4 1966171168
    %v2775 = vunpack.c.0.s8 %v2774
    %v2776 = vlaneseq
    %v2777 = vshrl.u32 %v2776, 7
    %v2778 = vsub.s32 %v2775, %v2777
    %v2779 = vrot.slane %v2771, %v2778
    %v2781 = vunpack.c.l.s4 1966171168
    %v2782 = vunpack.c.0.s8 %v2781
    %v2783 = vlaneseq
    %v2784 = vshrl.u32 %v2783, 7
    %v2785 = vsub.s32 %v2782, %v2784
    %v2786 = vrot.slane %v2772, %v2785
    %v2787 = vcombine.low %v2779, %v2786
    %v2788 = vcombine.low %v1750, %v1754
    %v2789 = vcombine.low %v1758, %v1762
    %v2790 = vcombine.low %v1766, %v1770
    %v2791 = vcombine.low %v1774, %v1778
    %v2793 = vunpack.c.l.s4 1966171168
    %v2794 = vunpack.c.0.s8 %v2793
    %v2795 = vlaneseq
    %v2796 = vshrl.u32 %v2795, 7
    %v2797 = vsub.s32 %v2794, %v2796
    %v2798 = vrot.slane %v2788, %v2797
    %v2800 = vunpack.c.l.s4 1966171168
    %v2801 = vunpack.c.0.s8 %v2800
    %v2802 = vlaneseq
    %v2803 = vshrl.u32 %v2802, 7
    %v2804 = vsub.s32 %v2801, %v2803
    %v2805 = vrot.slane %v2789, %v2804
    %v2807 = vunpack.c.l.s4 1966171168
    %v2808 = vunpack.c.0.s8 %v2807
    %v2809 = vlaneseq
    %v2810 = vshrl.u32 %v2809, 7
    %v2811 = vsub.s32 %v2808, %v2810
    %v2812 = vrot.slane %v2790, %v2811
    %v2814 = vunpack.c.l.s4 1966171168
    %v2815 = vunpack.c.0.s8 %v2814
    %v2816 = vlaneseq
    %v2817 = vshrl.u32 %v2816, 7
    %v2818 = vsub.s32 %v2815, %v2817
    %v2819 = vrot.slane %v2791, %v2818
    %v2820 = vcombine.low %v2798, %v2805
    %v2821 = vcombine.low %v2812, %v2819
    %v2823 = vunpack.c.l.s4 1966171168
    %v2824 = vunpack.c.0.s8 %v2823
    %v2825 = vlaneseq
    %v2826 = vshrl.u32 %v2825, 7
    %v2827 = vsub.s32 %v2824, %v2826
    %v2828 = vrot.slane %v2820, %v2827
    %v2830 = vunpack.c.l.s4 1966171168
    %v2831 = vunpack.c.0.s8 %v2830
    %v2832 = vlaneseq
    %v2833 = vshrl.u32 %v2832, 7
    %v2834 = vsub.s32 %v2831, %v2833
    %v2835 = vrot.slane %v2821, %v2834
    %v2836 = vcombine.low %v2828, %v2835
    %v2837 = vcombine.low %v1782, %v1786
    %v2838 = vcombine.low %v1790, %v1794
    %v2839 = vcombine.low %v1798, %v1802
    %v2840 = vcombine.low %v1806, %v1810
    %v2842 = vunpack.c.l.s4 1966171168
    %v2843 = vunpack.c.0.s8 %v2842
    %v2844 = vlaneseq
    %v2845 = vshrl.u32 %v2844, 7
    %v2846 = vsub.s32 %v2843, %v2845
    %v2847 = vrot.slane %v2837, %v2846
    %v2849 = vunpack.c.l.s4 1966171168
    %v2850 = vunpack.c.0.s8 %v2849
    %v2851 = vlaneseq
    %v2852 = vshrl.u32 %v2851, 7
    %v2853 = vsub.s32 %v2850, %v2852
    %v2854 = vrot.slane %v2838, %v2853
    %v2856 = vunpack.c.l.s4 1966171168
    %v2857 = vunpack.c.0.s8 %v2856
    %v2858 = vlaneseq
    %v2859 = vshrl.u32 %v2858, 7
    %v2860 = vsub.s32 %v2857, %v2859
    %v2861 = vrot.slane %v2839, %v2860
    %v2863 = vunpack.c.l.s4 1966171168
    %v2864 = vunpack.c.0.s8 %v2863
    %v2865 = vlaneseq
    %v2866 = vshrl.u32 %v2865, 7
    %v2867 = vsub.s32 %v2864, %v2866
    %v2868 = vrot.slane %v2840, %v2867
    %v2869 = vcombine.low %v2847, %v2854
    %v2870 = vcombine.low %v2861, %v2868
    %v2872 = vunpack.c.l.s4 1966171168
    %v2873 = vunpack.c.0.s8 %v2872
    %v2874 = vlaneseq
    %v2875 = vshrl.u32 %v2874, 7
    %v2876 = vsub.s32 %v2873, %v2875
    %v2877 = vrot.slane %v2869, %v2876
    %v2879 = vunpack.c.l.s4 1966171168
    %v2880 = vunpack.c.0.s8 %v2879
    %v2881 = vlaneseq
    %v2882 = vshrl.u32 %v2881, 7
    %v2883 = vsub.s32 %v2880, %v2882
    %v2884 = vrot.slane %v2870, %v2883
    %v2885 = vcombine.low %v2877, %v2884
    %v2886 = vcombine.low %v1814, %v1818
    %v2887 = vcombine.low %v1822, %v1826
    %v2888 = vcombine.low %v1830, %v1834
    %v2889 = vcombine.low %v1838, %v1842
    %v2891 = vunpack.c.l.s4 1966171168
    %v2892 = vunpack.c.0.s8 %v2891
    %v2893 = vlaneseq
    %v2894 = vshrl.u32 %v2893, 7
    %v2895 = vsub.s32 %v2892, %v2894
    %v2896 = vrot.slane %v2886, %v2895
    %v2898 = vunpack.c.l.s4 1966171168
    %v2899 = vunpack.c.0.s8 %v2898
    %v2900 = vlaneseq
    %v2901 = vshrl.u32 %v2900, 7
    %v2902 = vsub.s32 %v2899, %v2901
    %v2903 = vrot.slane %v2887, %v2902
    %v2905 = vunpack.c.l.s4 1966171168
    %v2906 = vunpack.c.0.s8 %v2905
    %v2907 = vlaneseq
    %v2908 = vshrl.u32 %v2907, 7
    %v2909 = vsub.s32 %v2906, %v2908
    %v2910 = vrot.slane %v2888, %v2909
    %v2912 = vunpack.c.l.s4 1966171168
    %v2913 = vunpack.c.0.s8 %v2912
    %v2914 = vlaneseq
    %v2915 = vshrl.u32 %v2914, 7
    %v2916 = vsub.s32 %v2913, %v2915
    %v2917 = vrot.slane %v2889, %v2916
    %v2918 = vcombine.low %v2896, %v2903
    %v2919 = vcombine.low %v2910, %v2917
    %v2921 = vunpack.c.l.s4 1966171168
    %v2922 = vunpack.c.0.s8 %v2921
    %v2923 = vlaneseq
    %v2924 = vshrl.u32 %v2923, 7
    %v2925 = vsub.s32 %v2922, %v2924
    %v2926 = vrot.slane %v2918, %v2925
    %v2928 = vunpack.c.l.s4 1966171168
    %v2929 = vunpack.c.0.s8 %v2928
    %v2930 = vlaneseq
    %v2931 = vshrl.u32 %v2930, 7
    %v2932 = vsub.s32 %v2929, %v2931
    %v2933 = vrot.slane %v2919, %v2932
    %v2934 = vcombine.low %v2926, %v2933
    %v2935 = vcombine.low %v1846, %v1850
    %v2936 = vcombine.low %v1854, %v1858
    %v2937 = vcombine.low %v1862, %v1866
    %v2938 = vcombine.low %v1870, %v1874
    %v2940 = vunpack.c.l.s4 1966171168
    %v2941 = vunpack.c.0.s8 %v2940
    %v2942 = vlaneseq
    %v2943 = vshrl.u32 %v2942, 7
    %v2944 = vsub.s32 %v2941, %v2943
    %v2945 = vrot.slane %v2935, %v2944
    %v2947 = vunpack.c.l.s4 1966171168
    %v2948 = vunpack.c.0.s8 %v2947
    %v2949 = vlaneseq
    %v2950 = vshrl.u32 %v2949, 7
    %v2951 = vsub.s32 %v2948, %v2950
    %v2952 = vrot.slane %v2936, %v2951
    %v2954 = vunpack.c.l.s4 1966171168
    %v2955 = vunpack.c.0.s8 %v2954
    %v2956 = vlaneseq
    %v2957 = vshrl.u32 %v2956, 7
    %v2958 = vsub.s32 %v2955, %v2957
    %v2959 = vrot.slane %v2937, %v2958
    %v2961 = vunpack.c.l.s4 1966171168
    %v2962 = vunpack.c.0.s8 %v2961
    %v2963 = vlaneseq
    %v2964 = vshrl.u32 %v2963, 7
    %v2965 = vsub.s32 %v2962, %v2964
    %v2966 = vrot.slane %v2938, %v2965
    %v2967 = vcombine.low %v2945, %v2952
    %v2968 = vcombine.low %v2959, %v2966
    %v2970 = vunpack.c.l.s4 1966171168
    %v2971 = vunpack.c.0.s8 %v2970
    %v2972 = vlaneseq
    %v2973 = vshrl.u32 %v2972, 7
    %v2974 = vsub.s32 %v2971, %v2973
    %v2975 = vrot.slane %v2967, %v2974
    %v2977 = vunpack.c.l.s4 1966171168
    %v2978 = vunpack.c.0.s8 %v2977
    %v2979 = vlaneseq
    %v2980 = vshrl.u32 %v2979, 7
    %v2981 = vsub.s32 %v2978, %v2980
    %v2982 = vrot.slane %v2968, %v2981
    %v2983 = vcombine.low %v2975, %v2982
    %v2984 = vcombine.low %v1878, %v1882
    %v2985 = vcombine.low %v1886, %v1890
    %v2986 = vcombine.low %v1894, %v1898
    %v2987 = vcombine.low %v1902, %v1906
    %v2989 = vunpack.c.l.s4 1966171168
    %v2990 = vunpack.c.0.s8 %v2989
    %v2991 = vlaneseq
    %v2992 = vshrl.u32 %v2991, 7
    %v2993 = vsub.s32 %v2990, %v2992
    %v2994 = vrot.slane %v2984, %v2993
    %v2996 = vunpack.c.l.s4 1966171168
    %v2997 = vunpack.c.0.s8 %v2996
    %v2998 = vlaneseq
    %v2999 = vshrl.u32 %v2998, 7
    %v3000 = vsub.s32 %v2997, %v2999
    %v3001 = vrot.slane %v2985, %v3000
    %v3003 = vunpack.c.l.s4 1966171168
    %v3004 = vunpack.c.0.s8 %v3003
    %v3005 = vlaneseq
    %v3006 = vshrl.u32 %v3005, 7
    %v3007 = vsub.s32 %v3004, %v3006
    %v3008 = vrot.slane %v2986, %v3007
    %v3010 = vunpack.c.l.s4 1966171168
    %v3011 = vunpack.c.0.s8 %v3010
    %v3012 = vlaneseq
    %v3013 = vshrl.u32 %v3012, 7
    %v3014 = vsub.s32 %v3011, %v3013
    %v3015 = vrot.slane %v2987, %v3014
    %v3016 = vcombine.low %v2994, %v3001
    %v3017 = vcombine.low %v3008, %v3015
    %v3019 = vunpack.c.l.s4 1966171168
    %v3020 = vunpack.c.0.s8 %v3019
    %v3021 = vlaneseq
    %v3022 = vshrl.u32 %v3021, 7
    %v3023 = vsub.s32 %v3020, %v3022
    %v3024 = vrot.slane %v3016, %v3023
    %v3026 = vunpack.c.l.s4 1966171168
    %v3027 = vunpack.c.0.s8 %v3026
    %v3028 = vlaneseq
    %v3029 = vshrl.u32 %v3028, 7
    %v3030 = vsub.s32 %v3027, %v3029
    %v3031 = vrot.slane %v3017, %v3030
    %v3032 = vcombine.low %v3024, %v3031
    %v3033 = vcombine.low %v1910, %v1914
    %v3034 = vcombine.low %v1918, %v1922
    %v3035 = vcombine.low %v1926, %v1930
    %v3036 = vcombine.low %v1934, %v1938
    %v3038 = vunpack.c.l.s4 1966171168
    %v3039 = vunpack.c.0.s8 %v3038
    %v3040 = vlaneseq
    %v3041 = vshrl.u32 %v3040, 7
    %v3042 = vsub.s32 %v3039, %v3041
    %v3043 = vrot.slane %v3033, %v3042
    %v3045 = vunpack.c.l.s4 1966171168
    %v3046 = vunpack.c.0.s8 %v3045
    %v3047 = vlaneseq
    %v3048 = vshrl.u32 %v3047, 7
    %v3049 = vsub.s32 %v3046, %v3048
    %v3050 = vrot.slane %v3034, %v3049
    %v3052 = vunpack.c.l.s4 1966171168
    %v3053 = vunpack.c.0.s8 %v3052
    %v3054 = vlaneseq
    %v3055 = vshrl.u32 %v3054, 7
    %v3056 = vsub.s32 %v3053, %v3055
    %v3057 = vrot.slane %v3035, %v3056
    %v3059 = vunpack.c.l.s4 1966171168
    %v3060 = vunpack.c.0.s8 %v3059
    %v3061 = vlaneseq
    %v3062 = vshrl.u32 %v3061, 7
    %v3063 = vsub.s32 %v3060, %v3062
    %v3064 = vrot.slane %v3036, %v3063
    %v3065 = vcombine.low %v3043, %v3050
    %v3066 = vcombine.low %v3057, %v3064
    %v3068 = vunpack.c.l.s4 1966171168
    %v3069 = vunpack.c.0.s8 %v3068
    %v3070 = vlaneseq
    %v3071 = vshrl.u32 %v3070, 7
    %v3072 = vsub.s32 %v3069, %v3071
    %v3073 = vrot.slane %v3065, %v3072
    %v3075 = vunpack.c.l.s4 1966171168
    %v3076 = vunpack.c.0.s8 %v3075
    %v3077 = vlaneseq
    %v3078 = vshrl.u32 %v3077, 7
    %v3079 = vsub.s32 %v3076, %v3078
    %v3080 = vrot.slane %v3066, %v3079
    %v3081 = vcombine.low %v3073, %v3080
    %v3082 = vcombine.low %v1942, %v1946
    %v3083 = vcombine.low %v1950, %v1954
    %v3084 = vcombine.low %v1958, %v1962
    %v3085 = vcombine.low %v1966, %v1970
    %v3087 = vunpack.c.l.s4 1966171168
    %v3088 = vunpack.c.0.s8 %v3087
    %v3089 = vlaneseq
    %v3090 = vshrl.u32 %v3089, 7
    %v3091 = vsub.s32 %v3088, %v3090
    %v3092 = vrot.slane %v3082, %v3091
    %v3094 = vunpack.c.l.s4 1966171168
    %v3095 = vunpack.c.0.s8 %v3094
    %v3096 = vlaneseq
    %v3097 = vshrl.u32 %v3096, 7
    %v3098 = vsub.s32 %v3095, %v3097
    %v3099 = vrot.slane %v3083, %v3098
    %v3101 = vunpack.c.l.s4 1966171168
    %v3102 = vunpack.c.0.s8 %v3101
    %v3103 = vlaneseq
    %v3104 = vshrl.u32 %v3103, 7
    %v3105 = vsub.s32 %v3102, %v3104
    %v3106 = vrot.slane %v3084, %v3105
    %v3108 = vunpack.c.l.s4 1966171168
    %v3109 = vunpack.c.0.s8 %v3108
    %v3110 = vlaneseq
    %v3111 = vshrl.u32 %v3110, 7
    %v3112 = vsub.s32 %v3109, %v3111
    %v3113 = vrot.slane %v3085, %v3112
    %v3114 = vcombine.low %v3092, %v3099
    %v3115 = vcombine.low %v3106, %v3113
    %v3117 = vunpack.c.l.s4 1966171168
    %v3118 = vunpack.c.0.s8 %v3117
    %v3119 = vlaneseq
    %v3120 = vshrl.u32 %v3119, 7
    %v3121 = vsub.s32 %v3118, %v3120
    %v3122 = vrot.slane %v3114, %v3121
    %v3124 = vunpack.c.l.s4 1966171168
    %v3125 = vunpack.c.0.s8 %v3124
    %v3126 = vlaneseq
    %v3127 = vshrl.u32 %v3126, 7
    %v3128 = vsub.s32 %v3125, %v3127
    %v3129 = vrot.slane %v3115, %v3128
    %v3130 = vcombine.low %v3122, %v3129
    %v3131 = vcombine.low %v1974, %v1978
    %v3132 = vcombine.low %v1982, %v1986
    %v3133 = vcombine.low %v1990, %v1994
    %v3134 = vcombine.low %v1998, %v2002
    %v3136 = vunpack.c.l.s4 1966171168
    %v3137 = vunpack.c.0.s8 %v3136
    %v3138 = vlaneseq
    %v3139 = vshrl.u32 %v3138, 7
    %v3140 = vsub.s32 %v3137, %v3139
    %v3141 = vrot.slane %v3131, %v3140
    %v3143 = vunpack.c.l.s4 1966171168
    %v3144 = vunpack.c.0.s8 %v3143
    %v3145 = vlaneseq
    %v3146 = vshrl.u32 %v3145, 7
    %v3147 = vsub.s32 %v3144, %v3146
    %v3148 = vrot.slane %v3132, %v3147
    %v3150 = vunpack.c.l.s4 1966171168
    %v3151 = vunpack.c.0.s8 %v3150
    %v3152 = vlaneseq
    %v3153 = vshrl.u32 %v3152, 7
    %v3154 = vsub.s32 %v3151, %v3153
    %v3155 = vrot.slane %v3133, %v3154
    %v3157 = vunpack.c.l.s4 1966171168
    %v3158 = vunpack.c.0.s8 %v3157
    %v3159 = vlaneseq
    %v3160 = vshrl.u32 %v3159, 7
    %v3161 = vsub.s32 %v3158, %v3160
    %v3162 = vrot.slane %v3134, %v3161
    %v3163 = vcombine.low %v3141, %v3148
    %v3164 = vcombine.low %v3155, %v3162
    %v3166 = vunpack.c.l.s4 1966171168
    %v3167 = vunpack.c.0.s8 %v3166
    %v3168 = vlaneseq
    %v3169 = vshrl.u32 %v3168, 7
    %v3170 = vsub.s32 %v3167, %v3169
    %v3171 = vrot.slane %v3163, %v3170
    %v3173 = vunpack.c.l.s4 1966171168
    %v3174 = vunpack.c.0.s8 %v3173
    %v3175 = vlaneseq
    %v3176 = vshrl.u32 %v3175, 7
    %v3177 = vsub.s32 %v3174, %v3176
    %v3178 = vrot.slane %v3164, %v3177
    %v3179 = vcombine.low %v3171, %v3178
    %v3180 = vcombine.low %v2006, %v2010
    %v3181 = vcombine.low %v2014, %v2018
    %v3182 = vcombine.low %v2022, %v2026
    %v3183 = vcombine.low %v2030, %v2034
    %v3185 = vunpack.c.l.s4 1966171168
    %v3186 = vunpack.c.0.s8 %v3185
    %v3187 = vlaneseq
    %v3188 = vshrl.u32 %v3187, 7
    %v3189 = vsub.s32 %v3186, %v3188
    %v3190 = vrot.slane %v3180, %v3189
    %v3192 = vunpack.c.l.s4 1966171168
    %v3193 = vunpack.c.0.s8 %v3192
    %v3194 = vlaneseq
    %v3195 = vshrl.u32 %v3194, 7
    %v3196 = vsub.s32 %v3193, %v3195
    %v3197 = vrot.slane %v3181, %v3196
    %v3199 = vunpack.c.l.s4 1966171168
    %v3200 = vunpack.c.0.s8 %v3199
    %v3201 = vlaneseq
    %v3202 = vshrl.u32 %v3201, 7
    %v3203 = vsub.s32 %v3200, %v3202
    %v3204 = vrot.slane %v3182, %v3203
    %v3206 = vunpack.c.l.s4 1966171168
    %v3207 = vunpack.c.0.s8 %v3206
    %v3208 = vlaneseq
    %v3209 = vshrl.u32 %v3208, 7
    %v3210 = vsub.s32 %v3207, %v3209
    %v3211 = vrot.slane %v3183, %v3210
    %v3212 = vcombine.low %v3190, %v3197
    %v3213 = vcombine.low %v3204, %v3211
    %v3215 = vunpack.c.l.s4 1966171168
    %v3216 = vunpack.c.0.s8 %v3215
    %v3217 = vlaneseq
    %v3218 = vshrl.u32 %v3217, 7
    %v3219 = vsub.s32 %v3216, %v3218
    %v3220 = vrot.slane %v3212, %v3219
    %v3222 = vunpack.c.l.s4 1966171168
    %v3223 = vunpack.c.0.s8 %v3222
    %v3224 = vlaneseq
    %v3225 = vshrl.u32 %v3224, 7
    %v3226 = vsub.s32 %v3223, %v3225
    %v3227 = vrot.slane %v3213, %v3226
    %v3228 = vcombine.low %v3220, %v3227
    %v3229 = vcombine.low %v2038, %v2042
    %v3230 = vcombine.low %v2046, %v2050
    %v3231 = vcombine.low %v2054, %v2058
    %v3232 = vcombine.low %v2062, %v2066
    %v3234 = vunpack.c.l.s4 1966171168
    %v3235 = vunpack.c.0.s8 %v3234
    %v3236 = vlaneseq
    %v3237 = vshrl.u32 %v3236, 7
    %v3238 = vsub.s32 %v3235, %v3237
    %v3239 = vrot.slane %v3229, %v3238
    %v3241 = vunpack.c.l.s4 1966171168
    %v3242 = vunpack.c.0.s8 %v3241
    %v3243 = vlaneseq
    %v3244 = vshrl.u32 %v3243, 7
    %v3245 = vsub.s32 %v3242, %v3244
    %v3246 = vrot.slane %v3230, %v3245
    %v3248 = vunpack.c.l.s4 1966171168
    %v3249 = vunpack.c.0.s8 %v3248
    %v3250 = vlaneseq
    %v3251 = vshrl.u32 %v3250, 7
    %v3252 = vsub.s32 %v3249, %v3251
    %v3253 = vrot.slane %v3231, %v3252
    %v3255 = vunpack.c.l.s4 1966171168
    %v3256 = vunpack.c.0.s8 %v3255
    %v3257 = vlaneseq
    %v3258 = vshrl.u32 %v3257, 7
    %v3259 = vsub.s32 %v3256, %v3258
    %v3260 = vrot.slane %v3232, %v3259
    %v3261 = vcombine.low %v3239, %v3246
    %v3262 = vcombine.low %v3253, %v3260
    %v3264 = vunpack.c.l.s4 1966171168
    %v3265 = vunpack.c.0.s8 %v3264
    %v3266 = vlaneseq
    %v3267 = vshrl.u32 %v3266, 7
    %v3268 = vsub.s32 %v3265, %v3267
    %v3269 = vrot.slane %v3261, %v3268
    %v3271 = vunpack.c.l.s4 1966171168
    %v3272 = vunpack.c.0.s8 %v3271
    %v3273 = vlaneseq
    %v3274 = vshrl.u32 %v3273, 7
    %v3275 = vsub.s32 %v3272, %v3274
    %v3276 = vrot.slane %v3262, %v3275
    %v3277 = vcombine.low %v3269, %v3276
    %v3278 = vcombine.low %v2070, %v2074
    %v3279 = vcombine.low %v2078, %v2082
    %v3280 = vcombine.low %v2086, %v2090
    %v3281 = vcombine.low %v2094, %v2098
    %v3283 = vunpack.c.l.s4 1966171168
    %v3284 = vunpack.c.0.s8 %v3283
    %v3285 = vlaneseq
    %v3286 = vshrl.u32 %v3285, 7
    %v3287 = vsub.s32 %v3284, %v3286
    %v3288 = vrot.slane %v3278, %v3287
    %v3290 = vunpack.c.l.s4 1966171168
    %v3291 = vunpack.c.0.s8 %v3290
    %v3292 = vlaneseq
    %v3293 = vshrl.u32 %v3292, 7
    %v3294 = vsub.s32 %v3291, %v3293
    %v3295 = vrot.slane %v3279, %v3294
    %v3297 = vunpack.c.l.s4 1966171168
    %v3298 = vunpack.c.0.s8 %v3297
    %v3299 = vlaneseq
    %v3300 = vshrl.u32 %v3299, 7
    %v3301 = vsub.s32 %v3298, %v3300
    %v3302 = vrot.slane %v3280, %v3301
    %v3304 = vunpack.c.l.s4 1966171168
    %v3305 = vunpack.c.0.s8 %v3304
    %v3306 = vlaneseq
    %v3307 = vshrl.u32 %v3306, 7
    %v3308 = vsub.s32 %v3305, %v3307
    %v3309 = vrot.slane %v3281, %v3308
    %v3310 = vcombine.low %v3288, %v3295
    %v3311 = vcombine.low %v3302, %v3309
    %v3313 = vunpack.c.l.s4 1966171168
    %v3314 = vunpack.c.0.s8 %v3313
    %v3315 = vlaneseq
    %v3316 = vshrl.u32 %v3315, 7
    %v3317 = vsub.s32 %v3314, %v3316
    %v3318 = vrot.slane %v3310, %v3317
    %v3320 = vunpack.c.l.s4 1966171168
    %v3321 = vunpack.c.0.s8 %v3320
    %v3322 = vlaneseq
    %v3323 = vshrl.u32 %v3322, 7
    %v3324 = vsub.s32 %v3321, %v3323
    %v3325 = vrot.slane %v3311, %v3324
    %v3326 = vcombine.low %v3318, %v3325
    %v3327 = vcombine.low %v2102, %v2106
    %v3328 = vcombine.low %v2110, %v2114
    %v3329 = vcombine.low %v2118, %v2122
    %v3330 = vcombine.low %v2126, %v2130
    %v3332 = vunpack.c.l.s4 1966171168
    %v3333 = vunpack.c.0.s8 %v3332
    %v3334 = vlaneseq
    %v3335 = vshrl.u32 %v3334, 7
    %v3336 = vsub.s32 %v3333, %v3335
    %v3337 = vrot.slane %v3327, %v3336
    %v3339 = vunpack.c.l.s4 1966171168
    %v3340 = vunpack.c.0.s8 %v3339
    %v3341 = vlaneseq
    %v3342 = vshrl.u32 %v3341, 7
    %v3343 = vsub.s32 %v3340, %v3342
    %v3344 = vrot.slane %v3328, %v3343
    %v3346 = vunpack.c.l.s4 1966171168
    %v3347 = vunpack.c.0.s8 %v3346
    %v3348 = vlaneseq
    %v3349 = vshrl.u32 %v3348, 7
    %v3350 = vsub.s32 %v3347, %v3349
    %v3351 = vrot.slane %v3329, %v3350
    %v3353 = vunpack.c.l.s4 1966171168
    %v3354 = vunpack.c.0.s8 %v3353
    %v3355 = vlaneseq
    %v3356 = vshrl.u32 %v3355, 7
    %v3357 = vsub.s32 %v3354, %v3356
    %v3358 = vrot.slane %v3330, %v3357
    %v3359 = vcombine.low %v3337, %v3344
    %v3360 = vcombine.low %v3351, %v3358
    %v3362 = vunpack.c.l.s4 1966171168
    %v3363 = vunpack.c.0.s8 %v3362
    %v3364 = vlaneseq
    %v3365 = vshrl.u32 %v3364, 7
    %v3366 = vsub.s32 %v3363, %v3365
    %v3367 = vrot.slane %v3359, %v3366
    %v3369 = vunpack.c.l.s4 1966171168
    %v3370 = vunpack.c.0.s8 %v3369
    %v3371 = vlaneseq
    %v3372 = vshrl.u32 %v3371, 7
    %v3373 = vsub.s32 %v3370, %v3372
    %v3374 = vrot.slane %v3360, %v3373
    %v3375 = vcombine.low %v3367, %v3374
    %v3376 = vcombine.low %v2134, %v2138
    %v3377 = vcombine.low %v2142, %v2146
    %v3378 = vcombine.low %v2150, %v2154
    %v3379 = vcombine.low %v2158, %v2162
    %v3381 = vunpack.c.l.s4 1966171168
    %v3382 = vunpack.c.0.s8 %v3381
    %v3383 = vlaneseq
    %v3384 = vshrl.u32 %v3383, 7
    %v3385 = vsub.s32 %v3382, %v3384
    %v3386 = vrot.slane %v3376, %v3385
    %v3388 = vunpack.c.l.s4 1966171168
    %v3389 = vunpack.c.0.s8 %v3388
    %v3390 = vlaneseq
    %v3391 = vshrl.u32 %v3390, 7
    %v3392 = vsub.s32 %v3389, %v3391
    %v3393 = vrot.slane %v3377, %v3392
    %v3395 = vunpack.c.l.s4 1966171168
    %v3396 = vunpack.c.0.s8 %v3395
    %v3397 = vlaneseq
    %v3398 = vshrl.u32 %v3397, 7
    %v3399 = vsub.s32 %v3396, %v3398
    %v3400 = vrot.slane %v3378, %v3399
    %v3402 = vunpack.c.l.s4 1966171168
    %v3403 = vunpack.c.0.s8 %v3402
    %v3404 = vlaneseq
    %v3405 = vshrl.u32 %v3404, 7
    %v3406 = vsub.s32 %v3403, %v3405
    %v3407 = vrot.slane %v3379, %v3406
    %v3408 = vcombine.low %v3386, %v3393
    %v3409 = vcombine.low %v3400, %v3407
    %v3411 = vunpack.c.l.s4 1966171168
    %v3412 = vunpack.c.0.s8 %v3411
    %v3413 = vlaneseq
    %v3414 = vshrl.u32 %v3413, 7
    %v3415 = vsub.s32 %v3412, %v3414
    %v3416 = vrot.slane %v3408, %v3415
    %v3418 = vunpack.c.l.s4 1966171168
    %v3419 = vunpack.c.0.s8 %v3418
    %v3420 = vlaneseq
    %v3421 = vshrl.u32 %v3420, 7
    %v3422 = vsub.s32 %v3419, %v3421
    %v3423 = vrot.slane %v3409, %v3422
    %v3424 = vcombine.low %v3416, %v3423
    %v3425 = vcombine.low %v2166, %v2170
    %v3426 = vcombine.low %v2174, %v2178
    %v3427 = vcombine.low %v2182, %v2186
    %v3428 = vcombine.low %v2190, %v2194
    %v3430 = vunpack.c.l.s4 1966171168
    %v3431 = vunpack.c.0.s8 %v3430
    %v3432 = vlaneseq
    %v3433 = vshrl.u32 %v3432, 7
    %v3434 = vsub.s32 %v3431, %v3433
    %v3435 = vrot.slane %v3425, %v3434
    %v3437 = vunpack.c.l.s4 1966171168
    %v3438 = vunpack.c.0.s8 %v3437
    %v3439 = vlaneseq
    %v3440 = vshrl.u32 %v3439, 7
    %v3441 = vsub.s32 %v3438, %v3440
    %v3442 = vrot.slane %v3426, %v3441
    %v3444 = vunpack.c.l.s4 1966171168
    %v3445 = vunpack.c.0.s8 %v3444
    %v3446 = vlaneseq
    %v3447 = vshrl.u32 %v3446, 7
    %v3448 = vsub.s32 %v3445, %v3447
    %v3449 = vrot.slane %v3427, %v3448
    %v3451 = vunpack.c.l.s4 1966171168
    %v3452 = vunpack.c.0.s8 %v3451
    %v3453 = vlaneseq
    %v3454 = vshrl.u32 %v3453, 7
    %v3455 = vsub.s32 %v3452, %v3454
    %v3456 = vrot.slane %v3428, %v3455
    %v3457 = vcombine.low %v3435, %v3442
    %v3458 = vcombine.low %v3449, %v3456
    %v3460 = vunpack.c.l.s4 1966171168
    %v3461 = vunpack.c.0.s8 %v3460
    %v3462 = vlaneseq
    %v3463 = vshrl.u32 %v3462, 7
    %v3464 = vsub.s32 %v3461, %v3463
    %v3465 = vrot.slane %v3457, %v3464
    %v3467 = vunpack.c.l.s4 1966171168
    %v3468 = vunpack.c.0.s8 %v3467
    %v3469 = vlaneseq
    %v3470 = vshrl.u32 %v3469, 7
    %v3471 = vsub.s32 %v3468, %v3470
    %v3472 = vrot.slane %v3458, %v3471
    %v3473 = vcombine.low %v3465, %v3472
    %v3474 = vcombine.low %v2198, %v2202
    %v3475 = vcombine.low %v2206, %v2210
    %v3476 = vcombine.low %v2214, %v2218
    %v3477 = vcombine.low %v2222, %v2226
    %v3479 = vunpack.c.l.s4 1966171168
    %v3480 = vunpack.c.0.s8 %v3479
    %v3481 = vlaneseq
    %v3482 = vshrl.u32 %v3481, 7
    %v3483 = vsub.s32 %v3480, %v3482
    %v3484 = vrot.slane %v3474, %v3483
    %v3486 = vunpack.c.l.s4 1966171168
    %v3487 = vunpack.c.0.s8 %v3486
    %v3488 = vlaneseq
    %v3489 = vshrl.u32 %v3488, 7
    %v3490 = vsub.s32 %v3487, %v3489
    %v3491 = vrot.slane %v3475, %v3490
    %v3493 = vunpack.c.l.s4 1966171168
    %v3494 = vunpack.c.0.s8 %v3493
    %v3495 = vlaneseq
    %v3496 = vshrl.u32 %v3495, 7
    %v3497 = vsub.s32 %v3494, %v3496
    %v3498 = vrot.slane %v3476, %v3497
    %v3500 = vunpack.c.l.s4 1966171168
    %v3501 = vunpack.c.0.s8 %v3500
    %v3502 = vlaneseq
    %v3503 = vshrl.u32 %v3502, 7
    %v3504 = vsub.s32 %v3501, %v3503
    %v3505 = vrot.slane %v3477, %v3504
    %v3506 = vcombine.low %v3484, %v3491
    %v3507 = vcombine.low %v3498, %v3505
    %v3509 = vunpack.c.l.s4 1966171168
    %v3510 = vunpack.c.0.s8 %v3509
    %v3511 = vlaneseq
    %v3512 = vshrl.u32 %v3511, 7
    %v3513 = vsub.s32 %v3510, %v3512
    %v3514 = vrot.slane %v3506, %v3513
    %v3516 = vunpack.c.l.s4 1966171168
    %v3517 = vunpack.c.0.s8 %v3516
    %v3518 = vlaneseq
    %v3519 = vshrl.u32 %v3518, 7
    %v3520 = vsub.s32 %v3517, %v3519
    %v3521 = vrot.slane %v3507, %v3520
    %v3522 = vcombine.low %v3514, %v3521
    %v3523 = vcombine.low %v2230, %v2234
    %v3524 = vcombine.low %v2238, %v2242
    %v3525 = vcombine.low %v2246, %v2250
    %v3526 = vcombine.low %v2254, %v2258
    %v3528 = vunpack.c.l.s4 1966171168
    %v3529 = vunpack.c.0.s8 %v3528
    %v3530 = vlaneseq
    %v3531 = vshrl.u32 %v3530, 7
    %v3532 = vsub.s32 %v3529, %v3531
    %v3533 = vrot.slane %v3523, %v3532
    %v3535 = vunpack.c.l.s4 1966171168
    %v3536 = vunpack.c.0.s8 %v3535
    %v3537 = vlaneseq
    %v3538 = vshrl.u32 %v3537, 7
    %v3539 = vsub.s32 %v3536, %v3538
    %v3540 = vrot.slane %v3524, %v3539
    %v3542 = vunpack.c.l.s4 1966171168
    %v3543 = vunpack.c.0.s8 %v3542
    %v3544 = vlaneseq
    %v3545 = vshrl.u32 %v3544, 7
    %v3546 = vsub.s32 %v3543, %v3545
    %v3547 = vrot.slane %v3525, %v3546
    %v3549 = vunpack.c.l.s4 1966171168
    %v3550 = vunpack.c.0.s8 %v3549
    %v3551 = vlaneseq
    %v3552 = vshrl.u32 %v3551, 7
    %v3553 = vsub.s32 %v3550, %v3552
    %v3554 = vrot.slane %v3526, %v3553
    %v3555 = vcombine.low %v3533, %v3540
    %v3556 = vcombine.low %v3547, %v3554
    %v3558 = vunpack.c.l.s4 1966171168
    %v3559 = vunpack.c.0.s8 %v3558
    %v3560 = vlaneseq
    %v3561 = vshrl.u32 %v3560, 7
    %v3562 = vsub.s32 %v3559, %v3561
    %v3563 = vrot.slane %v3555, %v3562
    %v3565 = vunpack.c.l.s4 1966171168
    %v3566 = vunpack.c.0.s8 %v3565
    %v3567 = vlaneseq
    %v3568 = vshrl.u32 %v3567, 7
    %v3569 = vsub.s32 %v3566, %v3568
    %v3570 = vrot.slane %v3556, %v3569
    %v3571 = vcombine.low %v3563, %v3570
    %v3572 = vcombine.low %v2262, %v2266
    %v3573 = vcombine.low %v2270, %v2274
    %v3574 = vcombine.low %v2278, %v2282
    %v3575 = vcombine.low %v2286, %v2290
    %v3577 = vunpack.c.l.s4 1966171168
    %v3578 = vunpack.c.0.s8 %v3577
    %v3579 = vlaneseq
    %v3580 = vshrl.u32 %v3579, 7
    %v3581 = vsub.s32 %v3578, %v3580
    %v3582 = vrot.slane %v3572, %v3581
    %v3584 = vunpack.c.l.s4 1966171168
    %v3585 = vunpack.c.0.s8 %v3584
    %v3586 = vlaneseq
    %v3587 = vshrl.u32 %v3586, 7
    %v3588 = vsub.s32 %v3585, %v3587
    %v3589 = vrot.slane %v3573, %v3588
    %v3591 = vunpack.c.l.s4 1966171168
    %v3592 = vunpack.c.0.s8 %v3591
    %v3593 = vlaneseq
    %v3594 = vshrl.u32 %v3593, 7
    %v3595 = vsub.s32 %v3592, %v3594
    %v3596 = vrot.slane %v3574, %v3595
    %v3598 = vunpack.c.l.s4 1966171168
    %v3599 = vunpack.c.0.s8 %v3598
    %v3600 = vlaneseq
    %v3601 = vshrl.u32 %v3600, 7
    %v3602 = vsub.s32 %v3599, %v3601
    %v3603 = vrot.slane %v3575, %v3602
    %v3604 = vcombine.low %v3582, %v3589
    %v3605 = vcombine.low %v3596, %v3603
    %v3607 = vunpack.c.l.s4 1966171168
    %v3608 = vunpack.c.0.s8 %v3607
    %v3609 = vlaneseq
    %v3610 = vshrl.u32 %v3609, 7
    %v3611 = vsub.s32 %v3608, %v3610
    %v3612 = vrot.slane %v3604, %v3611
    %v3614 = vunpack.c.l.s4 1966171168
    %v3615 = vunpack.c.0.s8 %v3614
    %v3616 = vlaneseq
    %v3617 = vshrl.u32 %v3616, 7
    %v3618 = vsub.s32 %v3615, %v3617
    %v3619 = vrot.slane %v3605, %v3618
    %v3620 = vcombine.low %v3612, %v3619
    %v3621 = vcombine.low %v2294, %v2298
    %v3622 = vcombine.low %v2302, %v2306
    %v3623 = vcombine.low %v2310, %v2314
    %v3624 = vcombine.low %v2318, %v2322
    %v3626 = vunpack.c.l.s4 1966171168
    %v3627 = vunpack.c.0.s8 %v3626
    %v3628 = vlaneseq
    %v3629 = vshrl.u32 %v3628, 7
    %v3630 = vsub.s32 %v3627, %v3629
    %v3631 = vrot.slane %v3621, %v3630
    %v3633 = vunpack.c.l.s4 1966171168
    %v3634 = vunpack.c.0.s8 %v3633
    %v3635 = vlaneseq
    %v3636 = vshrl.u32 %v3635, 7
    %v3637 = vsub.s32 %v3634, %v3636
    %v3638 = vrot.slane %v3622, %v3637
    %v3640 = vunpack.c.l.s4 1966171168
    %v3641 = vunpack.c.0.s8 %v3640
    %v3642 = vlaneseq
    %v3643 = vshrl.u32 %v3642, 7
    %v3644 = vsub.s32 %v3641, %v3643
    %v3645 = vrot.slane %v3623, %v3644
    %v3647 = vunpack.c.l.s4 1966171168
    %v3648 = vunpack.c.0.s8 %v3647
    %v3649 = vlaneseq
    %v3650 = vshrl.u32 %v3649, 7
    %v3651 = vsub.s32 %v3648, %v3650
    %v3652 = vrot.slane %v3624, %v3651
    %v3653 = vcombine.low %v3631, %v3638
    %v3654 = vcombine.low %v3645, %v3652
    %v3656 = vunpack.c.l.s4 1966171168
    %v3657 = vunpack.c.0.s8 %v3656
    %v3658 = vlaneseq
    %v3659 = vshrl.u32 %v3658, 7
    %v3660 = vsub.s32 %v3657, %v3659
    %v3661 = vrot.slane %v3653, %v3660
    %v3663 = vunpack.c.l.s4 1966171168
    %v3664 = vunpack.c.0.s8 %v3663
    %v3665 = vlaneseq
    %v3666 = vshrl.u32 %v3665, 7
    %v3667 = vsub.s32 %v3664, %v3666
    %v3668 = vrot.slane %v3654, %v3667
    %v3669 = vcombine.low %v3661, %v3668
    %v3670 = vcombine.low %v2326, %v2330
    %v3671 = vcombine.low %v2334, %v2338
    %v3672 = vcombine.low %v2342, %v2346
    %v3673 = vcombine.low %v2350, %v2354
    %v3675 = vunpack.c.l.s4 1966171168
    %v3676 = vunpack.c.0.s8 %v3675
    %v3677 = vlaneseq
    %v3678 = vshrl.u32 %v3677, 7
    %v3679 = vsub.s32 %v3676, %v3678
    %v3680 = vrot.slane %v3670, %v3679
    %v3682 = vunpack.c.l.s4 1966171168
    %v3683 = vunpack.c.0.s8 %v3682
    %v3684 = vlaneseq
    %v3685 = vshrl.u32 %v3684, 7
    %v3686 = vsub.s32 %v3683, %v3685
    %v3687 = vrot.slane %v3671, %v3686
    %v3689 = vunpack.c.l.s4 1966171168
    %v3690 = vunpack.c.0.s8 %v3689
    %v3691 = vlaneseq
    %v3692 = vshrl.u32 %v3691, 7
    %v3693 = vsub.s32 %v3690, %v3692
    %v3694 = vrot.slane %v3672, %v3693
    %v3696 = vunpack.c.l.s4 1966171168
    %v3697 = vunpack.c.0.s8 %v3696
    %v3698 = vlaneseq
    %v3699 = vshrl.u32 %v3698, 7
    %v3700 = vsub.s32 %v3697, %v3699
    %v3701 = vrot.slane %v3673, %v3700
    %v3702 = vcombine.low %v3680, %v3687
    %v3703 = vcombine.low %v3694, %v3701
    %v3705 = vunpack.c.l.s4 1966171168
    %v3706 = vunpack.c.0.s8 %v3705
    %v3707 = vlaneseq
    %v3708 = vshrl.u32 %v3707, 7
    %v3709 = vsub.s32 %v3706, %v3708
    %v3710 = vrot.slane %v3702, %v3709
    %v3712 = vunpack.c.l.s4 1966171168
    %v3713 = vunpack.c.0.s8 %v3712
    %v3714 = vlaneseq
    %v3715 = vshrl.u32 %v3714, 7
    %v3716 = vsub.s32 %v3713, %v3715
    %v3717 = vrot.slane %v3703, %v3716
    %v3718 = vcombine.low %v3710, %v3717
    %v3719 = vcombine.low %v2358, %v2362
    %v3720 = vcombine.low %v2366, %v2370
    %v3721 = vcombine.low %v2374, %v2378
    %v3722 = vcombine.low %v2382, %v2386
    %v3724 = vunpack.c.l.s4 1966171168
    %v3725 = vunpack.c.0.s8 %v3724
    %v3726 = vlaneseq
    %v3727 = vshrl.u32 %v3726, 7
    %v3728 = vsub.s32 %v3725, %v3727
    %v3729 = vrot.slane %v3719, %v3728
    %v3731 = vunpack.c.l.s4 1966171168
    %v3732 = vunpack.c.0.s8 %v3731
    %v3733 = vlaneseq
    %v3734 = vshrl.u32 %v3733, 7
    %v3735 = vsub.s32 %v3732, %v3734
    %v3736 = vrot.slane %v3720, %v3735
    %v3738 = vunpack.c.l.s4 1966171168
    %v3739 = vunpack.c.0.s8 %v3738
    %v3740 = vlaneseq
    %v3741 = vshrl.u32 %v3740, 7
    %v3742 = vsub.s32 %v3739, %v3741
    %v3743 = vrot.slane %v3721, %v3742
    %v3745 = vunpack.c.l.s4 1966171168
    %v3746 = vunpack.c.0.s8 %v3745
    %v3747 = vlaneseq
    %v3748 = vshrl.u32 %v3747, 7
    %v3749 = vsub.s32 %v3746, %v3748
    %v3750 = vrot.slane %v3722, %v3749
    %v3751 = vcombine.low %v3729, %v3736
    %v3752 = vcombine.low %v3743, %v3750
    %v3754 = vunpack.c.l.s4 1966171168
    %v3755 = vunpack.c.0.s8 %v3754
    %v3756 = vlaneseq
    %v3757 = vshrl.u32 %v3756, 7
    %v3758 = vsub.s32 %v3755, %v3757
    %v3759 = vrot.slane %v3751, %v3758
    %v3761 = vunpack.c.l.s4 1966171168
    %v3762 = vunpack.c.0.s8 %v3761
    %v3763 = vlaneseq
    %v3764 = vshrl.u32 %v3763, 7
    %v3765 = vsub.s32 %v3762, %v3764
    %v3766 = vrot.slane %v3752, %v3765
    %v3767 = vcombine.low %v3759, %v3766
    %v3768 = vcombine.low %v2390, %v2394
    %v3769 = vcombine.low %v2398, %v2402
    %v3770 = vcombine.low %v2406, %v2410
    %v3771 = vcombine.low %v2414, %v2418
    %v3773 = vunpack.c.l.s4 1966171168
    %v3774 = vunpack.c.0.s8 %v3773
    %v3775 = vlaneseq
    %v3776 = vshrl.u32 %v3775, 7
    %v3777 = vsub.s32 %v3774, %v3776
    %v3778 = vrot.slane %v3768, %v3777
    %v3780 = vunpack.c.l.s4 1966171168
    %v3781 = vunpack.c.0.s8 %v3780
    %v3782 = vlaneseq
    %v3783 = vshrl.u32 %v3782, 7
    %v3784 = vsub.s32 %v3781, %v3783
    %v3785 = vrot.slane %v3769, %v3784
    %v3787 = vunpack.c.l.s4 1966171168
    %v3788 = vunpack.c.0.s8 %v3787
    %v3789 = vlaneseq
    %v3790 = vshrl.u32 %v3789, 7
    %v3791 = vsub.s32 %v3788, %v3790
    %v3792 = vrot.slane %v3770, %v3791
    %v3794 = vunpack.c.l.s4 1966171168
    %v3795 = vunpack.c.0.s8 %v3794
    %v3796 = vlaneseq
    %v3797 = vshrl.u32 %v3796, 7
    %v3798 = vsub.s32 %v3795, %v3797
    %v3799 = vrot.slane %v3771, %v3798
    %v3800 = vcombine.low %v3778, %v3785
    %v3801 = vcombine.low %v3792, %v3799
    %v3803 = vunpack.c.l.s4 1966171168
    %v3804 = vunpack.c.0.s8 %v3803
    %v3805 = vlaneseq
    %v3806 = vshrl.u32 %v3805, 7
    %v3807 = vsub.s32 %v3804, %v3806
    %v3808 = vrot.slane %v3800, %v3807
    %v3810 = vunpack.c.l.s4 1966171168
    %v3811 = vunpack.c.0.s8 %v3810
    %v3812 = vlaneseq
    %v3813 = vshrl.u32 %v3812, 7
    %v3814 = vsub.s32 %v3811, %v3813
    %v3815 = vrot.slane %v3801, %v3814
    %v3816 = vcombine.low %v3808, %v3815
    %v3817 = vcombine.low %v2422, %v2426
    %v3818 = vcombine.low %v2430, %v2434
    %v3819 = vcombine.low %v2438, %v2442
    %v3820 = vcombine.low %v2446, %v2450
    %v3822 = vunpack.c.l.s4 1966171168
    %v3823 = vunpack.c.0.s8 %v3822
    %v3824 = vlaneseq
    %v3825 = vshrl.u32 %v3824, 7
    %v3826 = vsub.s32 %v3823, %v3825
    %v3827 = vrot.slane %v3817, %v3826
    %v3829 = vunpack.c.l.s4 1966171168
    %v3830 = vunpack.c.0.s8 %v3829
    %v3831 = vlaneseq
    %v3832 = vshrl.u32 %v3831, 7
    %v3833 = vsub.s32 %v3830, %v3832
    %v3834 = vrot.slane %v3818, %v3833
    %v3836 = vunpack.c.l.s4 1966171168
    %v3837 = vunpack.c.0.s8 %v3836
    %v3838 = vlaneseq
    %v3839 = vshrl.u32 %v3838, 7
    %v3840 = vsub.s32 %v3837, %v3839
    %v3841 = vrot.slane %v3819, %v3840
    %v3843 = vunpack.c.l.s4 1966171168
    %v3844 = vunpack.c.0.s8 %v3843
    %v3845 = vlaneseq
    %v3846 = vshrl.u32 %v3845, 7
    %v3847 = vsub.s32 %v3844, %v3846
    %v3848 = vrot.slane %v3820, %v3847
    %v3849 = vcombine.low %v3827, %v3834
    %v3850 = vcombine.low %v3841, %v3848
    %v3852 = vunpack.c.l.s4 1966171168
    %v3853 = vunpack.c.0.s8 %v3852
    %v3854 = vlaneseq
    %v3855 = vshrl.u32 %v3854, 7
    %v3856 = vsub.s32 %v3853, %v3855
    %v3857 = vrot.slane %v3849, %v3856
    %v3859 = vunpack.c.l.s4 1966171168
    %v3860 = vunpack.c.0.s8 %v3859
    %v3861 = vlaneseq
    %v3862 = vshrl.u32 %v3861, 7
    %v3863 = vsub.s32 %v3860, %v3862
    %v3864 = vrot.slane %v3850, %v3863
    %v3865 = vcombine.low %v3857, %v3864
    %v3866 = vcombine.low %v2454, %v2458
    %v3867 = vcombine.low %v2462, %v2466
    %v3868 = vcombine.low %v2470, %v2474
    %v3869 = vcombine.low %v2478, %v2482
    %v3871 = vunpack.c.l.s4 1966171168
    %v3872 = vunpack.c.0.s8 %v3871
    %v3873 = vlaneseq
    %v3874 = vshrl.u32 %v3873, 7
    %v3875 = vsub.s32 %v3872, %v3874
    %v3876 = vrot.slane %v3866, %v3875
    %v3878 = vunpack.c.l.s4 1966171168
    %v3879 = vunpack.c.0.s8 %v3878
    %v3880 = vlaneseq
    %v3881 = vshrl.u32 %v3880, 7
    %v3882 = vsub.s32 %v3879, %v3881
    %v3883 = vrot.slane %v3867, %v3882
    %v3885 = vunpack.c.l.s4 1966171168
    %v3886 = vunpack.c.0.s8 %v3885
    %v3887 = vlaneseq
    %v3888 = vshrl.u32 %v3887, 7
    %v3889 = vsub.s32 %v3886, %v3888
    %v3890 = vrot.slane %v3868, %v3889
    %v3892 = vunpack.c.l.s4 1966171168
    %v3893 = vunpack.c.0.s8 %v3892
    %v3894 = vlaneseq
    %v3895 = vshrl.u32 %v3894, 7
    %v3896 = vsub.s32 %v3893, %v3895
    %v3897 = vrot.slane %v3869, %v3896
    %v3898 = vcombine.low %v3876, %v3883
    %v3899 = vcombine.low %v3890, %v3897
    %v3901 = vunpack.c.l.s4 1966171168
    %v3902 = vunpack.c.0.s8 %v3901
    %v3903 = vlaneseq
    %v3904 = vshrl.u32 %v3903, 7
    %v3905 = vsub.s32 %v3902, %v3904
    %v3906 = vrot.slane %v3898, %v3905
    %v3908 = vunpack.c.l.s4 1966171168
    %v3909 = vunpack.c.0.s8 %v3908
    %v3910 = vlaneseq
    %v3911 = vshrl.u32 %v3910, 7
    %v3912 = vsub.s32 %v3909, %v3911
    %v3913 = vrot.slane %v3899, %v3912
    %v3914 = vcombine.low %v3906, %v3913
    %v3915 = vcombine.low %v2486, %v2490
    %v3916 = vcombine.low %v2494, %v2498
    %v3917 = vcombine.low %v2502, %v2506
    %v3918 = vcombine.low %v2510, %v2514
    %v3920 = vunpack.c.l.s4 1966171168
    %v3921 = vunpack.c.0.s8 %v3920
    %v3922 = vlaneseq
    %v3923 = vshrl.u32 %v3922, 7
    %v3924 = vsub.s32 %v3921, %v3923
    %v3925 = vrot.slane %v3915, %v3924
    %v3927 = vunpack.c.l.s4 1966171168
    %v3928 = vunpack.c.0.s8 %v3927
    %v3929 = vlaneseq
    %v3930 = vshrl.u32 %v3929, 7
    %v3931 = vsub.s32 %v3928, %v3930
    %v3932 = vrot.slane %v3916, %v3931
    %v3934 = vunpack.c.l.s4 1966171168
    %v3935 = vunpack.c.0.s8 %v3934
    %v3936 = vlaneseq
    %v3937 = vshrl.u32 %v3936, 7
    %v3938 = vsub.s32 %v3935, %v3937
    %v3939 = vrot.slane %v3917, %v3938
    %v3941 = vunpack.c.l.s4 1966171168
    %v3942 = vunpack.c.0.s8 %v3941
    %v3943 = vlaneseq
    %v3944 = vshrl.u32 %v3943, 7
    %v3945 = vsub.s32 %v3942, %v3944
    %v3946 = vrot.slane %v3918, %v3945
    %v3947 = vcombine.low %v3925, %v3932
    %v3948 = vcombine.low %v3939, %v3946
    %v3950 = vunpack.c.l.s4 1966171168
    %v3951 = vunpack.c.0.s8 %v3950
    %v3952 = vlaneseq
    %v3953 = vshrl.u32 %v3952, 7
    %v3954 = vsub.s32 %v3951, %v3953
    %v3955 = vrot.slane %v3947, %v3954
    %v3957 = vunpack.c.l.s4 1966171168
    %v3958 = vunpack.c.0.s8 %v3957
    %v3959 = vlaneseq
    %v3960 = vshrl.u32 %v3959, 7
    %v3961 = vsub.s32 %v3958, %v3960
    %v3962 = vrot.slane %v3948, %v3961
    %v3963 = vcombine.low %v3955, %v3962
    %v3964 = vcombine.low %v2518, %v2522
    %v3965 = vcombine.low %v2526, %v2530
    %v3966 = vcombine.low %v2534, %v2538
    %v3967 = vcombine.low %v2542, %v2546
    %v3969 = vunpack.c.l.s4 1966171168
    %v3970 = vunpack.c.0.s8 %v3969
    %v3971 = vlaneseq
    %v3972 = vshrl.u32 %v3971, 7
    %v3973 = vsub.s32 %v3970, %v3972
    %v3974 = vrot.slane %v3964, %v3973
    %v3976 = vunpack.c.l.s4 1966171168
    %v3977 = vunpack.c.0.s8 %v3976
    %v3978 = vlaneseq
    %v3979 = vshrl.u32 %v3978, 7
    %v3980 = vsub.s32 %v3977, %v3979
    %v3981 = vrot.slane %v3965, %v3980
    %v3983 = vunpack.c.l.s4 1966171168
    %v3984 = vunpack.c.0.s8 %v3983
    %v3985 = vlaneseq
    %v3986 = vshrl.u32 %v3985, 7
    %v3987 = vsub.s32 %v3984, %v3986
    %v3988 = vrot.slane %v3966, %v3987
    %v3990 = vunpack.c.l.s4 1966171168
    %v3991 = vunpack.c.0.s8 %v3990
    %v3992 = vlaneseq
    %v3993 = vshrl.u32 %v3992, 7
    %v3994 = vsub.s32 %v3991, %v3993
    %v3995 = vrot.slane %v3967, %v3994
    %v3996 = vcombine.low %v3974, %v3981
    %v3997 = vcombine.low %v3988, %v3995
    %v3999 = vunpack.c.l.s4 1966171168
    %v4000 = vunpack.c.0.s8 %v3999
    %v4001 = vlaneseq
    %v4002 = vshrl.u32 %v4001, 7
    %v4003 = vsub.s32 %v4000, %v4002
    %v4004 = vrot.slane %v3996, %v4003
    %v4006 = vunpack.c.l.s4 1966171168
    %v4007 = vunpack.c.0.s8 %v4006
    %v4008 = vlaneseq
    %v4009 = vshrl.u32 %v4008, 7
    %v4010 = vsub.s32 %v4007, %v4009
    %v4011 = vrot.slane %v3997, %v4010
    %v4012 = vcombine.low %v4004, %v4011
    %v4013 = vcombine.low %v2550, %v2554
    %v4014 = vcombine.low %v2558, %v2562
    %v4015 = vcombine.low %v2566, %v2570
    %v4016 = vcombine.low %v2574, %v2578
    %v4018 = vunpack.c.l.s4 1966171168
    %v4019 = vunpack.c.0.s8 %v4018
    %v4020 = vlaneseq
    %v4021 = vshrl.u32 %v4020, 7
    %v4022 = vsub.s32 %v4019, %v4021
    %v4023 = vrot.slane %v4013, %v4022
    %v4025 = vunpack.c.l.s4 1966171168
    %v4026 = vunpack.c.0.s8 %v4025
    %v4027 = vlaneseq
    %v4028 = vshrl.u32 %v4027, 7
    %v4029 = vsub.s32 %v4026, %v4028
    %v4030 = vrot.slane %v4014, %v4029
    %v4032 = vunpack.c.l.s4 1966171168
    %v4033 = vunpack.c.0.s8 %v4032
    %v4034 = vlaneseq
    %v4035 = vshrl.u32 %v4034, 7
    %v4036 = vsub.s32 %v4033, %v4035
    %v4037 = vrot.slane %v4015, %v4036
    %v4039 = vunpack.c.l.s4 1966171168
    %v4040 = vunpack.c.0.s8 %v4039
    %v4041 = vlaneseq
    %v4042 = vshrl.u32 %v4041, 7
    %v4043 = vsub.s32 %v4040, %v4042
    %v4044 = vrot.slane %v4016, %v4043
    %v4045 = vcombine.low %v4023, %v4030
    %v4046 = vcombine.low %v4037, %v4044
    %v4048 = vunpack.c.l.s4 1966171168
    %v4049 = vunpack.c.0.s8 %v4048
    %v4050 = vlaneseq
    %v4051 = vshrl.u32 %v4050, 7
    %v4052 = vsub.s32 %v4049, %v4051
    %v4053 = vrot.slane %v4045, %v4052
    %v4055 = vunpack.c.l.s4 1966171168
    %v4056 = vunpack.c.0.s8 %v4055
    %v4057 = vlaneseq
    %v4058 = vshrl.u32 %v4057, 7
    %v4059 = vsub.s32 %v4056, %v4058
    %v4060 = vrot.slane %v4046, %v4059
    %v4061 = vcombine.low %v4053, %v4060
    %v4062 = vcombine.low %v2582, %v2586
    %v4063 = vcombine.low %v2590, %v2594
    %v4064 = vcombine.low %v2598, %v2602
    %v4065 = vcombine.low %v2606, %v2610
    %v4067 = vunpack.c.l.s4 1966171168
    %v4068 = vunpack.c.0.s8 %v4067
    %v4069 = vlaneseq
    %v4070 = vshrl.u32 %v4069, 7
    %v4071 = vsub.s32 %v4068, %v4070
    %v4072 = vrot.slane %v4062, %v4071
    %v4074 = vunpack.c.l.s4 1966171168
    %v4075 = vunpack.c.0.s8 %v4074
    %v4076 = vlaneseq
    %v4077 = vshrl.u32 %v4076, 7
    %v4078 = vsub.s32 %v4075, %v4077
    %v4079 = vrot.slane %v4063, %v4078
    %v4081 = vunpack.c.l.s4 1966171168
    %v4082 = vunpack.c.0.s8 %v4081
    %v4083 = vlaneseq
    %v4084 = vshrl.u32 %v4083, 7
    %v4085 = vsub.s32 %v4082, %v4084
    %v4086 = vrot.slane %v4064, %v4085
    %v4088 = vunpack.c.l.s4 1966171168
    %v4089 = vunpack.c.0.s8 %v4088
    %v4090 = vlaneseq
    %v4091 = vshrl.u32 %v4090, 7
    %v4092 = vsub.s32 %v4089, %v4091
    %v4093 = vrot.slane %v4065, %v4092
    %v4094 = vcombine.low %v4072, %v4079
    %v4095 = vcombine.low %v4086, %v4093
    %v4097 = vunpack.c.l.s4 1966171168
    %v4098 = vunpack.c.0.s8 %v4097
    %v4099 = vlaneseq
    %v4100 = vshrl.u32 %v4099, 7
    %v4101 = vsub.s32 %v4098, %v4100
    %v4102 = vrot.slane %v4094, %v4101
    %v4104 = vunpack.c.l.s4 1966171168
    %v4105 = vunpack.c.0.s8 %v4104
    %v4106 = vlaneseq
    %v4107 = vshrl.u32 %v4106, 7
    %v4108 = vsub.s32 %v4105, %v4107
    %v4109 = vrot.slane %v4095, %v4108
    %v4110 = vcombine.low %v4102, %v4109
    %v4111 = vcombine.low %v2614, %v2618
    %v4112 = vcombine.low %v2622, %v2626
    %v4113 = vcombine.low %v2630, %v2634
    %v4114 = vcombine.low %v2638, %v2642
    %v4116 = vunpack.c.l.s4 1966171168
    %v4117 = vunpack.c.0.s8 %v4116
    %v4118 = vlaneseq
    %v4119 = vshrl.u32 %v4118, 7
    %v4120 = vsub.s32 %v4117, %v4119
    %v4121 = vrot.slane %v4111, %v4120
    %v4123 = vunpack.c.l.s4 1966171168
    %v4124 = vunpack.c.0.s8 %v4123
    %v4125 = vlaneseq
    %v4126 = vshrl.u32 %v4125, 7
    %v4127 = vsub.s32 %v4124, %v4126
    %v4128 = vrot.slane %v4112, %v4127
    %v4130 = vunpack.c.l.s4 1966171168
    %v4131 = vunpack.c.0.s8 %v4130
    %v4132 = vlaneseq
    %v4133 = vshrl.u32 %v4132, 7
    %v4134 = vsub.s32 %v4131, %v4133
    %v4135 = vrot.slane %v4113, %v4134
    %v4137 = vunpack.c.l.s4 1966171168
    %v4138 = vunpack.c.0.s8 %v4137
    %v4139 = vlaneseq
    %v4140 = vshrl.u32 %v4139, 7
    %v4141 = vsub.s32 %v4138, %v4140
    %v4142 = vrot.slane %v4114, %v4141
    %v4143 = vcombine.low %v4121, %v4128
    %v4144 = vcombine.low %v4135, %v4142
    %v4146 = vunpack.c.l.s4 1966171168
    %v4147 = vunpack.c.0.s8 %v4146
    %v4148 = vlaneseq
    %v4149 = vshrl.u32 %v4148, 7
    %v4150 = vsub.s32 %v4147, %v4149
    %v4151 = vrot.slane %v4143, %v4150
    %v4153 = vunpack.c.l.s4 1966171168
    %v4154 = vunpack.c.0.s8 %v4153
    %v4155 = vlaneseq
    %v4156 = vshrl.u32 %v4155, 7
    %v4157 = vsub.s32 %v4154, %v4156
    %v4158 = vrot.slane %v4144, %v4157
    %v4159 = vcombine.low %v4151, %v4158
    %v4160 = vcombine.low %v2646, %v2650
    %v4161 = vcombine.low %v2654, %v2658
    %v4162 = vcombine.low %v2662, %v2666
    %v4163 = vcombine.low %v2670, %v2674
    %v4165 = vunpack.c.l.s4 1966171168
    %v4166 = vunpack.c.0.s8 %v4165
    %v4167 = vlaneseq
    %v4168 = vshrl.u32 %v4167, 7
    %v4169 = vsub.s32 %v4166, %v4168
    %v4170 = vrot.slane %v4160, %v4169
    %v4172 = vunpack.c.l.s4 1966171168
    %v4173 = vunpack.c.0.s8 %v4172
    %v4174 = vlaneseq
    %v4175 = vshrl.u32 %v4174, 7
    %v4176 = vsub.s32 %v4173, %v4175
    %v4177 = vrot.slane %v4161, %v4176
    %v4179 = vunpack.c.l.s4 1966171168
    %v4180 = vunpack.c.0.s8 %v4179
    %v4181 = vlaneseq
    %v4182 = vshrl.u32 %v4181, 7
    %v4183 = vsub.s32 %v4180, %v4182
    %v4184 = vrot.slane %v4162, %v4183
    %v4186 = vunpack.c.l.s4 1966171168
    %v4187 = vunpack.c.0.s8 %v4186
    %v4188 = vlaneseq
    %v4189 = vshrl.u32 %v4188, 7
    %v4190 = vsub.s32 %v4187, %v4189
    %v4191 = vrot.slane %v4163, %v4190
    %v4192 = vcombine.low %v4170, %v4177
    %v4193 = vcombine.low %v4184, %v4191
    %v4195 = vunpack.c.l.s4 1966171168
    %v4196 = vunpack.c.0.s8 %v4195
    %v4197 = vlaneseq
    %v4198 = vshrl.u32 %v4197, 7
    %v4199 = vsub.s32 %v4196, %v4198
    %v4200 = vrot.slane %v4192, %v4199
    %v4202 = vunpack.c.l.s4 1966171168
    %v4203 = vunpack.c.0.s8 %v4202
    %v4204 = vlaneseq
    %v4205 = vshrl.u32 %v4204, 7
    %v4206 = vsub.s32 %v4203, %v4205
    %v4207 = vrot.slane %v4193, %v4206
    %v4208 = vcombine.low %v4200, %v4207
    %v4209 = vcombine.low %v2678, %v2682
    %v4210 = vcombine.low %v2686, %v2690
    %v4211 = vcombine.low %v2694, %v2698
    %v4212 = vcombine.low %v2702, %v2706
    %v4214 = vunpack.c.l.s4 1966171168
    %v4215 = vunpack.c.0.s8 %v4214
    %v4216 = vlaneseq
    %v4217 = vshrl.u32 %v4216, 7
    %v4218 = vsub.s32 %v4215, %v4217
    %v4219 = vrot.slane %v4209, %v4218
    %v4221 = vunpack.c.l.s4 1966171168
    %v4222 = vunpack.c.0.s8 %v4221
    %v4223 = vlaneseq
    %v4224 = vshrl.u32 %v4223, 7
    %v4225 = vsub.s32 %v4222, %v4224
    %v4226 = vrot.slane %v4210, %v4225
    %v4228 = vunpack.c.l.s4 1966171168
    %v4229 = vunpack.c.0.s8 %v4228
    %v4230 = vlaneseq
    %v4231 = vshrl.u32 %v4230, 7
    %v4232 = vsub.s32 %v4229, %v4231
    %v4233 = vrot.slane %v4211, %v4232
    %v4235 = vunpack.c.l.s4 1966171168
    %v4236 = vunpack.c.0.s8 %v4235
    %v4237 = vlaneseq
    %v4238 = vshrl.u32 %v4237, 7
    %v4239 = vsub.s32 %v4236, %v4238
    %v4240 = vrot.slane %v4212, %v4239
    %v4241 = vcombine.low %v4219, %v4226
    %v4242 = vcombine.low %v4233, %v4240
    %v4244 = vunpack.c.l.s4 1966171168
    %v4245 = vunpack.c.0.s8 %v4244
    %v4246 = vlaneseq
    %v4247 = vshrl.u32 %v4246, 7
    %v4248 = vsub.s32 %v4245, %v4247
    %v4249 = vrot.slane %v4241, %v4248
    %v4251 = vunpack.c.l.s4 1966171168
    %v4252 = vunpack.c.0.s8 %v4251
    %v4253 = vlaneseq
    %v4254 = vshrl.u32 %v4253, 7
    %v4255 = vsub.s32 %v4252, %v4254
    %v4256 = vrot.slane %v4242, %v4255
    %v4257 = vcombine.low %v4249, %v4256
    %v4258 = vcombine.low %v2710, %v2714
    %v4259 = vcombine.low %v2718, %v2722
    %v4260 = vcombine.low %v2726, %v2730
    %v4261 = vcombine.low %v2734, %v2738
    %v4263 = vunpack.c.l.s4 1966171168
    %v4264 = vunpack.c.0.s8 %v4263
    %v4265 = vlaneseq
    %v4266 = vshrl.u32 %v4265, 7
    %v4267 = vsub.s32 %v4264, %v4266
    %v4268 = vrot.slane %v4258, %v4267
    %v4270 = vunpack.c.l.s4 1966171168
    %v4271 = vunpack.c.0.s8 %v4270
    %v4272 = vlaneseq
    %v4273 = vshrl.u32 %v4272, 7
    %v4274 = vsub.s32 %v4271, %v4273
    %v4275 = vrot.slane %v4259, %v4274
    %v4277 = vunpack.c.l.s4 1966171168
    %v4278 = vunpack.c.0.s8 %v4277
    %v4279 = vlaneseq
    %v4280 = vshrl.u32 %v4279, 7
    %v4281 = vsub.s32 %v4278, %v4280
    %v4282 = vrot.slane %v4260, %v4281
    %v4284 = vunpack.c.l.s4 1966171168
    %v4285 = vunpack.c.0.s8 %v4284
    %v4286 = vlaneseq
    %v4287 = vshrl.u32 %v4286, 7
    %v4288 = vsub.s32 %v4285, %v4287
    %v4289 = vrot.slane %v4261, %v4288
    %v4290 = vcombine.low %v4268, %v4275
    %v4291 = vcombine.low %v4282, %v4289
    %v4293 = vunpack.c.l.s4 1966171168
    %v4294 = vunpack.c.0.s8 %v4293
    %v4295 = vlaneseq
    %v4296 = vshrl.u32 %v4295, 7
    %v4297 = vsub.s32 %v4294, %v4296
    %v4298 = vrot.slane %v4290, %v4297
    %v4300 = vunpack.c.l.s4 1966171168
    %v4301 = vunpack.c.0.s8 %v4300
    %v4302 = vlaneseq
    %v4303 = vshrl.u32 %v4302, 7
    %v4304 = vsub.s32 %v4301, %v4303
    %v4305 = vrot.slane %v4291, %v4304
    %v4306 = vcombine.low %v4298, %v4305
    %4307 = vset.pattern.permute.xlu0 0
    %4308 = vperm.xlu0 %4307, %v2787
    %v4309 = vpop.permute.xlu0 %4308
    %4310 = vset.pattern.permute.xlu0 0
    %4311 = vperm.xlu0 %4310, %v2836
    %v4312 = vpop.permute.xlu0 %4311
    %4313 = vset.pattern.permute.xlu0 0
    %4314 = vperm.xlu0 %4313, %v2885
    %v4315 = vpop.permute.xlu0 %4314
    %4316 = vset.pattern.permute.xlu0 0
    %4317 = vperm.xlu0 %4316, %v2934
    %v4318 = vpop.permute.xlu0 %4317
    %4319 = vset.pattern.permute.xlu0 0
    %4320 = vperm.xlu0 %4319, %v2983
    %v4321 = vpop.permute.xlu0 %4320
    %4322 = vset.pattern.permute.xlu0 0
    %4323 = vperm.xlu0 %4322, %v3032
    %v4324 = vpop.permute.xlu0 %4323
    %4325 = vset.pattern.permute.xlu0 0
    %4326 = vperm.xlu0 %4325, %v3081
    %v4327 = vpop.permute.xlu0 %4326
    %4328 = vset.pattern.permute.xlu0 0
    %4329 = vperm.xlu0 %4328, %v3130
    %v4330 = vpop.permute.xlu0 %4329
    %4331 = vset.pattern.permute.xlu0 0
    %4332 = vperm.xlu0 %4331, %v3179
    %v4333 = vpop.permute.xlu0 %4332
    %4334 = vset.pattern.permute.xlu0 0
    %4335 = vperm.xlu0 %4334, %v3228
    %v4336 = vpop.permute.xlu0 %4335
    %4337 = vset.pattern.permute.xlu0 0
    %4338 = vperm.xlu0 %4337, %v3277
    %v4339 = vpop.permute.xlu0 %4338
    %4340 = vset.pattern.permute.xlu0 0
    %4341 = vperm.xlu0 %4340, %v3326
    %v4342 = vpop.permute.xlu0 %4341
    %4343 = vset.pattern.permute.xlu0 0
    %4344 = vperm.xlu0 %4343, %v3375
    %v4345 = vpop.permute.xlu0 %4344
    %4346 = vset.pattern.permute.xlu0 0
    %4347 = vperm.xlu0 %4346, %v3424
    %v4348 = vpop.permute.xlu0 %4347
    %4349 = vset.pattern.permute.xlu0 0
    %4350 = vperm.xlu0 %4349, %v3473
    %v4351 = vpop.permute.xlu0 %4350
    %4352 = vset.pattern.permute.xlu0 0
    %4353 = vperm.xlu0 %4352, %v3522
    %v4354 = vpop.permute.xlu0 %4353
    %4355 = vset.pattern.permute.xlu0 0
    %4356 = vperm.xlu0 %4355, %v3571
    %v4357 = vpop.permute.xlu0 %4356
    %4358 = vset.pattern.permute.xlu0 0
    %4359 = vperm.xlu0 %4358, %v3620
    %v4360 = vpop.permute.xlu0 %4359
    %4361 = vset.pattern.permute.xlu0 0
    %4362 = vperm.xlu0 %4361, %v3669
    %v4363 = vpop.permute.xlu0 %4362
    %4364 = vset.pattern.permute.xlu0 0
    %4365 = vperm.xlu0 %4364, %v3718
    %v4366 = vpop.permute.xlu0 %4365
    %4367 = vset.pattern.permute.xlu0 0
    %4368 = vperm.xlu0 %4367, %v3767
    %v4369 = vpop.permute.xlu0 %4368
    %4370 = vset.pattern.permute.xlu0 0
    %4371 = vperm.xlu0 %4370, %v3816
    %v4372 = vpop.permute.xlu0 %4371
    %4373 = vset.pattern.permute.xlu0 0
    %4374 = vperm.xlu0 %4373, %v3865
    %v4375 = vpop.permute.xlu0 %4374
    %4376 = vset.pattern.permute.xlu0 0
    %4377 = vperm.xlu0 %4376, %v3914
    %v4378 = vpop.permute.xlu0 %4377
    %4379 = vset.pattern.permute.xlu0 0
    %4380 = vperm.xlu0 %4379, %v3963
    %v4381 = vpop.permute.xlu0 %4380
    %4382 = vset.pattern.permute.xlu0 0
    %4383 = vperm.xlu0 %4382, %v4012
    %v4384 = vpop.permute.xlu0 %4383
    %4385 = vset.pattern.permute.xlu0 0
    %4386 = vperm.xlu0 %4385, %v4061
    %v4387 = vpop.permute.xlu0 %4386
    %4388 = vset.pattern.permute.xlu0 0
    %4389 = vperm.xlu0 %4388, %v4110
    %v4390 = vpop.permute.xlu0 %4389
    %4391 = vset.pattern.permute.xlu0 0
    %4392 = vperm.xlu0 %4391, %v4159
    %v4393 = vpop.permute.xlu0 %4392
    %4394 = vset.pattern.permute.xlu0 0
    %4395 = vperm.xlu0 %4394, %v4208
    %v4396 = vpop.permute.xlu0 %4395
    %4397 = vset.pattern.permute.xlu0 0
    %4398 = vperm.xlu0 %4397, %v4257
    %v4399 = vpop.permute.xlu0 %4398
    %4400 = vset.pattern.permute.xlu0 0
    %4401 = vperm.xlu0 %4400, %v4306
    %v4402 = vpop.permute.xlu0 %4401
    %v4403 = vlaneseq
    %v4404 = vand.u32 %v4403, 127
    %v4405 = vlaneseq
    %v4406 = vshrl.u32 %v4405, 7
    %v4407 = vsub.s32 %v4404, %v4406
    %v4408 = vrot.slane %v4309, %v4407
    %v4409 = vadd.s32 %v4404, 4294967288
    %v4410 = vlaneseq
    %v4411 = vshrl.u32 %v4410, 7
    %v4412 = vsub.s32 %v4409, %v4411
    %v4413 = vrot.slane %v4312, %v4412
    %vm4414 = vcmask 130112
    %v4415 = vsel %vm4414, %v4413, %v4408
    %v4416 = vadd.s32 %v4404, 4294967280
    %v4417 = vlaneseq
    %v4418 = vshrl.u32 %v4417, 7
    %v4419 = vsub.s32 %v4416, %v4418
    %v4420 = vrot.slane %v4315, %v4419
    %vm4421 = vcmask 195712
    %v4422 = vsel %vm4421, %v4420, %v4415
    %v4423 = vadd.s32 %v4404, 4294967272
    %v4424 = vlaneseq
    %v4425 = vshrl.u32 %v4424, 7
    %v4426 = vsub.s32 %v4423, %v4425
    %v4427 = vrot.slane %v4318, %v4426
    %vm4428 = vcmask 261312
    %v4429 = vsel %vm4428, %v4427, %v4422
    %v4430 = vadd.s32 %v4404, 4294967264
    %v4431 = vlaneseq
    %v4432 = vshrl.u32 %v4431, 7
    %v4433 = vsub.s32 %v4430, %v4432
    %v4434 = vrot.slane %v4321, %v4433
    %vm4435 = vcmask 326912
    %v4436 = vsel %vm4435, %v4434, %v4429
    %v4437 = vadd.s32 %v4404, 4294967256
    %v4438 = vlaneseq
    %v4439 = vshrl.u32 %v4438, 7
    %v4440 = vsub.s32 %v4437, %v4439
    %v4441 = vrot.slane %v4324, %v4440
    %vm4442 = vcmask 392512
    %v4443 = vsel %vm4442, %v4441, %v4436
    %v4444 = vadd.s32 %v4404, 4294967248
    %v4445 = vlaneseq
    %v4446 = vshrl.u32 %v4445, 7
    %v4447 = vsub.s32 %v4444, %v4446
    %v4448 = vrot.slane %v4327, %v4447
    %vm4449 = vcmask 458112
    %v4450 = vsel %vm4449, %v4448, %v4443
    %v4451 = vadd.s32 %v4404, 4294967240
    %v4452 = vlaneseq
    %v4453 = vshrl.u32 %v4452, 7
    %v4454 = vsub.s32 %v4451, %v4453
    %v4455 = vrot.slane %v4330, %v4454
    %vm4456 = vcmask 523712
    %v4457 = vsel %vm4456, %v4455, %v4450
    %v4458 = vadd.s32 %v4404, 4294967232
    %v4459 = vlaneseq
    %v4460 = vshrl.u32 %v4459, 7
    %v4461 = vsub.s32 %v4458, %v4460
    %v4462 = vrot.slane %v4333, %v4461
    %vm4463 = vcmask 589312
    %v4464 = vsel %vm4463, %v4462, %v4457
    %v4465 = vadd.s32 %v4404, 4294967224
    %v4466 = vlaneseq
    %v4467 = vshrl.u32 %v4466, 7
    %v4468 = vsub.s32 %v4465, %v4467
    %v4469 = vrot.slane %v4336, %v4468
    %vm4470 = vcmask 654912
    %v4471 = vsel %vm4470, %v4469, %v4464
    %v4472 = vadd.s32 %v4404, 4294967216
    %v4473 = vlaneseq
    %v4474 = vshrl.u32 %v4473, 7
    %v4475 = vsub.s32 %v4472, %v4474
    %v4476 = vrot.slane %v4339, %v4475
    %vm4477 = vcmask 720512
    %v4478 = vsel %vm4477, %v4476, %v4471
    %v4479 = vadd.s32 %v4404, 4294967208
    %v4480 = vlaneseq
    %v4481 = vshrl.u32 %v4480, 7
    %v4482 = vsub.s32 %v4479, %v4481
    %v4483 = vrot.slane %v4342, %v4482
    %vm4484 = vcmask 786112
    %v4485 = vsel %vm4484, %v4483, %v4478
    %v4486 = vadd.s32 %v4404, 4294967200
    %v4487 = vlaneseq
    %v4488 = vshrl.u32 %v4487, 7
    %v4489 = vsub.s32 %v4486, %v4488
    %v4490 = vrot.slane %v4345, %v4489
    %vm4491 = vcmask 851712
    %v4492 = vsel %vm4491, %v4490, %v4485
    %v4493 = vadd.s32 %v4404, 4294967192
    %v4494 = vlaneseq
    %v4495 = vshrl.u32 %v4494, 7
    %v4496 = vsub.s32 %v4493, %v4495
    %v4497 = vrot.slane %v4348, %v4496
    %vm4498 = vcmask 917312
    %v4499 = vsel %vm4498, %v4497, %v4492
    %v4500 = vadd.s32 %v4404, 4294967184
    %v4501 = vlaneseq
    %v4502 = vshrl.u32 %v4501, 7
    %v4503 = vsub.s32 %v4500, %v4502
    %v4504 = vrot.slane %v4351, %v4503
    %vm4505 = vcmask 982912
    %v4506 = vsel %vm4505, %v4504, %v4499
    %v4507 = vadd.s32 %v4404, 4294967176
    %v4508 = vlaneseq
    %v4509 = vshrl.u32 %v4508, 7
    %v4510 = vsub.s32 %v4507, %v4509
    %v4511 = vrot.slane %v4354, %v4510
    %vm4512 = vcmask 1048512
    %v4513 = vsel %vm4512, %v4511, %v4506
    %v4514 = vlaneseq
    %v4515 = vshrl.u32 %v4514, 7
    %v4516 = vsub.s32 %v4404, %v4515
    %v4517 = vrot.slane %v4357, %v4516
    %v4518 = vlaneseq
    %v4519 = vshrl.u32 %v4518, 7
    %v4520 = vsub.s32 %v4409, %v4519
    %v4521 = vrot.slane %v4360, %v4520
    %v4522 = vsel %vm4414, %v4521, %v4517
    %v4523 = vlaneseq
    %v4524 = vshrl.u32 %v4523, 7
    %v4525 = vsub.s32 %v4416, %v4524
    %v4526 = vrot.slane %v4363, %v4525
    %v4527 = vsel %vm4421, %v4526, %v4522
    %v4528 = vlaneseq
    %v4529 = vshrl.u32 %v4528, 7
    %v4530 = vsub.s32 %v4423, %v4529
    %v4531 = vrot.slane %v4366, %v4530
    %v4532 = vsel %vm4428, %v4531, %v4527
    %v4533 = vlaneseq
    %v4534 = vshrl.u32 %v4533, 7
    %v4535 = vsub.s32 %v4430, %v4534
    %v4536 = vrot.slane %v4369, %v4535
    %v4537 = vsel %vm4435, %v4536, %v4532
    %v4538 = vlaneseq
    %v4539 = vshrl.u32 %v4538, 7
    %v4540 = vsub.s32 %v4437, %v4539
    %v4541 = vrot.slane %v4372, %v4540
    %v4542 = vsel %vm4442, %v4541, %v4537
    %v4543 = vlaneseq
    %v4544 = vshrl.u32 %v4543, 7
    %v4545 = vsub.s32 %v4444, %v4544
    %v4546 = vrot.slane %v4375, %v4545
    %v4547 = vsel %vm4449, %v4546, %v4542
    %v4548 = vlaneseq
    %v4549 = vshrl.u32 %v4548, 7
    %v4550 = vsub.s32 %v4451, %v4549
    %v4551 = vrot.slane %v4378, %v4550
    %v4552 = vsel %vm4456, %v4551, %v4547
    %v4553 = vlaneseq
    %v4554 = vshrl.u32 %v4553, 7
    %v4555 = vsub.s32 %v4458, %v4554
    %v4556 = vrot.slane %v4381, %v4555
    %v4557 = vsel %vm4463, %v4556, %v4552
    %v4558 = vlaneseq
    %v4559 = vshrl.u32 %v4558, 7
    %v4560 = vsub.s32 %v4465, %v4559
    %v4561 = vrot.slane %v4384, %v4560
    %v4562 = vsel %vm4470, %v4561, %v4557
    %v4563 = vlaneseq
    %v4564 = vshrl.u32 %v4563, 7
    %v4565 = vsub.s32 %v4472, %v4564
    %v4566 = vrot.slane %v4387, %v4565
    %v4567 = vsel %vm4477, %v4566, %v4562
    %v4568 = vlaneseq
    %v4569 = vshrl.u32 %v4568, 7
    %v4570 = vsub.s32 %v4479, %v4569
    %v4571 = vrot.slane %v4390, %v4570
    %v4572 = vsel %vm4484, %v4571, %v4567
    %v4573 = vlaneseq
    %v4574 = vshrl.u32 %v4573, 7
    %v4575 = vsub.s32 %v4486, %v4574
    %v4576 = vrot.slane %v4393, %v4575
    %v4577 = vsel %vm4491, %v4576, %v4572
    %v4578 = vlaneseq
    %v4579 = vshrl.u32 %v4578, 7
    %v4580 = vsub.s32 %v4493, %v4579
    %v4581 = vrot.slane %v4396, %v4580
    %v4582 = vsel %vm4498, %v4581, %v4577
    %v4583 = vlaneseq
    %v4584 = vshrl.u32 %v4583, 7
    %v4585 = vsub.s32 %v4500, %v4584
    %v4586 = vrot.slane %v4399, %v4585
    %v4587 = vsel %vm4505, %v4586, %v4582
    %v4588 = vlaneseq
    %v4589 = vshrl.u32 %v4588, 7
    %v4590 = vsub.s32 %v4507, %v4589
    %v4591 = vrot.slane %v4402, %v4590
    %v4592 = vsel %vm4512, %v4591, %v4587
    %v4593 = vcombine.low %v4513, %v4592
    %v4595 = vunpack.c.l.s4 1966171168
    %v4596 = vunpack.c.0.s8 %v4595
    %v4597 = vlaneseq
    %v4598 = vshrl.u32 %v4597, 7
    %v4599 = vsub.s32 %v4596, %v4598
    %v4600 = vrot.slane %v4593, %v4599
    %v4602 = vunpack.c.l.s4 1966171168
    %v4603 = vunpack.c.0.s8 %v4602
    %v4604 = vlaneseq
    %v4605 = vshrl.u32 %v4604, 7
    %v4606 = vsub.s32 %v4603, %v4605
    %v4607 = vrot.slane %v4600, %v4606
    %v4609 = vlaneseq
    %vm4610 = vcmp.ge.s32.totalorder %v4609, 0
    %vm4611 = vcmp.lt.s32.totalorder %v4609, 256
    %vm4612 = vmand %vm4610, %vm4611
    %4613 = vst.msk [vmem:[#allocation3] sm:$0x3] %vm4612, %v4607
    // Predicated region
    $region38: #{fwd.1} parent=1 // pred_check
      _
    $region39: #{fwd.1} parent=1 // pred_check_branch
      %4615 = sbr.rel (0) target = $region41
    $region40: #{fwd.1} parent=1 // pred_region
      %s4617 = ssub.s32 32, 32
      %4618 = vsyncadd [#allocation4], %s4617
      %s4620 = sshll.u32 [#allocation3], 4
      %s4621 = int_to_ptr.vmem [resolvable:$true] %s4620
      %4623 = dma.vmem_to_hbm [thread:$0]  %s4621, 32, %s9, [#allocation4]
    $region41: #{fwd.1} parent=1 // pred_fallthru
      _
    // Predicated region
    $region42: #{fwd.1} parent=1 // pred_check
      _
    $region43: #{fwd.1} parent=1 // pred_check_branch
      %4625 = sbr.rel (0) target = $region45
    $region44: #{fwd.1} parent=1 // pred_region
      %4626 = dma.done [#allocation4], 32
    $region45: #{fwd.1} parent=1 // pred_fallthru
      _
    %4627 = vsyncpa [#allocation4], 1

</llo_original>
